<compile_context>
chip_gen: v7x
topology: tpu7x:2x2x1
jax: 0.10.0
libtpu: 0.0.40
codegen_flags: <defaults>
</compile_context>

<pallas_src>
import math

import jax
import jax.numpy as jnp
from jax.experimental import pallas as pl
from jax.experimental.pallas import tpu as pltpu

T_CHUNK = 16                 # timesteps per recurrence grid step
TM_ROWS = 256                # LHS row tile for the two parallel matmuls
TN_GATES = 256               # lane tile for gates matmul (4*Hp is a mult of 512)
VMEM_LIMIT = 64 * 1024 * 1024


def _round_up(x, m):
    return ((x + m - 1) // m) * m


# ----------------------------------------------------------------------------
# Kernel 1 & 3: tiled matmul + bias.  bf16 operands, f32 MXU accumulation,
# dense lane-aligned output store.
# ----------------------------------------------------------------------------
def matmul_bias_kernel(x_ref, w_ref, b_ref, o_ref):
    o_ref[...] = (jnp.dot(x_ref[...], w_ref[...],
                          preferred_element_type=jnp.float32)
                  + b_ref[...]).astype(o_ref.dtype)


def _matmul_bias(x, w, b, *, tm, tn):
    """x:(M,K) bf16, w:(K,N) bf16, b:(1,N) f32 -> (M,N) f32.  M%tm==0, N%tn==0."""
    M, K = x.shape
    N = w.shape[1]
    return pl.pallas_call(
        matmul_bias_kernel,
        out_shape=jax.ShapeDtypeStruct((M, N), jnp.float32),
        grid_spec=pltpu.PrefetchScalarGridSpec(
            num_scalar_prefetch=0,
            grid=(M // tm, N // tn),
            in_specs=[
                pl.BlockSpec((tm, K), lambda i, j: (i, 0)),
                pl.BlockSpec((K, tn), lambda i, j: (0, j)),
                pl.BlockSpec((1, tn), lambda i, j: (0, j)),
            ],
            out_specs=pl.BlockSpec((tm, tn), lambda i, j: (i, j)),
        ),
        # Both axes parallel -> shardable across the 2 TCs on v7x; no-op on
        # v5e/v6e.  Explicit VMEM cap so tile choices stay honest on v7x.
        compiler_params=pltpu.CompilerParams(
            dimension_semantics=("parallel", "parallel"),
            vmem_limit_bytes=VMEM_LIMIT),
    )(x, w, b)


# ----------------------------------------------------------------------------
# Kernel 2: LSTM recurrence.  One grid step = T_CHUNK timesteps.
#   gx_ref   : (Tc, Bp, 4Hp) f32   precomputed x@W_ih^T + bias (time-major)
#   whh_hbm  : (Hp, 4Hp) bf16      raw HBM ref (memory_space=pl.ANY)
#   h_out    : (Tc, Bp, Hp) f32
#   whh_vmem : single-buffered VMEM copy of W_hh^T (copied once at step 0)
#   h_sc/c_sc: f32 carries across grid steps
# ----------------------------------------------------------------------------
def lstm_recurrent_kernel(gx_ref, whh_hbm, h_out_ref, whh_vmem, h_sc, c_sc):
    chunk = gx_ref.shape[0]
    hp = h_sc.shape[1]

    @pl.when(pl.program_id(0) == 0)
    def _():
        # Single-buffer the grid-invariant W_hh^T: one HBM->VMEM copy total
        # (instead of a double-buffered pipelined block).
        pltpu.sync_copy(whh_hbm, whh_vmem)
        h_sc[...] = jnp.zeros_like(h_sc)
        c_sc[...] = jnp.zeros_like(c_sc)

    def step(i, carry):
        h, c = carry
        # Reference whh_vmem[...] inside the dot so the RHS streams from VMEM
        # (no giant materialized value / vreg spills at realistic H).
        gates = gx_ref[i] + jnp.dot(h.astype(jnp.bfloat16), whh_vmem[...],
                                    preferred_element_type=jnp.float32)
        i_g = jax.nn.sigmoid(gates[:, 0 * hp:1 * hp])
        f_g = jax.nn.sigmoid(gates[:, 1 * hp:2 * hp])
        g_g = jnp.tanh(gates[:, 2 * hp:3 * hp])
        o_g = jax.nn.sigmoid(gates[:, 3 * hp:4 * hp])
        c = f_g * c + i_g * g_g
        h = o_g * jnp.tanh(c)
        h_out_ref[i] = h                     # lane-dense (Bp, Hp) store
        return (h, c)

    h, c = jax.lax.fori_loop(0, chunk, step, (h_sc[...], c_sc[...]),
                             unroll=True)
    h_sc[...] = h
    c_sc[...] = c


# ----------------------------------------------------------------------------
# Host-side wrapper
# ----------------------------------------------------------------------------
def _pad_gate_cols(w, H, Hp):
    """(rows, 4H) -> (rows, 4Hp); each i/f/g/o gate slab lane-aligned to Hp."""
    rows = w.shape[0]
    out = jnp.zeros((rows, 4 * Hp), w.dtype)
    for k in range(4):
        out = out.at[:, k * Hp:k * Hp + H].set(w[:, k * H:(k + 1) * H])
    return out


def decoder_rnn_forward(features, captions, params):
    """
    features: (B, E) float32    image feature vector
    captions: (B, L) int32      token ids
    returns:  (B, L, V) float32 logits (PyTorch batch_first, T = L)
    """
    embed = params["embed"]            # (V, E)
    w_ih = params["w_ih"]              # (4H, E)
    w_hh = params["w_hh"]              # (4H, H)
    b_ih = params["b_ih"]              # (4H,)
    b_hh = params["b_hh"]              # (4H,)
    w_lin = params["w_lin"]            # (V, H)
    b_lin = params["b_lin"]            # (V,)

    B, E = features.shape
    H = w_hh.shape[1]
    V = w_lin.shape[0]
    L = captions.shape[1]
    T = L                              # 1 image step + (L-1) caption steps

    Bp = _round_up(B, 8)
    Ep = _round_up(E, 128)
    Hp = _round_up(H, 128)
    Vp = _round_up(V, 128)

    # Pad T so (a) it is a whole number of recurrence chunks and (b) the
    # flattened time-major row count Tp*Bp is a multiple of TM_ROWS, so the two
    # parallel matmuls need no extra row-padding copies.
    row_align = TM_ROWS // math.gcd(TM_ROWS, Bp)
    Tp = _round_up(T, math.lcm(T_CHUNK, row_align))
    M = Tp * Bp
    N4 = 4 * Hp

    # ---- glue: embedding lookup + image feature as timestep 0 (XLA gather) ----
    caps = captions[:, :-1]                                       # (B, L-1)
    embeds = jnp.take(embed, caps, axis=0)                        # (B, L-1, E)
    x = jnp.concatenate([features[:, None, :], embeds], axis=1)   # (B, T, E)
    x_tm = jnp.zeros((Tp, Bp, Ep), jnp.bfloat16).at[:T, :B, :E].set(
        jnp.transpose(x, (1, 0, 2)).astype(jnp.bfloat16))         # time-major
    x_flat = x_tm.reshape(M, Ep)

    # ---- padded, pre-transposed weights (bf16 MXU operands, f32 biases) ----
    w_ih_t_pad = jnp.zeros((Ep, N4), jnp.float32).at[:E].set(
        _pad_gate_cols(w_ih.T, H, Hp)).astype(jnp.bfloat16)       # (Ep, 4Hp)
    w_hh_t_pad = jnp.zeros((Hp, N4), jnp.float32).at[:H].set(
        _pad_gate_cols(w_hh.T, H, Hp)).astype(jnp.bfloat16)       # (Hp, 4Hp)
    bias_pad = _pad_gate_cols((b_ih + b_hh)[None, :], H, Hp)      # (1, 4Hp) f32
    w_lin_t_pad = jnp.zeros((Hp, Vp), jnp.float32).at[:H, :V].set(
        w_lin.T).astype(jnp.bfloat16)                             # (Hp, Vp)
    b_lin_pad = jnp.zeros((1, Vp), jnp.float32).at[:, :V].set(b_lin[None, :])

    # ---- 1) input-gate precompute: one big parallel matmul (bf16 MXU) ----
    gates_flat = _matmul_bias(x_flat, w_ih_t_pad, bias_pad,
                              tm=TM_ROWS, tn=TN_GATES)            # (M, 4Hp) f32
    gates_x = gates_flat.reshape(Tp, Bp, N4)                      # time-major

    # ---- 2) sequential LSTM recurrence ----
    h_all = pl.pallas_call(
        lstm_recurrent_kernel,
        out_shape=jax.ShapeDtypeStruct((Tp, Bp, Hp), jnp.float32),
        grid_spec=pltpu.PrefetchScalarGridSpec(
            num_scalar_prefetch=0,
            grid=(Tp // T_CHUNK,),
            in_specs=[
                pl.BlockSpec((T_CHUNK, Bp, N4), lambda c: (c, 0, 0)),
                pl.BlockSpec(memory_space=pl.ANY),     # W_hh^T stays in HBM
            ],
            out_specs=pl.BlockSpec((T_CHUNK, Bp, Hp), lambda c: (c, 0, 0)),
            scratch_shapes=[
                pltpu.VMEM((Hp, N4), jnp.bfloat16),    # single-buffered W_hh^T
                pltpu.VMEM((Bp, Hp), jnp.float32),     # h carry (f32)
                pltpu.VMEM((Bp, Hp), jnp.float32),     # c carry (f32)
            ],
        ),
        compiler_params=pltpu.CompilerParams(
            dimension_semantics=("arbitrary",),        # serial recurrence
            vmem_limit_bytes=VMEM_LIMIT),
    )(gates_x, w_hh_t_pad)

    # ---- 3) vocab projection: flat parallel matmul, dense stores ----
    tV = 512 if Vp % 512 == 0 else (256 if Vp % 256 == 0 else 128)
    h_flat = h_all.reshape(M, Hp).astype(jnp.bfloat16)
    logits_flat = _matmul_bias(h_flat, w_lin_t_pad, b_lin_pad,
                               tm=TM_ROWS, tn=tV)                 # (M, Vp) f32

    logits = logits_flat.reshape(Tp, Bp, Vp)[:T, :B, :V]          # (T, B, V)
    return jnp.transpose(logits, (1, 0, 2))                       # (B, T, V)


# ----------------------------------------------------------------------------
# Parameters (raw PyTorch-shaped) and pure-JAX f32 reference
# ----------------------------------------------------------------------------
def make_params(key, vocab_size, embed_size, hidden_size):
    ks = jax.random.split(key, 7)
    embed = jax.random.normal(ks[0], (vocab_size, embed_size), jnp.float32) * jnp.sqrt(
        2.0 / embed_size)
    lim = 1.0 / jnp.sqrt(hidden_size)
    w_ih = jax.random.uniform(ks[1], (4 * hidden_size, embed_size), jnp.float32, -lim, lim)
    w_hh = jax.random.uniform(ks[2], (4 * hidden_size, hidden_size), jnp.float32, -lim, lim)
    b_ih = jax.random.uniform(ks[3], (4 * hidden_size,), jnp.float32, -lim, lim)
    b_hh = jax.random.uniform(ks[4], (4 * hidden_size,), jnp.float32, -lim, lim)
    w_lin = jax.random.normal(ks[5], (vocab_size, hidden_size), jnp.float32) * jnp.sqrt(
        2.0 / hidden_size)
    b_lin = jax.random.uniform(ks[6], (vocab_size,), jnp.float32, -lim, lim)
    return {"embed": embed, "w_ih": w_ih, "w_hh": w_hh, "b_ih": b_ih,
            "b_hh": b_hh, "w_lin": w_lin, "b_lin": b_lin}


def reference_forward(features, captions, params):
    caps = captions[:, :-1]
    embeds = jnp.take(params["embed"], caps, axis=0)
    embeds = jnp.concatenate([features[:, None, :], embeds], axis=1)
    x_tbe = jnp.transpose(embeds, (1, 0, 2))
    B = features.shape[0]
    H = params["w_hh"].shape[1]
    w_ih_t = params["w_ih"].T
    w_hh_t = params["w_hh"].T

    def step(carry, x):
        h, c = carry
        gates = x @ w_ih_t + h @ w_hh_t + params["b_ih"] + params["b_hh"]
        i = jax.nn.sigmoid(gates[:, 0 * H:1 * H])
        f = jax.nn.sigmoid(gates[:, 1 * H:2 * H])
        g = jnp.tanh(gates[:, 2 * H:3 * H])
        o = jax.nn.sigmoid(gates[:, 3 * H:4 * H])
        c = f * c + i * g
        h = o * jnp.tanh(c)
        return (h, c), h

    h0 = jnp.zeros((B, H), jnp.float32)
    c0 = jnp.zeros((B, H), jnp.float32)
    _, hs = jax.lax.scan(step, (h0, c0), x_tbe)
    logits = hs @ params["w_lin"].T + params["b_lin"][None, None, :]
    return jnp.transpose(logits, (1, 0, 2))


if __name__ == "__main__":
    batch = 2
    seq_len = 8          # caption length L -> LSTM runs T = L timesteps
    embed_size = 32
    hidden_size = 32
    vocab_size = 64

    key = jax.random.PRNGKey(0)
    k_params, k_feat, k_caps = jax.random.split(key, 3)

    params = make_params(k_params, vocab_size, embed_size, hidden_size)
    features = jax.random.normal(k_feat, (batch, embed_size), jnp.float32)
    captions = jax.random.randint(k_caps, (batch, seq_len), 0, vocab_size, jnp.int32)

    fwd = jax.jit(decoder_rnn_forward)
    out = fwd(features, captions, params)
    out = jax.block_until_ready(out)

    ref = reference_forward(features, captions, params)
    assert out.shape == (batch, seq_len, vocab_size)
    # bf16 MXU operands (f32 accumulation / f32 recurrence state) -> loosened
    # tolerance vs the pure-f32 reference.
    assert jnp.allclose(out, ref, atol=3e-2, rtol=3e-2), "mismatch vs reference"

    print("KERNEL_OK")
</pallas_src>

<mosaic_0001>
module attributes {stable_mosaic.version = 11 : i64} {
  func.func @matmul_bias_kernel(%arg0: i32, %arg1: i32, %arg2: memref<256x128xbf16, #tpu.memory_space<vmem>>, %arg3: memref<128x256xbf16, #tpu.memory_space<vmem>>, %arg4: memref<1x256xf32, #tpu.memory_space<vmem>>, %arg5: memref<256x256xf32, #tpu.memory_space<vmem>>) attributes {dimension_semantics = [#tpu.dimension_semantics<parallel>, #tpu.dimension_semantics<parallel>], iteration_bounds = array<i64: 1, 2>, scalar_prefetch = 0 : i64, scratch_operands = 0 : i64, tpu.core_type = #tpu.core_type<tc>, window_params = [{transform_indices = @transform_0, window_bounds = array<i64: 256, 128>}, {transform_indices = @transform_1, window_bounds = array<i64: 128, 256>}, {transform_indices = @transform_2, window_bounds = array<i64: 1, 256>}, {transform_indices = @transform_3, window_bounds = array<i64: 256, 256>}]} {
    %c0 = arith.constant 0 : index
    %c0_0 = arith.constant 0 : index
    %0 = vector.load %arg2[%c0, %c0_0] : memref<256x128xbf16, #tpu.memory_space<vmem>>, vector<256x128xbf16>
    %c0_1 = arith.constant 0 : index
    %c0_2 = arith.constant 0 : index
    %1 = vector.load %arg3[%c0_1, %c0_2] : memref<128x256xbf16, #tpu.memory_space<vmem>>, vector<128x256xbf16>
    %cst = arith.constant dense<0.000000e+00> : vector<256x256xf32>
    %2 = tpu.matmul %0, %1, %cst {dimension_numbers = #tpu.dot_dimension_numbers<[1], [0], [0], [1], [0, 0, 1, 1], [], []>} : vector<256x128xbf16>, vector<128x256xbf16>, vector<256x256xf32> -> vector<256x256xf32>
    %c0_3 = arith.constant 0 : index
    %c0_4 = arith.constant 0 : index
    %3 = vector.load %arg4[%c0_3, %c0_4] : memref<1x256xf32, #tpu.memory_space<vmem>>, vector<1x256xf32>
    %4 = vector.broadcast %3 : vector<1x256xf32> to vector<256x256xf32>
    %5 = arith.addf %2, %4 : vector<256x256xf32>
    %c0_5 = arith.constant 0 : index
    %c0_6 = arith.constant 0 : index
    %6 = vector.load %arg5[%c0_5, %c0_6] : memref<256x256xf32, #tpu.memory_space<vmem>>, vector<256x256xf32>
    tpu.vector_store %arg5[%c0_5, %c0_6], %5 {strides = array<i32>} : memref<256x256xf32, #tpu.memory_space<vmem>>, vector<256x256xf32>,
    return
  }
  func.func @transform_0(%arg0: i32, %arg1: i32) -> (i32, i32) {
    %c0_i32 = arith.constant 0 : i32
    %c0_i32_0 = arith.constant 0 : i32
    return %arg0, %c0_i32 : i32, i32
  }
  func.func @transform_1(%arg0: i32, %arg1: i32) -> (i32, i32) {
    %c0_i32 = arith.constant 0 : i32
    %c0_i32_0 = arith.constant 0 : i32
    return %c0_i32, %arg1 : i32, i32
  }
  func.func @transform_2(%arg0: i32, %arg1: i32) -> (i32, i32) {
    %c0_i32 = arith.constant 0 : i32
    %c0_i32_0 = arith.constant 0 : i32
    return %c0_i32, %arg1 : i32, i32
  }
  func.func @transform_3(%arg0: i32, %arg1: i32) -> (i32, i32) {
    %c0_i32 = arith.constant 0 : i32
    return %arg0, %arg1 : i32, i32
  }
}

module attributes {stable_mosaic.version = 11 : i64} {
  func.func @lstm_recurrent_kernel(%arg0: i32, %arg1: memref<16x8x512xf32, #tpu.memory_space<vmem>>, %arg2: memref<128x512xbf16, #tpu.memory_space<any>>, %arg3: memref<16x8x128xf32, #tpu.memory_space<vmem>>, %arg4: memref<128x512xbf16, #tpu.memory_space<vmem>>, %arg5: memref<8x128xf32, #tpu.memory_space<vmem>>, %arg6: memref<8x128xf32, #tpu.memory_space<vmem>>) attributes {dimension_semantics = [#tpu.dimension_semantics<arbitrary>], iteration_bounds = array<i64: 2>, scalar_prefetch = 0 : i64, scratch_operands = 3 : i64, tpu.core_type = #tpu.core_type<tc>, window_params = [{transform_indices = @transform_0, window_bounds = array<i64: 16, 8, 512>}, {}, {transform_indices = @transform_2, window_bounds = array<i64: 16, 8, 128>}]} {
    %c0_i32 = arith.constant 0 : i32
    %0 = arith.cmpi eq, %arg0, %c0_i32 : i32
    %1 = arith.extui %0 : i1 to i32
    %c0_i32_0 = arith.constant 0 : i32
    %2 = arith.cmpi ne, %1, %c0_i32_0 : i32
    scf.if %2 {
      "tpu.region"() ({
        %587 = tpu.sem_alloc : memref<!tpu.dma_semaphore, #tpu.memory_space<semaphore_mem>>
        tpu.enqueue_dma source(%arg2 : memref<128x512xbf16, #tpu.memory_space<any>>) target(%arg4 : memref<128x512xbf16, #tpu.memory_space<vmem>>) target_semaphore(%587 : memref<!tpu.dma_semaphore, #tpu.memory_space<semaphore_mem>>)
        tpu.wait_dma2 semaphore(%587 : memref<!tpu.dma_semaphore, #tpu.memory_space<semaphore_mem>>) src(%arg2 : memref<128x512xbf16, #tpu.memory_space<any>>) dst(%arg4 : memref<128x512xbf16, #tpu.memory_space<vmem>>)
        tpu.yield
      }) : () -> ()
      %cst_168 = arith.constant 0.000000e+00 : f32
      %583 = vector.broadcast %cst_168 : f32 to vector<8x128xf32>
      %c0_169 = arith.constant 0 : index
      %c0_170 = arith.constant 0 : index
      %584 = vector.load %arg5[%c0_169, %c0_170] : memref<8x128xf32, #tpu.memory_space<vmem>>, vector<8x128xf32>
      tpu.vector_store %arg5[%c0_169, %c0_170], %583 {strides = array<i32>} : memref<8x128xf32, #tpu.memory_space<vmem>>, vector<8x128xf32>,
      %cst_171 = arith.constant 0.000000e+00 : f32
      %585 = vector.broadcast %cst_171 : f32 to vector<8x128xf32>
      %c0_172 = arith.constant 0 : index
      %c0_173 = arith.constant 0 : index
      %586 = vector.load %arg6[%c0_172, %c0_173] : memref<8x128xf32, #tpu.memory_space<vmem>>, vector<8x128xf32>
      tpu.vector_store %arg6[%c0_172, %c0_173], %585 {strides = array<i32>} : memref<8x128xf32, #tpu.memory_space<vmem>>, vector<8x128xf32>,
    } else {
    }
    %c0 = arith.constant 0 : index
    %c0_1 = arith.constant 0 : index
    %3 = vector.load %arg5[%c0, %c0_1] : memref<8x128xf32, #tpu.memory_space<vmem>>, vector<8x128xf32>
    %c0_2 = arith.constant 0 : index
    %c0_3 = arith.constant 0 : index
    %4 = vector.load %arg6[%c0_2, %c0_3] : memref<8x128xf32, #tpu.memory_space<vmem>>, vector<8x128xf32>
    %c0_i32_4 = arith.constant 0 : i32
    %5 = arith.index_cast %c0_i32_4 : i32 to index
    %c0_5 = arith.constant 0 : index
    %c0_6 = arith.constant 0 : index
    %6 = vector.load %arg1[%5, %c0_5, %c0_6] : memref<16x8x512xf32, #tpu.memory_space<vmem>>, vector<1x8x512xf32>
    %7 = vector.shape_cast %6 : vector<1x8x512xf32> to vector<8x512xf32>
    %8 = arith.truncf %3 : vector<8x128xf32> to vector<8x128xbf16>
    %c0_7 = arith.constant 0 : index
    %c0_8 = arith.constant 0 : index
    %9 = vector.load %arg4[%c0_7, %c0_8] : memref<128x512xbf16, #tpu.memory_space<vmem>>, vector<128x512xbf16>
    %cst = arith.constant dense<0.000000e+00> : vector<8x512xf32>
    %10 = tpu.matmul %8, %9, %cst {dimension_numbers = #tpu.dot_dimension_numbers<[1], [0], [0], [1], [0, 0, 1, 1], [], []>} : vector<8x128xbf16>, vector<128x512xbf16>, vector<8x512xf32> -> vector<8x512xf32>
    %11 = arith.addf %7, %10 : vector<8x512xf32>
    %12 = vector.extract_strided_slice %11 {offsets = [0, 0], sizes = [8, 128], strides = [1, 1]} : vector<8x512xf32> to vector<8x128xf32>
    %13 = arith.negf %12 : vector<8x128xf32>
    %14 = math.exp %13 : vector<8x128xf32>
    %cst_9 = arith.constant 1.000000e+00 : f32
    %15 = vector.broadcast %cst_9 : f32 to vector<8x128xf32>
    %16 = arith.addf %15, %14 : vector<8x128xf32>
    %17 = arith.divf %15, %16 : vector<8x128xf32>
    %18 = vector.extract_strided_slice %11 {offsets = [0, 128], sizes = [8, 128], strides = [1, 1]} : vector<8x512xf32> to vector<8x128xf32>
    %19 = arith.negf %18 : vector<8x128xf32>
    %20 = math.exp %19 : vector<8x128xf32>
    %cst_10 = arith.constant 1.000000e+00 : f32
    %21 = vector.broadcast %cst_10 : f32 to vector<8x128xf32>
    %22 = arith.addf %21, %20 : vector<8x128xf32>
    %23 = arith.divf %21, %22 : vector<8x128xf32>
    %24 = vector.extract_strided_slice %11 {offsets = [0, 256], sizes = [8, 128], strides = [1, 1]} : vector<8x512xf32> to vector<8x128xf32>
    %25 = math.tanh %24 : vector<8x128xf32>
    %26 = vector.extract_strided_slice %11 {offsets = [0, 384], sizes = [8, 128], strides = [1, 1]} : vector<8x512xf32> to vector<8x128xf32>
    %27 = arith.negf %26 : vector<8x128xf32>
    %28 = math.exp %27 : vector<8x128xf32>
    %cst_11 = arith.constant 1.000000e+00 : f32
    %29 = vector.broadcast %cst_11 : f32 to vector<8x128xf32>
    %30 = arith.addf %29, %28 : vector<8x128xf32>
    %31 = arith.divf %29, %30 : vector<8x128xf32>
    %32 = arith.mulf %23, %4 : vector<8x128xf32>
    %33 = arith.mulf %17, %25 : vector<8x128xf32>
    %34 = arith.addf %32, %33 : vector<8x128xf32>
    %35 = math.tanh %34 : vector<8x128xf32>
    %36 = arith.mulf %31, %35 : vector<8x128xf32>
    %37 = arith.index_cast %c0_i32_4 : i32 to index
    %c0_12 = arith.constant 0 : index
    %c0_13 = arith.constant 0 : index
    %38 = vector.load %arg3[%37, %c0_12, %c0_13] : memref<16x8x128xf32, #tpu.memory_space<vmem>>, vector<1x8x128xf32>
    %39 = vector.shape_cast %38 : vector<1x8x128xf32> to vector<8x128xf32>
    %40 = vector.shape_cast %36 : vector<8x128xf32> to vector<1x8x128xf32>
    tpu.vector_store %arg3[%37, %c0_12, %c0_13], %40 {strides = array<i32>} : memref<16x8x128xf32, #tpu.memory_space<vmem>>, vector<1x8x128xf32>,
    %c1_i32 = arith.constant 1 : i32
    %41 = arith.index_cast %c1_i32 : i32 to index
    %c0_14 = arith.constant 0 : index
    %c0_15 = arith.constant 0 : index
    %42 = vector.load %arg1[%41, %c0_14, %c0_15] : memref<16x8x512xf32, #tpu.memory_space<vmem>>, vector<1x8x512xf32>
    %43 = vector.shape_cast %42 : vector<1x8x512xf32> to vector<8x512xf32>
    %44 = arith.truncf %36 : vector<8x128xf32> to vector<8x128xbf16>
    %c0_16 = arith.constant 0 : index
    %c0_17 = arith.constant 0 : index
    %45 = vector.load %arg4[%c0_16, %c0_17] : memref<128x512xbf16, #tpu.memory_space<vmem>>, vector<128x512xbf16>
    %cst_18 = arith.constant dense<0.000000e+00> : vector<8x512xf32>
    %46 = tpu.matmul %44, %45, %cst_18 {dimension_numbers = #tpu.dot_dimension_numbers<[1], [0], [0], [1], [0, 0, 1, 1], [], []>} : vector<8x128xbf16>, vector<128x512xbf16>, vector<8x512xf32> -> vector<8x512xf32>
    %47 = arith.addf %43, %46 : vector<8x512xf32>
    %48 = vector.extract_strided_slice %47 {offsets = [0, 0], sizes = [8, 128], strides = [1, 1]} : vector<8x512xf32> to vector<8x128xf32>
    %49 = arith.negf %48 : vector<8x128xf32>
    %50 = math.exp %49 : vector<8x128xf32>
    %cst_19 = arith.constant 1.000000e+00 : f32
    %51 = vector.broadcast %cst_19 : f32 to vector<8x128xf32>
    %52 = arith.addf %51, %50 : vector<8x128xf32>
    %53 = arith.divf %51, %52 : vector<8x128xf32>
    %54 = vector.extract_strided_slice %47 {offsets = [0, 128], sizes = [8, 128], strides = [1, 1]} : vector<8x512xf32> to vector<8x128xf32>
    %55 = arith.negf %54 : vector<8x128xf32>
    %56 = math.exp %55 : vector<8x128xf32>
    %cst_20 = arith.constant 1.000000e+00 : f32
    %57 = vector.broadcast %cst_20 : f32 to vector<8x128xf32>
    %58 = arith.addf %57, %56 : vector<8x128xf32>
    %59 = arith.divf %57, %58 : vector<8x128xf32>
    %60 = vector.extract_strided_slice %47 {offsets = [0, 256], sizes = [8, 128], strides = [1, 1]} : vector<8x512xf32> to vector<8x128xf32>
    %61 = math.tanh %60 : vector<8x128xf32>
    %62 = vector.extract_strided_slice %47 {offsets = [0, 384], sizes = [8, 128], strides = [1, 1]} : vector<8x512xf32> to vector<8x128xf32>
    %63 = arith.negf %62 : vector<8x128xf32>
    %64 = math.exp %63 : vector<8x128xf32>
    %cst_21 = arith.constant 1.000000e+00 : f32
    %65 = vector.broadcast %cst_21 : f32 to vector<8x128xf32>
    %66 = arith.addf %65, %64 : vector<8x128xf32>
    %67 = arith.divf %65, %66 : vector<8x128xf32>
    %68 = arith.mulf %59, %34 : vector<8x128xf32>
    %69 = arith.mulf %53, %61 : vector<8x128xf32>
    %70 = arith.addf %68, %69 : vector<8x128xf32>
    %71 = math.tanh %70 : vector<8x128xf32>
    %72 = arith.mulf %67, %71 : vector<8x128xf32>
    %73 = arith.index_cast %c1_i32 : i32 to index
    %c0_22 = arith.constant 0 : index
    %c0_23 = arith.constant 0 : index
    %74 = vector.load %arg3[%73, %c0_22, %c0_23] : memref<16x8x128xf32, #tpu.memory_space<vmem>>, vector<1x8x128xf32>
    %75 = vector.shape_cast %74 : vector<1x8x128xf32> to vector<8x128xf32>
    %76 = vector.shape_cast %72 : vector<8x128xf32> to vector<1x8x128xf32>
    tpu.vector_store %arg3[%73, %c0_22, %c0_23], %76 {strides = array<i32>} : memref<16x8x128xf32, #tpu.memory_space<vmem>>, vector<1x8x128xf32>,
    %c2_i32 = arith.constant 2 : i32
    %77 = arith.index_cast %c2_i32 : i32 to index
    %c0_24 = arith.constant 0 : index
    %c0_25 = arith.constant 0 : index
    %78 = vector.load %arg1[%77, %c0_24, %c0_25] : memref<16x8x512xf32, #tpu.memory_space<vmem>>, vector<1x8x512xf32>
    %79 = vector.shape_cast %78 : vector<1x8x512xf32> to vector<8x512xf32>
    %80 = arith.truncf %72 : vector<8x128xf32> to vector<8x128xbf16>
    %c0_26 = arith.constant 0 : index
    %c0_27 = arith.constant 0 : index
    %81 = vector.load %arg4[%c0_26, %c0_27] : memref<128x512xbf16, #tpu.memory_space<vmem>>, vector<128x512xbf16>
    %cst_28 = arith.constant dense<0.000000e+00> : vector<8x512xf32>
    %82 = tpu.matmul %80, %81, %cst_28 {dimension_numbers = #tpu.dot_dimension_numbers<[1], [0], [0], [1], [0, 0, 1, 1], [], []>} : vector<8x128xbf16>, vector<128x512xbf16>, vector<8x512xf32> -> vector<8x512xf32>
    %83 = arith.addf %79, %82 : vector<8x512xf32>
    %84 = vector.extract_strided_slice %83 {offsets = [0, 0], sizes = [8, 128], strides = [1, 1]} : vector<8x512xf32> to vector<8x128xf32>
    %85 = arith.negf %84 : vector<8x128xf32>
    %86 = math.exp %85 : vector<8x128xf32>
    %cst_29 = arith.constant 1.000000e+00 : f32
    %87 = vector.broadcast %cst_29 : f32 to vector<8x128xf32>
    %88 = arith.addf %87, %86 : vector<8x128xf32>
    %89 = arith.divf %87, %88 : vector<8x128xf32>
    %90 = vector.extract_strided_slice %83 {offsets = [0, 128], sizes = [8, 128], strides = [1, 1]} : vector<8x512xf32> to vector<8x128xf32>
    %91 = arith.negf %90 : vector<8x128xf32>
    %92 = math.exp %91 : vector<8x128xf32>
    %cst_30 = arith.constant 1.000000e+00 : f32
    %93 = vector.broadcast %cst_30 : f32 to vector<8x128xf32>
    %94 = arith.addf %93, %92 : vector<8x128xf32>
    %95 = arith.divf %93, %94 : vector<8x128xf32>
    %96 = vector.extract_strided_slice %83 {offsets = [0, 256], sizes = [8, 128], strides = [1, 1]} : vector<8x512xf32> to vector<8x128xf32>
    %97 = math.tanh %96 : vector<8x128xf32>
    %98 = vector.extract_strided_slice %83 {offsets = [0, 384], sizes = [8, 128], strides = [1, 1]} : vector<8x512xf32> to vector<8x128xf32>
    %99 = arith.negf %98 : vector<8x128xf32>
    %100 = math.exp %99 : vector<8x128xf32>
    %cst_31 = arith.constant 1.000000e+00 : f32
    %101 = vector.broadcast %cst_31 : f32 to vector<8x128xf32>
    %102 = arith.addf %101, %100 : vector<8x128xf32>
    %103 = arith.divf %101, %102 : vector<8x128xf32>
    %104 = arith.mulf %95, %70 : vector<8x128xf32>
    %105 = arith.mulf %89, %97 : vector<8x128xf32>
    %106 = arith.addf %104, %105 : vector<8x128xf32>
    %107 = math.tanh %106 : vector<8x128xf32>
    %108 = arith.mulf %103, %107 : vector<8x128xf32>
    %109 = arith.index_cast %c2_i32 : i32 to index
    %c0_32 = arith.constant 0 : index
    %c0_33 = arith.constant 0 : index
    %110 = vector.load %arg3[%109, %c0_32, %c0_33] : memref<16x8x128xf32, #tpu.memory_space<vmem>>, vector<1x8x128xf32>
    %111 = vector.shape_cast %110 : vector<1x8x128xf32> to vector<8x128xf32>
    %112 = vector.shape_cast %108 : vector<8x128xf32> to vector<1x8x128xf32>
    tpu.vector_store %arg3[%109, %c0_32, %c0_33], %112 {strides = array<i32>} : memref<16x8x128xf32, #tpu.memory_space<vmem>>, vector<1x8x128xf32>,
    %c3_i32 = arith.constant 3 : i32
    %113 = arith.index_cast %c3_i32 : i32 to index
    %c0_34 = arith.constant 0 : index
    %c0_35 = arith.constant 0 : index
    %114 = vector.load %arg1[%113, %c0_34, %c0_35] : memref<16x8x512xf32, #tpu.memory_space<vmem>>, vector<1x8x512xf32>
    %115 = vector.shape_cast %114 : vector<1x8x512xf32> to vector<8x512xf32>
    %116 = arith.truncf %108 : vector<8x128xf32> to vector<8x128xbf16>
    %c0_36 = arith.constant 0 : index
    %c0_37 = arith.constant 0 : index
    %117 = vector.load %arg4[%c0_36, %c0_37] : memref<128x512xbf16, #tpu.memory_space<vmem>>, vector<128x512xbf16>
    %cst_38 = arith.constant dense<0.000000e+00> : vector<8x512xf32>
    %118 = tpu.matmul %116, %117, %cst_38 {dimension_numbers = #tpu.dot_dimension_numbers<[1], [0], [0], [1], [0, 0, 1, 1], [], []>} : vector<8x128xbf16>, vector<128x512xbf16>, vector<8x512xf32> -> vector<8x512xf32>
    %119 = arith.addf %115, %118 : vector<8x512xf32>
    %120 = vector.extract_strided_slice %119 {offsets = [0, 0], sizes = [8, 128], strides = [1, 1]} : vector<8x512xf32> to vector<8x128xf32>
    %121 = arith.negf %120 : vector<8x128xf32>
    %122 = math.exp %121 : vector<8x128xf32>
    %cst_39 = arith.constant 1.000000e+00 : f32
    %123 = vector.broadcast %cst_39 : f32 to vector<8x128xf32>
    %124 = arith.addf %123, %122 : vector<8x128xf32>
    %125 = arith.divf %123, %124 : vector<8x128xf32>
    %126 = vector.extract_strided_slice %119 {offsets = [0, 128], sizes = [8, 128], strides = [1, 1]} : vector<8x512xf32> to vector<8x128xf32>
    %127 = arith.negf %126 : vector<8x128xf32>
    %128 = math.exp %127 : vector<8x128xf32>
    %cst_40 = arith.constant 1.000000e+00 : f32
    %129 = vector.broadcast %cst_40 : f32 to vector<8x128xf32>
    %130 = arith.addf %129, %128 : vector<8x128xf32>
    %131 = arith.divf %129, %130 : vector<8x128xf32>
    %132 = vector.extract_strided_slice %119 {offsets = [0, 256], sizes = [8, 128], strides = [1, 1]} : vector<8x512xf32> to vector<8x128xf32>
    %133 = math.tanh %132 : vector<8x128xf32>
    %134 = vector.extract_strided_slice %119 {offsets = [0, 384], sizes = [8, 128], strides = [1, 1]} : vector<8x512xf32> to vector<8x128xf32>
    %135 = arith.negf %134 : vector<8x128xf32>
    %136 = math.exp %135 : vector<8x128xf32>
    %cst_41 = arith.constant 1.000000e+00 : f32
    %137 = vector.broadcast %cst_41 : f32 to vector<8x128xf32>
    %138 = arith.addf %137, %136 : vector<8x128xf32>
    %139 = arith.divf %137, %138 : vector<8x128xf32>
    %140 = arith.mulf %131, %106 : vector<8x128xf32>
    %141 = arith.mulf %125, %133 : vector<8x128xf32>
    %142 = arith.addf %140, %141 : vector<8x128xf32>
    %143 = math.tanh %142 : vector<8x128xf32>
    %144 = arith.mulf %139, %143 : vector<8x128xf32>
    %145 = arith.index_cast %c3_i32 : i32 to index
    %c0_42 = arith.constant 0 : index
    %c0_43 = arith.constant 0 : index
    %146 = vector.load %arg3[%145, %c0_42, %c0_43] : memref<16x8x128xf32, #tpu.memory_space<vmem>>, vector<1x8x128xf32>
    %147 = vector.shape_cast %146 : vector<1x8x128xf32> to vector<8x128xf32>
    %148 = vector.shape_cast %144 : vector<8x128xf32> to vector<1x8x128xf32>
    tpu.vector_store %arg3[%145, %c0_42, %c0_43], %148 {strides = array<i32>} : memref<16x8x128xf32, #tpu.memory_space<vmem>>, vector<1x8x128xf32>,
    %c4_i32 = arith.constant 4 : i32
    %149 = arith.index_cast %c4_i32 : i32 to index
    %c0_44 = arith.constant 0 : index
    %c0_45 = arith.constant 0 : index
    %150 = vector.load %arg1[%149, %c0_44, %c0_45] : memref<16x8x512xf32, #tpu.memory_space<vmem>>, vector<1x8x512xf32>
    %151 = vector.shape_cast %150 : vector<1x8x512xf32> to vector<8x512xf32>
    %152 = arith.truncf %144 : vector<8x128xf32> to vector<8x128xbf16>
    %c0_46 = arith.constant 0 : index
    %c0_47 = arith.constant 0 : index
    %153 = vector.load %arg4[%c0_46, %c0_47] : memref<128x512xbf16, #tpu.memory_space<vmem>>, vector<128x512xbf16>
    %cst_48 = arith.constant dense<0.000000e+00> : vector<8x512xf32>
    %154 = tpu.matmul %152, %153, %cst_48 {dimension_numbers = #tpu.dot_dimension_numbers<[1], [0], [0], [1], [0, 0, 1, 1], [], []>} : vector<8x128xbf16>, vector<128x512xbf16>, vector<8x512xf32> -> vector<8x512xf32>
    %155 = arith.addf %151, %154 : vector<8x512xf32>
    %156 = vector.extract_strided_slice %155 {offsets = [0, 0], sizes = [8, 128], strides = [1, 1]} : vector<8x512xf32> to vector<8x128xf32>
    %157 = arith.negf %156 : vector<8x128xf32>
    %158 = math.exp %157 : vector<8x128xf32>
    %cst_49 = arith.constant 1.000000e+00 : f32
    %159 = vector.broadcast %cst_49 : f32 to vector<8x128xf32>
    %160 = arith.addf %159, %158 : vector<8x128xf32>
    %161 = arith.divf %159, %160 : vector<8x128xf32>
    %162 = vector.extract_strided_slice %155 {offsets = [0, 128], sizes = [8, 128], strides = [1, 1]} : vector<8x512xf32> to vector<8x128xf32>
    %163 = arith.negf %162 : vector<8x128xf32>
    %164 = math.exp %163 : vector<8x128xf32>
    %cst_50 = arith.constant 1.000000e+00 : f32
    %165 = vector.broadcast %cst_50 : f32 to vector<8x128xf32>
    %166 = arith.addf %165, %164 : vector<8x128xf32>
    %167 = arith.divf %165, %166 : vector<8x128xf32>
    %168 = vector.extract_strided_slice %155 {offsets = [0, 256], sizes = [8, 128], strides = [1, 1]} : vector<8x512xf32> to vector<8x128xf32>
    %169 = math.tanh %168 : vector<8x128xf32>
    %170 = vector.extract_strided_slice %155 {offsets = [0, 384], sizes = [8, 128], strides = [1, 1]} : vector<8x512xf32> to vector<8x128xf32>
    %171 = arith.negf %170 : vector<8x128xf32>
    %172 = math.exp %171 : vector<8x128xf32>
    %cst_51 = arith.constant 1.000000e+00 : f32
    %173 = vector.broadcast %cst_51 : f32 to vector<8x128xf32>
    %174 = arith.addf %173, %172 : vector<8x128xf32>
    %175 = arith.divf %173, %174 : vector<8x128xf32>
    %176 = arith.mulf %167, %142 : vector<8x128xf32>
    %177 = arith.mulf %161, %169 : vector<8x128xf32>
    %178 = arith.addf %176, %177 : vector<8x128xf32>
    %179 = math.tanh %178 : vector<8x128xf32>
    %180 = arith.mulf %175, %179 : vector<8x128xf32>
    %181 = arith.index_cast %c4_i32 : i32 to index
    %c0_52 = arith.constant 0 : index
    %c0_53 = arith.constant 0 : index
    %182 = vector.load %arg3[%181, %c0_52, %c0_53] : memref<16x8x128xf32, #tpu.memory_space<vmem>>, vector<1x8x128xf32>
    %183 = vector.shape_cast %182 : vector<1x8x128xf32> to vector<8x128xf32>
    %184 = vector.shape_cast %180 : vector<8x128xf32> to vector<1x8x128xf32>
    tpu.vector_store %arg3[%181, %c0_52, %c0_53], %184 {strides = array<i32>} : memref<16x8x128xf32, #tpu.memory_space<vmem>>, vector<1x8x128xf32>,
    %c5_i32 = arith.constant 5 : i32
    %185 = arith.index_cast %c5_i32 : i32 to index
    %c0_54 = arith.constant 0 : index
    %c0_55 = arith.constant 0 : index
    %186 = vector.load %arg1[%185, %c0_54, %c0_55] : memref<16x8x512xf32, #tpu.memory_space<vmem>>, vector<1x8x512xf32>
    %187 = vector.shape_cast %186 : vector<1x8x512xf32> to vector<8x512xf32>
    %188 = arith.truncf %180 : vector<8x128xf32> to vector<8x128xbf16>
    %c0_56 = arith.constant 0 : index
    %c0_57 = arith.constant 0 : index
    %189 = vector.load %arg4[%c0_56, %c0_57] : memref<128x512xbf16, #tpu.memory_space<vmem>>, vector<128x512xbf16>
    %cst_58 = arith.constant dense<0.000000e+00> : vector<8x512xf32>
    %190 = tpu.matmul %188, %189, %cst_58 {dimension_numbers = #tpu.dot_dimension_numbers<[1], [0], [0], [1], [0, 0, 1, 1], [], []>} : vector<8x128xbf16>, vector<128x512xbf16>, vector<8x512xf32> -> vector<8x512xf32>
    %191 = arith.addf %187, %190 : vector<8x512xf32>
    %192 = vector.extract_strided_slice %191 {offsets = [0, 0], sizes = [8, 128], strides = [1, 1]} : vector<8x512xf32> to vector<8x128xf32>
    %193 = arith.negf %192 : vector<8x128xf32>
    %194 = math.exp %193 : vector<8x128xf32>
    %cst_59 = arith.constant 1.000000e+00 : f32
    %195 = vector.broadcast %cst_59 : f32 to vector<8x128xf32>
    %196 = arith.addf %195, %194 : vector<8x128xf32>
    %197 = arith.divf %195, %196 : vector<8x128xf32>
    %198 = vector.extract_strided_slice %191 {offsets = [0, 128], sizes = [8, 128], strides = [1, 1]} : vector<8x512xf32> to vector<8x128xf32>
    %199 = arith.negf %198 : vector<8x128xf32>
    %200 = math.exp %199 : vector<8x128xf32>
    %cst_60 = arith.constant 1.000000e+00 : f32
    %201 = vector.broadcast %cst_60 : f32 to vector<8x128xf32>
    %202 = arith.addf %201, %200 : vector<8x128xf32>
    %203 = arith.divf %201, %202 : vector<8x128xf32>
    %204 = vector.extract_strided_slice %191 {offsets = [0, 256], sizes = [8, 128], strides = [1, 1]} : vector<8x512xf32> to vector<8x128xf32>
    %205 = math.tanh %204 : vector<8x128xf32>
    %206 = vector.extract_strided_slice %191 {offsets = [0, 384], sizes = [8, 128], strides = [1, 1]} : vector<8x512xf32> to vector<8x128xf32>
    %207 = arith.negf %206 : vector<8x128xf32>
    %208 = math.exp %207 : vector<8x128xf32>
    %cst_61 = arith.constant 1.000000e+00 : f32
    %209 = vector.broadcast %cst_61 : f32 to vector<8x128xf32>
    %210 = arith.addf %209, %208 : vector<8x128xf32>
    %211 = arith.divf %209, %210 : vector<8x128xf32>
    %212 = arith.mulf %203, %178 : vector<8x128xf32>
    %213 = arith.mulf %197, %205 : vector<8x128xf32>
    %214 = arith.addf %212, %213 : vector<8x128xf32>
    %215 = math.tanh %214 : vector<8x128xf32>
    %216 = arith.mulf %211, %215 : vector<8x128xf32>
    %217 = arith.index_cast %c5_i32 : i32 to index
    %c0_62 = arith.constant 0 : index
    %c0_63 = arith.constant 0 : index
    %218 = vector.load %arg3[%217, %c0_62, %c0_63] : memref<16x8x128xf32, #tpu.memory_space<vmem>>, vector<1x8x128xf32>
    %219 = vector.shape_cast %218 : vector<1x8x128xf32> to vector<8x128xf32>
    %220 = vector.shape_cast %216 : vector<8x128xf32> to vector<1x8x128xf32>
    tpu.vector_store %arg3[%217, %c0_62, %c0_63], %220 {strides = array<i32>} : memref<16x8x128xf32, #tpu.memory_space<vmem>>, vector<1x8x128xf32>,
    %c6_i32 = arith.constant 6 : i32
    %221 = arith.index_cast %c6_i32 : i32 to index
    %c0_64 = arith.constant 0 : index
    %c0_65 = arith.constant 0 : index
    %222 = vector.load %arg1[%221, %c0_64, %c0_65] : memref<16x8x512xf32, #tpu.memory_space<vmem>>, vector<1x8x512xf32>
    %223 = vector.shape_cast %222 : vector<1x8x512xf32> to vector<8x512xf32>
    %224 = arith.truncf %216 : vector<8x128xf32> to vector<8x128xbf16>
    %c0_66 = arith.constant 0 : index
    %c0_67 = arith.constant 0 : index
    %225 = vector.load %arg4[%c0_66, %c0_67] : memref<128x512xbf16, #tpu.memory_space<vmem>>, vector<128x512xbf16>
    %cst_68 = arith.constant dense<0.000000e+00> : vector<8x512xf32>
    %226 = tpu.matmul %224, %225, %cst_68 {dimension_numbers = #tpu.dot_dimension_numbers<[1], [0], [0], [1], [0, 0, 1, 1], [], []>} : vector<8x128xbf16>, vector<128x512xbf16>, vector<8x512xf32> -> vector<8x512xf32>
    %227 = arith.addf %223, %226 : vector<8x512xf32>
    %228 = vector.extract_strided_slice %227 {offsets = [0, 0], sizes = [8, 128], strides = [1, 1]} : vector<8x512xf32> to vector<8x128xf32>
    %229 = arith.negf %228 : vector<8x128xf32>
    %230 = math.exp %229 : vector<8x128xf32>
    %cst_69 = arith.constant 1.000000e+00 : f32
    %231 = vector.broadcast %cst_69 : f32 to vector<8x128xf32>
    %232 = arith.addf %231, %230 : vector<8x128xf32>
    %233 = arith.divf %231, %232 : vector<8x128xf32>
    %234 = vector.extract_strided_slice %227 {offsets = [0, 128], sizes = [8, 128], strides = [1, 1]} : vector<8x512xf32> to vector<8x128xf32>
    %235 = arith.negf %234 : vector<8x128xf32>
    %236 = math.exp %235 : vector<8x128xf32>
    %cst_70 = arith.constant 1.000000e+00 : f32
    %237 = vector.broadcast %cst_70 : f32 to vector<8x128xf32>
    %238 = arith.addf %237, %236 : vector<8x128xf32>
    %239 = arith.divf %237, %238 : vector<8x128xf32>
    %240 = vector.extract_strided_slice %227 {offsets = [0, 256], sizes = [8, 128], strides = [1, 1]} : vector<8x512xf32> to vector<8x128xf32>
    %241 = math.tanh %240 : vector<8x128xf32>
    %242 = vector.extract_strided_slice %227 {offsets = [0, 384], sizes = [8, 128], strides = [1, 1]} : vector<8x512xf32> to vector<8x128xf32>
    %243 = arith.negf %242 : vector<8x128xf32>
    %244 = math.exp %243 : vector<8x128xf32>
    %cst_71 = arith.constant 1.000000e+00 : f32
    %245 = vector.broadcast %cst_71 : f32 to vector<8x128xf32>
    %246 = arith.addf %245, %244 : vector<8x128xf32>
    %247 = arith.divf %245, %246 : vector<8x128xf32>
    %248 = arith.mulf %239, %214 : vector<8x128xf32>
    %249 = arith.mulf %233, %241 : vector<8x128xf32>
    %250 = arith.addf %248, %249 : vector<8x128xf32>
    %251 = math.tanh %250 : vector<8x128xf32>
    %252 = arith.mulf %247, %251 : vector<8x128xf32>
    %253 = arith.index_cast %c6_i32 : i32 to index
    %c0_72 = arith.constant 0 : index
    %c0_73 = arith.constant 0 : index
    %254 = vector.load %arg3[%253, %c0_72, %c0_73] : memref<16x8x128xf32, #tpu.memory_space<vmem>>, vector<1x8x128xf32>
    %255 = vector.shape_cast %254 : vector<1x8x128xf32> to vector<8x128xf32>
    %256 = vector.shape_cast %252 : vector<8x128xf32> to vector<1x8x128xf32>
    tpu.vector_store %arg3[%253, %c0_72, %c0_73], %256 {strides = array<i32>} : memref<16x8x128xf32, #tpu.memory_space<vmem>>, vector<1x8x128xf32>,
    %c7_i32 = arith.constant 7 : i32
    %257 = arith.index_cast %c7_i32 : i32 to index
    %c0_74 = arith.constant 0 : index
    %c0_75 = arith.constant 0 : index
    %258 = vector.load %arg1[%257, %c0_74, %c0_75] : memref<16x8x512xf32, #tpu.memory_space<vmem>>, vector<1x8x512xf32>
    %259 = vector.shape_cast %258 : vector<1x8x512xf32> to vector<8x512xf32>
    %260 = arith.truncf %252 : vector<8x128xf32> to vector<8x128xbf16>
    %c0_76 = arith.constant 0 : index
    %c0_77 = arith.constant 0 : index
    %261 = vector.load %arg4[%c0_76, %c0_77] : memref<128x512xbf16, #tpu.memory_space<vmem>>, vector<128x512xbf16>
    %cst_78 = arith.constant dense<0.000000e+00> : vector<8x512xf32>
    %262 = tpu.matmul %260, %261, %cst_78 {dimension_numbers = #tpu.dot_dimension_numbers<[1], [0], [0], [1], [0, 0, 1, 1], [], []>} : vector<8x128xbf16>, vector<128x512xbf16>, vector<8x512xf32> -> vector<8x512xf32>
    %263 = arith.addf %259, %262 : vector<8x512xf32>
    %264 = vector.extract_strided_slice %263 {offsets = [0, 0], sizes = [8, 128], strides = [1, 1]} : vector<8x512xf32> to vector<8x128xf32>
    %265 = arith.negf %264 : vector<8x128xf32>
    %266 = math.exp %265 : vector<8x128xf32>
    %cst_79 = arith.constant 1.000000e+00 : f32
    %267 = vector.broadcast %cst_79 : f32 to vector<8x128xf32>
    %268 = arith.addf %267, %266 : vector<8x128xf32>
    %269 = arith.divf %267, %268 : vector<8x128xf32>
    %270 = vector.extract_strided_slice %263 {offsets = [0, 128], sizes = [8, 128], strides = [1, 1]} : vector<8x512xf32> to vector<8x128xf32>
    %271 = arith.negf %270 : vector<8x128xf32>
    %272 = math.exp %271 : vector<8x128xf32>
    %cst_80 = arith.constant 1.000000e+00 : f32
    %273 = vector.broadcast %cst_80 : f32 to vector<8x128xf32>
    %274 = arith.addf %273, %272 : vector<8x128xf32>
    %275 = arith.divf %273, %274 : vector<8x128xf32>
    %276 = vector.extract_strided_slice %263 {offsets = [0, 256], sizes = [8, 128], strides = [1, 1]} : vector<8x512xf32> to vector<8x128xf32>
    %277 = math.tanh %276 : vector<8x128xf32>
    %278 = vector.extract_strided_slice %263 {offsets = [0, 384], sizes = [8, 128], strides = [1, 1]} : vector<8x512xf32> to vector<8x128xf32>
    %279 = arith.negf %278 : vector<8x128xf32>
    %280 = math.exp %279 : vector<8x128xf32>
    %cst_81 = arith.constant 1.000000e+00 : f32
    %281 = vector.broadcast %cst_81 : f32 to vector<8x128xf32>
    %282 = arith.addf %281, %280 : vector<8x128xf32>
    %283 = arith.divf %281, %282 : vector<8x128xf32>
    %284 = arith.mulf %275, %250 : vector<8x128xf32>
    %285 = arith.mulf %269, %277 : vector<8x128xf32>
    %286 = arith.addf %284, %285 : vector<8x128xf32>
    %287 = math.tanh %286 : vector<8x128xf32>
    %288 = arith.mulf %283, %287 : vector<8x128xf32>
    %289 = arith.index_cast %c7_i32 : i32 to index
    %c0_82 = arith.constant 0 : index
    %c0_83 = arith.constant 0 : index
    %290 = vector.load %arg3[%289, %c0_82, %c0_83] : memref<16x8x128xf32, #tpu.memory_space<vmem>>, vector<1x8x128xf32>
    %291 = vector.shape_cast %290 : vector<1x8x128xf32> to vector<8x128xf32>
    %292 = vector.shape_cast %288 : vector<8x128xf32> to vector<1x8x128xf32>
    tpu.vector_store %arg3[%289, %c0_82, %c0_83], %292 {strides = array<i32>} : memref<16x8x128xf32, #tpu.memory_space<vmem>>, vector<1x8x128xf32>,
    %c8_i32 = arith.constant 8 : i32
    %293 = arith.index_cast %c8_i32 : i32 to index
    %c0_84 = arith.constant 0 : index
    %c0_85 = arith.constant 0 : index
    %294 = vector.load %arg1[%293, %c0_84, %c0_85] : memref<16x8x512xf32, #tpu.memory_space<vmem>>, vector<1x8x512xf32>
    %295 = vector.shape_cast %294 : vector<1x8x512xf32> to vector<8x512xf32>
    %296 = arith.truncf %288 : vector<8x128xf32> to vector<8x128xbf16>
    %c0_86 = arith.constant 0 : index
    %c0_87 = arith.constant 0 : index
    %297 = vector.load %arg4[%c0_86, %c0_87] : memref<128x512xbf16, #tpu.memory_space<vmem>>, vector<128x512xbf16>
    %cst_88 = arith.constant dense<0.000000e+00> : vector<8x512xf32>
    %298 = tpu.matmul %296, %297, %cst_88 {dimension_numbers = #tpu.dot_dimension_numbers<[1], [0], [0], [1], [0, 0, 1, 1], [], []>} : vector<8x128xbf16>, vector<128x512xbf16>, vector<8x512xf32> -> vector<8x512xf32>
    %299 = arith.addf %295, %298 : vector<8x512xf32>
    %300 = vector.extract_strided_slice %299 {offsets = [0, 0], sizes = [8, 128], strides = [1, 1]} : vector<8x512xf32> to vector<8x128xf32>
    %301 = arith.negf %300 : vector<8x128xf32>
    %302 = math.exp %301 : vector<8x128xf32>
    %cst_89 = arith.constant 1.000000e+00 : f32
    %303 = vector.broadcast %cst_89 : f32 to vector<8x128xf32>
    %304 = arith.addf %303, %302 : vector<8x128xf32>
    %305 = arith.divf %303, %304 : vector<8x128xf32>
    %306 = vector.extract_strided_slice %299 {offsets = [0, 128], sizes = [8, 128], strides = [1, 1]} : vector<8x512xf32> to vector<8x128xf32>
    %307 = arith.negf %306 : vector<8x128xf32>
    %308 = math.exp %307 : vector<8x128xf32>
    %cst_90 = arith.constant 1.000000e+00 : f32
    %309 = vector.broadcast %cst_90 : f32 to vector<8x128xf32>
    %310 = arith.addf %309, %308 : vector<8x128xf32>
    %311 = arith.divf %309, %310 : vector<8x128xf32>
    %312 = vector.extract_strided_slice %299 {offsets = [0, 256], sizes = [8, 128], strides = [1, 1]} : vector<8x512xf32> to vector<8x128xf32>
    %313 = math.tanh %312 : vector<8x128xf32>
    %314 = vector.extract_strided_slice %299 {offsets = [0, 384], sizes = [8, 128], strides = [1, 1]} : vector<8x512xf32> to vector<8x128xf32>
    %315 = arith.negf %314 : vector<8x128xf32>
    %316 = math.exp %315 : vector<8x128xf32>
    %cst_91 = arith.constant 1.000000e+00 : f32
    %317 = vector.broadcast %cst_91 : f32 to vector<8x128xf32>
    %318 = arith.addf %317, %316 : vector<8x128xf32>
    %319 = arith.divf %317, %318 : vector<8x128xf32>
    %320 = arith.mulf %311, %286 : vector<8x128xf32>
    %321 = arith.mulf %305, %313 : vector<8x128xf32>
    %322 = arith.addf %320, %321 : vector<8x128xf32>
    %323 = math.tanh %322 : vector<8x128xf32>
    %324 = arith.mulf %319, %323 : vector<8x128xf32>
    %325 = arith.index_cast %c8_i32 : i32 to index
    %c0_92 = arith.constant 0 : index
    %c0_93 = arith.constant 0 : index
    %326 = vector.load %arg3[%325, %c0_92, %c0_93] : memref<16x8x128xf32, #tpu.memory_space<vmem>>, vector<1x8x128xf32>
    %327 = vector.shape_cast %326 : vector<1x8x128xf32> to vector<8x128xf32>
    %328 = vector.shape_cast %324 : vector<8x128xf32> to vector<1x8x128xf32>
    tpu.vector_store %arg3[%325, %c0_92, %c0_93], %328 {strides = array<i32>} : memref<16x8x128xf32, #tpu.memory_space<vmem>>, vector<1x8x128xf32>,
    %c9_i32 = arith.constant 9 : i32
    %329 = arith.index_cast %c9_i32 : i32 to index
    %c0_94 = arith.constant 0 : index
    %c0_95 = arith.constant 0 : index
    %330 = vector.load %arg1[%329, %c0_94, %c0_95] : memref<16x8x512xf32, #tpu.memory_space<vmem>>, vector<1x8x512xf32>
    %331 = vector.shape_cast %330 : vector<1x8x512xf32> to vector<8x512xf32>
    %332 = arith.truncf %324 : vector<8x128xf32> to vector<8x128xbf16>
    %c0_96 = arith.constant 0 : index
    %c0_97 = arith.constant 0 : index
    %333 = vector.load %arg4[%c0_96, %c0_97] : memref<128x512xbf16, #tpu.memory_space<vmem>>, vector<128x512xbf16>
    %cst_98 = arith.constant dense<0.000000e+00> : vector<8x512xf32>
    %334 = tpu.matmul %332, %333, %cst_98 {dimension_numbers = #tpu.dot_dimension_numbers<[1], [0], [0], [1], [0, 0, 1, 1], [], []>} : vector<8x128xbf16>, vector<128x512xbf16>, vector<8x512xf32> -> vector<8x512xf32>
    %335 = arith.addf %331, %334 : vector<8x512xf32>
    %336 = vector.extract_strided_slice %335 {offsets = [0, 0], sizes = [8, 128], strides = [1, 1]} : vector<8x512xf32> to vector<8x128xf32>
    %337 = arith.negf %336 : vector<8x128xf32>
    %338 = math.exp %337 : vector<8x128xf32>
    %cst_99 = arith.constant 1.000000e+00 : f32
    %339 = vector.broadcast %cst_99 : f32 to vector<8x128xf32>
    %340 = arith.addf %339, %338 : vector<8x128xf32>
    %341 = arith.divf %339, %340 : vector<8x128xf32>
    %342 = vector.extract_strided_slice %335 {offsets = [0, 128], sizes = [8, 128], strides = [1, 1]} : vector<8x512xf32> to vector<8x128xf32>
    %343 = arith.negf %342 : vector<8x128xf32>
    %344 = math.exp %343 : vector<8x128xf32>
    %cst_100 = arith.constant 1.000000e+00 : f32
    %345 = vector.broadcast %cst_100 : f32 to vector<8x128xf32>
    %346 = arith.addf %345, %344 : vector<8x128xf32>
    %347 = arith.divf %345, %346 : vector<8x128xf32>
    %348 = vector.extract_strided_slice %335 {offsets = [0, 256], sizes = [8, 128], strides = [1, 1]} : vector<8x512xf32> to vector<8x128xf32>
    %349 = math.tanh %348 : vector<8x128xf32>
    %350 = vector.extract_strided_slice %335 {offsets = [0, 384], sizes = [8, 128], strides = [1, 1]} : vector<8x512xf32> to vector<8x128xf32>
    %351 = arith.negf %350 : vector<8x128xf32>
    %352 = math.exp %351 : vector<8x128xf32>
    %cst_101 = arith.constant 1.000000e+00 : f32
    %353 = vector.broadcast %cst_101 : f32 to vector<8x128xf32>
    %354 = arith.addf %353, %352 : vector<8x128xf32>
    %355 = arith.divf %353, %354 : vector<8x128xf32>
    %356 = arith.mulf %347, %322 : vector<8x128xf32>
    %357 = arith.mulf %341, %349 : vector<8x128xf32>
    %358 = arith.addf %356, %357 : vector<8x128xf32>
    %359 = math.tanh %358 : vector<8x128xf32>
    %360 = arith.mulf %355, %359 : vector<8x128xf32>
    %361 = arith.index_cast %c9_i32 : i32 to index
    %c0_102 = arith.constant 0 : index
    %c0_103 = arith.constant 0 : index
    %362 = vector.load %arg3[%361, %c0_102, %c0_103] : memref<16x8x128xf32, #tpu.memory_space<vmem>>, vector<1x8x128xf32>
    %363 = vector.shape_cast %362 : vector<1x8x128xf32> to vector<8x128xf32>
    %364 = vector.shape_cast %360 : vector<8x128xf32> to vector<1x8x128xf32>
    tpu.vector_store %arg3[%361, %c0_102, %c0_103], %364 {strides = array<i32>} : memref<16x8x128xf32, #tpu.memory_space<vmem>>, vector<1x8x128xf32>,
    %c10_i32 = arith.constant 10 : i32
    %365 = arith.index_cast %c10_i32 : i32 to index
    %c0_104 = arith.constant 0 : index
    %c0_105 = arith.constant 0 : index
    %366 = vector.load %arg1[%365, %c0_104, %c0_105] : memref<16x8x512xf32, #tpu.memory_space<vmem>>, vector<1x8x512xf32>
    %367 = vector.shape_cast %366 : vector<1x8x512xf32> to vector<8x512xf32>
    %368 = arith.truncf %360 : vector<8x128xf32> to vector<8x128xbf16>
    %c0_106 = arith.constant 0 : index
    %c0_107 = arith.constant 0 : index
    %369 = vector.load %arg4[%c0_106, %c0_107] : memref<128x512xbf16, #tpu.memory_space<vmem>>, vector<128x512xbf16>
    %cst_108 = arith.constant dense<0.000000e+00> : vector<8x512xf32>
    %370 = tpu.matmul %368, %369, %cst_108 {dimension_numbers = #tpu.dot_dimension_numbers<[1], [0], [0], [1], [0, 0, 1, 1], [], []>} : vector<8x128xbf16>, vector<128x512xbf16>, vector<8x512xf32> -> vector<8x512xf32>
    %371 = arith.addf %367, %370 : vector<8x512xf32>
    %372 = vector.extract_strided_slice %371 {offsets = [0, 0], sizes = [8, 128], strides = [1, 1]} : vector<8x512xf32> to vector<8x128xf32>
    %373 = arith.negf %372 : vector<8x128xf32>
    %374 = math.exp %373 : vector<8x128xf32>
    %cst_109 = arith.constant 1.000000e+00 : f32
    %375 = vector.broadcast %cst_109 : f32 to vector<8x128xf32>
    %376 = arith.addf %375, %374 : vector<8x128xf32>
    %377 = arith.divf %375, %376 : vector<8x128xf32>
    %378 = vector.extract_strided_slice %371 {offsets = [0, 128], sizes = [8, 128], strides = [1, 1]} : vector<8x512xf32> to vector<8x128xf32>
    %379 = arith.negf %378 : vector<8x128xf32>
    %380 = math.exp %379 : vector<8x128xf32>
    %cst_110 = arith.constant 1.000000e+00 : f32
    %381 = vector.broadcast %cst_110 : f32 to vector<8x128xf32>
    %382 = arith.addf %381, %380 : vector<8x128xf32>
    %383 = arith.divf %381, %382 : vector<8x128xf32>
    %384 = vector.extract_strided_slice %371 {offsets = [0, 256], sizes = [8, 128], strides = [1, 1]} : vector<8x512xf32> to vector<8x128xf32>
    %385 = math.tanh %384 : vector<8x128xf32>
    %386 = vector.extract_strided_slice %371 {offsets = [0, 384], sizes = [8, 128], strides = [1, 1]} : vector<8x512xf32> to vector<8x128xf32>
    %387 = arith.negf %386 : vector<8x128xf32>
    %388 = math.exp %387 : vector<8x128xf32>
    %cst_111 = arith.constant 1.000000e+00 : f32
    %389 = vector.broadcast %cst_111 : f32 to vector<8x128xf32>
    %390 = arith.addf %389, %388 : vector<8x128xf32>
    %391 = arith.divf %389, %390 : vector<8x128xf32>
    %392 = arith.mulf %383, %358 : vector<8x128xf32>
    %393 = arith.mulf %377, %385 : vector<8x128xf32>
    %394 = arith.addf %392, %393 : vector<8x128xf32>
    %395 = math.tanh %394 : vector<8x128xf32>
    %396 = arith.mulf %391, %395 : vector<8x128xf32>
    %397 = arith.index_cast %c10_i32 : i32 to index
    %c0_112 = arith.constant 0 : index
    %c0_113 = arith.constant 0 : index
    %398 = vector.load %arg3[%397, %c0_112, %c0_113] : memref<16x8x128xf32, #tpu.memory_space<vmem>>, vector<1x8x128xf32>
    %399 = vector.shape_cast %398 : vector<1x8x128xf32> to vector<8x128xf32>
    %400 = vector.shape_cast %396 : vector<8x128xf32> to vector<1x8x128xf32>
    tpu.vector_store %arg3[%397, %c0_112, %c0_113], %400 {strides = array<i32>} : memref<16x8x128xf32, #tpu.memory_space<vmem>>, vector<1x8x128xf32>,
    %c11_i32 = arith.constant 11 : i32
    %401 = arith.index_cast %c11_i32 : i32 to index
    %c0_114 = arith.constant 0 : index
    %c0_115 = arith.constant 0 : index
    %402 = vector.load %arg1[%401, %c0_114, %c0_115] : memref<16x8x512xf32, #tpu.memory_space<vmem>>, vector<1x8x512xf32>
    %403 = vector.shape_cast %402 : vector<1x8x512xf32> to vector<8x512xf32>
    %404 = arith.truncf %396 : vector<8x128xf32> to vector<8x128xbf16>
    %c0_116 = arith.constant 0 : index
    %c0_117 = arith.constant 0 : index
    %405 = vector.load %arg4[%c0_116, %c0_117] : memref<128x512xbf16, #tpu.memory_space<vmem>>, vector<128x512xbf16>
    %cst_118 = arith.constant dense<0.000000e+00> : vector<8x512xf32>
    %406 = tpu.matmul %404, %405, %cst_118 {dimension_numbers = #tpu.dot_dimension_numbers<[1], [0], [0], [1], [0, 0, 1, 1], [], []>} : vector<8x128xbf16>, vector<128x512xbf16>, vector<8x512xf32> -> vector<8x512xf32>
    %407 = arith.addf %403, %406 : vector<8x512xf32>
    %408 = vector.extract_strided_slice %407 {offsets = [0, 0], sizes = [8, 128], strides = [1, 1]} : vector<8x512xf32> to vector<8x128xf32>
    %409 = arith.negf %408 : vector<8x128xf32>
    %410 = math.exp %409 : vector<8x128xf32>
    %cst_119 = arith.constant 1.000000e+00 : f32
    %411 = vector.broadcast %cst_119 : f32 to vector<8x128xf32>
    %412 = arith.addf %411, %410 : vector<8x128xf32>
    %413 = arith.divf %411, %412 : vector<8x128xf32>
    %414 = vector.extract_strided_slice %407 {offsets = [0, 128], sizes = [8, 128], strides = [1, 1]} : vector<8x512xf32> to vector<8x128xf32>
    %415 = arith.negf %414 : vector<8x128xf32>
    %416 = math.exp %415 : vector<8x128xf32>
    %cst_120 = arith.constant 1.000000e+00 : f32
    %417 = vector.broadcast %cst_120 : f32 to vector<8x128xf32>
    %418 = arith.addf %417, %416 : vector<8x128xf32>
    %419 = arith.divf %417, %418 : vector<8x128xf32>
    %420 = vector.extract_strided_slice %407 {offsets = [0, 256], sizes = [8, 128], strides = [1, 1]} : vector<8x512xf32> to vector<8x128xf32>
    %421 = math.tanh %420 : vector<8x128xf32>
    %422 = vector.extract_strided_slice %407 {offsets = [0, 384], sizes = [8, 128], strides = [1, 1]} : vector<8x512xf32> to vector<8x128xf32>
    %423 = arith.negf %422 : vector<8x128xf32>
    %424 = math.exp %423 : vector<8x128xf32>
    %cst_121 = arith.constant 1.000000e+00 : f32
    %425 = vector.broadcast %cst_121 : f32 to vector<8x128xf32>
    %426 = arith.addf %425, %424 : vector<8x128xf32>
    %427 = arith.divf %425, %426 : vector<8x128xf32>
    %428 = arith.mulf %419, %394 : vector<8x128xf32>
    %429 = arith.mulf %413, %421 : vector<8x128xf32>
    %430 = arith.addf %428, %429 : vector<8x128xf32>
    %431 = math.tanh %430 : vector<8x128xf32>
    %432 = arith.mulf %427, %431 : vector<8x128xf32>
    %433 = arith.index_cast %c11_i32 : i32 to index
    %c0_122 = arith.constant 0 : index
    %c0_123 = arith.constant 0 : index
    %434 = vector.load %arg3[%433, %c0_122, %c0_123] : memref<16x8x128xf32, #tpu.memory_space<vmem>>, vector<1x8x128xf32>
    %435 = vector.shape_cast %434 : vector<1x8x128xf32> to vector<8x128xf32>
    %436 = vector.shape_cast %432 : vector<8x128xf32> to vector<1x8x128xf32>
    tpu.vector_store %arg3[%433, %c0_122, %c0_123], %436 {strides = array<i32>} : memref<16x8x128xf32, #tpu.memory_space<vmem>>, vector<1x8x128xf32>,
    %c12_i32 = arith.constant 12 : i32
    %437 = arith.index_cast %c12_i32 : i32 to index
    %c0_124 = arith.constant 0 : index
    %c0_125 = arith.constant 0 : index
    %438 = vector.load %arg1[%437, %c0_124, %c0_125] : memref<16x8x512xf32, #tpu.memory_space<vmem>>, vector<1x8x512xf32>
    %439 = vector.shape_cast %438 : vector<1x8x512xf32> to vector<8x512xf32>
    %440 = arith.truncf %432 : vector<8x128xf32> to vector<8x128xbf16>
    %c0_126 = arith.constant 0 : index
    %c0_127 = arith.constant 0 : index
    %441 = vector.load %arg4[%c0_126, %c0_127] : memref<128x512xbf16, #tpu.memory_space<vmem>>, vector<128x512xbf16>
    %cst_128 = arith.constant dense<0.000000e+00> : vector<8x512xf32>
    %442 = tpu.matmul %440, %441, %cst_128 {dimension_numbers = #tpu.dot_dimension_numbers<[1], [0], [0], [1], [0, 0, 1, 1], [], []>} : vector<8x128xbf16>, vector<128x512xbf16>, vector<8x512xf32> -> vector<8x512xf32>
    %443 = arith.addf %439, %442 : vector<8x512xf32>
    %444 = vector.extract_strided_slice %443 {offsets = [0, 0], sizes = [8, 128], strides = [1, 1]} : vector<8x512xf32> to vector<8x128xf32>
    %445 = arith.negf %444 : vector<8x128xf32>
    %446 = math.exp %445 : vector<8x128xf32>
    %cst_129 = arith.constant 1.000000e+00 : f32
    %447 = vector.broadcast %cst_129 : f32 to vector<8x128xf32>
    %448 = arith.addf %447, %446 : vector<8x128xf32>
    %449 = arith.divf %447, %448 : vector<8x128xf32>
    %450 = vector.extract_strided_slice %443 {offsets = [0, 128], sizes = [8, 128], strides = [1, 1]} : vector<8x512xf32> to vector<8x128xf32>
    %451 = arith.negf %450 : vector<8x128xf32>
    %452 = math.exp %451 : vector<8x128xf32>
    %cst_130 = arith.constant 1.000000e+00 : f32
    %453 = vector.broadcast %cst_130 : f32 to vector<8x128xf32>
    %454 = arith.addf %453, %452 : vector<8x128xf32>
    %455 = arith.divf %453, %454 : vector<8x128xf32>
    %456 = vector.extract_strided_slice %443 {offsets = [0, 256], sizes = [8, 128], strides = [1, 1]} : vector<8x512xf32> to vector<8x128xf32>
    %457 = math.tanh %456 : vector<8x128xf32>
    %458 = vector.extract_strided_slice %443 {offsets = [0, 384], sizes = [8, 128], strides = [1, 1]} : vector<8x512xf32> to vector<8x128xf32>
    %459 = arith.negf %458 : vector<8x128xf32>
    %460 = math.exp %459 : vector<8x128xf32>
    %cst_131 = arith.constant 1.000000e+00 : f32
    %461 = vector.broadcast %cst_131 : f32 to vector<8x128xf32>
    %462 = arith.addf %461, %460 : vector<8x128xf32>
    %463 = arith.divf %461, %462 : vector<8x128xf32>
    %464 = arith.mulf %455, %430 : vector<8x128xf32>
    %465 = arith.mulf %449, %457 : vector<8x128xf32>
    %466 = arith.addf %464, %465 : vector<8x128xf32>
    %467 = math.tanh %466 : vector<8x128xf32>
    %468 = arith.mulf %463, %467 : vector<8x128xf32>
    %469 = arith.index_cast %c12_i32 : i32 to index
    %c0_132 = arith.constant 0 : index
    %c0_133 = arith.constant 0 : index
    %470 = vector.load %arg3[%469, %c0_132, %c0_133] : memref<16x8x128xf32, #tpu.memory_space<vmem>>, vector<1x8x128xf32>
    %471 = vector.shape_cast %470 : vector<1x8x128xf32> to vector<8x128xf32>
    %472 = vector.shape_cast %468 : vector<8x128xf32> to vector<1x8x128xf32>
    tpu.vector_store %arg3[%469, %c0_132, %c0_133], %472 {strides = array<i32>} : memref<16x8x128xf32, #tpu.memory_space<vmem>>, vector<1x8x128xf32>,
    %c13_i32 = arith.constant 13 : i32
    %473 = arith.index_cast %c13_i32 : i32 to index
    %c0_134 = arith.constant 0 : index
    %c0_135 = arith.constant 0 : index
    %474 = vector.load %arg1[%473, %c0_134, %c0_135] : memref<16x8x512xf32, #tpu.memory_space<vmem>>, vector<1x8x512xf32>
    %475 = vector.shape_cast %474 : vector<1x8x512xf32> to vector<8x512xf32>
    %476 = arith.truncf %468 : vector<8x128xf32> to vector<8x128xbf16>
    %c0_136 = arith.constant 0 : index
    %c0_137 = arith.constant 0 : index
    %477 = vector.load %arg4[%c0_136, %c0_137] : memref<128x512xbf16, #tpu.memory_space<vmem>>, vector<128x512xbf16>
    %cst_138 = arith.constant dense<0.000000e+00> : vector<8x512xf32>
    %478 = tpu.matmul %476, %477, %cst_138 {dimension_numbers = #tpu.dot_dimension_numbers<[1], [0], [0], [1], [0, 0, 1, 1], [], []>} : vector<8x128xbf16>, vector<128x512xbf16>, vector<8x512xf32> -> vector<8x512xf32>
    %479 = arith.addf %475, %478 : vector<8x512xf32>
    %480 = vector.extract_strided_slice %479 {offsets = [0, 0], sizes = [8, 128], strides = [1, 1]} : vector<8x512xf32> to vector<8x128xf32>
    %481 = arith.negf %480 : vector<8x128xf32>
    %482 = math.exp %481 : vector<8x128xf32>
    %cst_139 = arith.constant 1.000000e+00 : f32
    %483 = vector.broadcast %cst_139 : f32 to vector<8x128xf32>
    %484 = arith.addf %483, %482 : vector<8x128xf32>
    %485 = arith.divf %483, %484 : vector<8x128xf32>
    %486 = vector.extract_strided_slice %479 {offsets = [0, 128], sizes = [8, 128], strides = [1, 1]} : vector<8x512xf32> to vector<8x128xf32>
    %487 = arith.negf %486 : vector<8x128xf32>
    %488 = math.exp %487 : vector<8x128xf32>
    %cst_140 = arith.constant 1.000000e+00 : f32
    %489 = vector.broadcast %cst_140 : f32 to vector<8x128xf32>
    %490 = arith.addf %489, %488 : vector<8x128xf32>
    %491 = arith.divf %489, %490 : vector<8x128xf32>
    %492 = vector.extract_strided_slice %479 {offsets = [0, 256], sizes = [8, 128], strides = [1, 1]} : vector<8x512xf32> to vector<8x128xf32>
    %493 = math.tanh %492 : vector<8x128xf32>
    %494 = vector.extract_strided_slice %479 {offsets = [0, 384], sizes = [8, 128], strides = [1, 1]} : vector<8x512xf32> to vector<8x128xf32>
    %495 = arith.negf %494 : vector<8x128xf32>
    %496 = math.exp %495 : vector<8x128xf32>
    %cst_141 = arith.constant 1.000000e+00 : f32
    %497 = vector.broadcast %cst_141 : f32 to vector<8x128xf32>
    %498 = arith.addf %497, %496 : vector<8x128xf32>
    %499 = arith.divf %497, %498 : vector<8x128xf32>
    %500 = arith.mulf %491, %466 : vector<8x128xf32>
    %501 = arith.mulf %485, %493 : vector<8x128xf32>
    %502 = arith.addf %500, %501 : vector<8x128xf32>
    %503 = math.tanh %502 : vector<8x128xf32>
    %504 = arith.mulf %499, %503 : vector<8x128xf32>
    %505 = arith.index_cast %c13_i32 : i32 to index
    %c0_142 = arith.constant 0 : index
    %c0_143 = arith.constant 0 : index
    %506 = vector.load %arg3[%505, %c0_142, %c0_143] : memref<16x8x128xf32, #tpu.memory_space<vmem>>, vector<1x8x128xf32>
    %507 = vector.shape_cast %506 : vector<1x8x128xf32> to vector<8x128xf32>
    %508 = vector.shape_cast %504 : vector<8x128xf32> to vector<1x8x128xf32>
    tpu.vector_store %arg3[%505, %c0_142, %c0_143], %508 {strides = array<i32>} : memref<16x8x128xf32, #tpu.memory_space<vmem>>, vector<1x8x128xf32>,
    %c14_i32 = arith.constant 14 : i32
    %509 = arith.index_cast %c14_i32 : i32 to index
    %c0_144 = arith.constant 0 : index
    %c0_145 = arith.constant 0 : index
    %510 = vector.load %arg1[%509, %c0_144, %c0_145] : memref<16x8x512xf32, #tpu.memory_space<vmem>>, vector<1x8x512xf32>
    %511 = vector.shape_cast %510 : vector<1x8x512xf32> to vector<8x512xf32>
    %512 = arith.truncf %504 : vector<8x128xf32> to vector<8x128xbf16>
    %c0_146 = arith.constant 0 : index
    %c0_147 = arith.constant 0 : index
    %513 = vector.load %arg4[%c0_146, %c0_147] : memref<128x512xbf16, #tpu.memory_space<vmem>>, vector<128x512xbf16>
    %cst_148 = arith.constant dense<0.000000e+00> : vector<8x512xf32>
    %514 = tpu.matmul %512, %513, %cst_148 {dimension_numbers = #tpu.dot_dimension_numbers<[1], [0], [0], [1], [0, 0, 1, 1], [], []>} : vector<8x128xbf16>, vector<128x512xbf16>, vector<8x512xf32> -> vector<8x512xf32>
    %515 = arith.addf %511, %514 : vector<8x512xf32>
    %516 = vector.extract_strided_slice %515 {offsets = [0, 0], sizes = [8, 128], strides = [1, 1]} : vector<8x512xf32> to vector<8x128xf32>
    %517 = arith.negf %516 : vector<8x128xf32>
    %518 = math.exp %517 : vector<8x128xf32>
    %cst_149 = arith.constant 1.000000e+00 : f32
    %519 = vector.broadcast %cst_149 : f32 to vector<8x128xf32>
    %520 = arith.addf %519, %518 : vector<8x128xf32>
    %521 = arith.divf %519, %520 : vector<8x128xf32>
    %522 = vector.extract_strided_slice %515 {offsets = [0, 128], sizes = [8, 128], strides = [1, 1]} : vector<8x512xf32> to vector<8x128xf32>
    %523 = arith.negf %522 : vector<8x128xf32>
    %524 = math.exp %523 : vector<8x128xf32>
    %cst_150 = arith.constant 1.000000e+00 : f32
    %525 = vector.broadcast %cst_150 : f32 to vector<8x128xf32>
    %526 = arith.addf %525, %524 : vector<8x128xf32>
    %527 = arith.divf %525, %526 : vector<8x128xf32>
    %528 = vector.extract_strided_slice %515 {offsets = [0, 256], sizes = [8, 128], strides = [1, 1]} : vector<8x512xf32> to vector<8x128xf32>
    %529 = math.tanh %528 : vector<8x128xf32>
    %530 = vector.extract_strided_slice %515 {offsets = [0, 384], sizes = [8, 128], strides = [1, 1]} : vector<8x512xf32> to vector<8x128xf32>
    %531 = arith.negf %530 : vector<8x128xf32>
    %532 = math.exp %531 : vector<8x128xf32>
    %cst_151 = arith.constant 1.000000e+00 : f32
    %533 = vector.broadcast %cst_151 : f32 to vector<8x128xf32>
    %534 = arith.addf %533, %532 : vector<8x128xf32>
    %535 = arith.divf %533, %534 : vector<8x128xf32>
    %536 = arith.mulf %527, %502 : vector<8x128xf32>
    %537 = arith.mulf %521, %529 : vector<8x128xf32>
    %538 = arith.addf %536, %537 : vector<8x128xf32>
    %539 = math.tanh %538 : vector<8x128xf32>
    %540 = arith.mulf %535, %539 : vector<8x128xf32>
    %541 = arith.index_cast %c14_i32 : i32 to index
    %c0_152 = arith.constant 0 : index
    %c0_153 = arith.constant 0 : index
    %542 = vector.load %arg3[%541, %c0_152, %c0_153] : memref<16x8x128xf32, #tpu.memory_space<vmem>>, vector<1x8x128xf32>
    %543 = vector.shape_cast %542 : vector<1x8x128xf32> to vector<8x128xf32>
    %544 = vector.shape_cast %540 : vector<8x128xf32> to vector<1x8x128xf32>
    tpu.vector_store %arg3[%541, %c0_152, %c0_153], %544 {strides = array<i32>} : memref<16x8x128xf32, #tpu.memory_space<vmem>>, vector<1x8x128xf32>,
    %c15_i32 = arith.constant 15 : i32
    %545 = arith.index_cast %c15_i32 : i32 to index
    %c0_154 = arith.constant 0 : index
    %c0_155 = arith.constant 0 : index
    %546 = vector.load %arg1[%545, %c0_154, %c0_155] : memref<16x8x512xf32, #tpu.memory_space<vmem>>, vector<1x8x512xf32>
    %547 = vector.shape_cast %546 : vector<1x8x512xf32> to vector<8x512xf32>
    %548 = arith.truncf %540 : vector<8x128xf32> to vector<8x128xbf16>
    %c0_156 = arith.constant 0 : index
    %c0_157 = arith.constant 0 : index
    %549 = vector.load %arg4[%c0_156, %c0_157] : memref<128x512xbf16, #tpu.memory_space<vmem>>, vector<128x512xbf16>
    %cst_158 = arith.constant dense<0.000000e+00> : vector<8x512xf32>
    %550 = tpu.matmul %548, %549, %cst_158 {dimension_numbers = #tpu.dot_dimension_numbers<[1], [0], [0], [1], [0, 0, 1, 1], [], []>} : vector<8x128xbf16>, vector<128x512xbf16>, vector<8x512xf32> -> vector<8x512xf32>
    %551 = arith.addf %547, %550 : vector<8x512xf32>
    %552 = vector.extract_strided_slice %551 {offsets = [0, 0], sizes = [8, 128], strides = [1, 1]} : vector<8x512xf32> to vector<8x128xf32>
    %553 = arith.negf %552 : vector<8x128xf32>
    %554 = math.exp %553 : vector<8x128xf32>
    %cst_159 = arith.constant 1.000000e+00 : f32
    %555 = vector.broadcast %cst_159 : f32 to vector<8x128xf32>
    %556 = arith.addf %555, %554 : vector<8x128xf32>
    %557 = arith.divf %555, %556 : vector<8x128xf32>
    %558 = vector.extract_strided_slice %551 {offsets = [0, 128], sizes = [8, 128], strides = [1, 1]} : vector<8x512xf32> to vector<8x128xf32>
    %559 = arith.negf %558 : vector<8x128xf32>
    %560 = math.exp %559 : vector<8x128xf32>
    %cst_160 = arith.constant 1.000000e+00 : f32
    %561 = vector.broadcast %cst_160 : f32 to vector<8x128xf32>
    %562 = arith.addf %561, %560 : vector<8x128xf32>
    %563 = arith.divf %561, %562 : vector<8x128xf32>
    %564 = vector.extract_strided_slice %551 {offsets = [0, 256], sizes = [8, 128], strides = [1, 1]} : vector<8x512xf32> to vector<8x128xf32>
    %565 = math.tanh %564 : vector<8x128xf32>
    %566 = vector.extract_strided_slice %551 {offsets = [0, 384], sizes = [8, 128], strides = [1, 1]} : vector<8x512xf32> to vector<8x128xf32>
    %567 = arith.negf %566 : vector<8x128xf32>
    %568 = math.exp %567 : vector<8x128xf32>
    %cst_161 = arith.constant 1.000000e+00 : f32
    %569 = vector.broadcast %cst_161 : f32 to vector<8x128xf32>
    %570 = arith.addf %569, %568 : vector<8x128xf32>
    %571 = arith.divf %569, %570 : vector<8x128xf32>
    %572 = arith.mulf %563, %538 : vector<8x128xf32>
    %573 = arith.mulf %557, %565 : vector<8x128xf32>
    %574 = arith.addf %572, %573 : vector<8x128xf32>
    %575 = math.tanh %574 : vector<8x128xf32>
    %576 = arith.mulf %571, %575 : vector<8x128xf32>
    %577 = arith.index_cast %c15_i32 : i32 to index
    %c0_162 = arith.constant 0 : index
    %c0_163 = arith.constant 0 : index
    %578 = vector.load %arg3[%577, %c0_162, %c0_163] : memref<16x8x128xf32, #tpu.memory_space<vmem>>, vector<1x8x128xf32>
    %579 = vector.shape_cast %578 : vector<1x8x128xf32> to vector<8x128xf32>
    %580 = vector.shape_cast %576 : vector<8x128xf32> to vector<1x8x128xf32>
    tpu.vector_store %arg3[%577, %c0_162, %c0_163], %580 {strides = array<i32>} : memref<16x8x128xf32, #tpu.memory_space<vmem>>, vector<1x8x128xf32>,
    %c16_i32 = arith.constant 16 : i32
    %c0_164 = arith.constant 0 : index
    %c0_165 = arith.constant 0 : index
    %581 = vector.load %arg5[%c0_164, %c0_165] : memref<8x128xf32, #tpu.memory_space<vmem>>, vector<8x128xf32>
    tpu.vector_store %arg5[%c0_164, %c0_165], %576 {strides = array<i32>} : memref<8x128xf32, #tpu.memory_space<vmem>>, vector<8x128xf32>,
    %c0_166 = arith.constant 0 : index
    %c0_167 = arith.constant 0 : index
    %582 = vector.load %arg6[%c0_166, %c0_167] : memref<8x128xf32, #tpu.memory_space<vmem>>, vector<8x128xf32>
    tpu.vector_store %arg6[%c0_166, %c0_167], %574 {strides = array<i32>} : memref<8x128xf32, #tpu.memory_space<vmem>>, vector<8x128xf32>,
    return
  }
  func.func @transform_0(%arg0: i32) -> (i32, i32, i32) {
    %c0_i32 = arith.constant 0 : i32
    %c0_i32_0 = arith.constant 0 : i32
    %c0_i32_1 = arith.constant 0 : i32
    return %arg0, %c0_i32, %c0_i32_0 : i32, i32, i32
  }
  func.func @transform_2(%arg0: i32) -> (i32, i32, i32) {
    %c0_i32 = arith.constant 0 : i32
    %c0_i32_0 = arith.constant 0 : i32
    %c0_i32_1 = arith.constant 0 : i32
    return %arg0, %c0_i32, %c0_i32_0 : i32, i32, i32
  }
}

module attributes {stable_mosaic.version = 11 : i64} {
  func.func @matmul_bias_kernel(%arg0: i32, %arg1: i32, %arg2: memref<256x128xbf16, #tpu.memory_space<vmem>>, %arg3: memref<128x128xbf16, #tpu.memory_space<vmem>>, %arg4: memref<1x128xf32, #tpu.memory_space<vmem>>, %arg5: memref<256x128xf32, #tpu.memory_space<vmem>>) attributes {dimension_semantics = [#tpu.dimension_semantics<parallel>, #tpu.dimension_semantics<parallel>], iteration_bounds = array<i64: 1, 1>, scalar_prefetch = 0 : i64, scratch_operands = 0 : i64, tpu.core_type = #tpu.core_type<tc>, window_params = [{transform_indices = @transform_0, window_bounds = array<i64: 256, 128>}, {transform_indices = @transform_1, window_bounds = array<i64: 128, 128>}, {transform_indices = @transform_2, window_bounds = array<i64: 1, 128>}, {transform_indices = @transform_3, window_bounds = array<i64: 256, 128>}]} {
    %c0 = arith.constant 0 : index
    %c0_0 = arith.constant 0 : index
    %0 = vector.load %arg2[%c0, %c0_0] : memref<256x128xbf16, #tpu.memory_space<vmem>>, vector<256x128xbf16>
    %c0_1 = arith.constant 0 : index
    %c0_2 = arith.constant 0 : index
    %1 = vector.load %arg3[%c0_1, %c0_2] : memref<128x128xbf16, #tpu.memory_space<vmem>>, vector<128x128xbf16>
    %cst = arith.constant dense<0.000000e+00> : vector<256x128xf32>
    %2 = tpu.matmul %0, %1, %cst {dimension_numbers = #tpu.dot_dimension_numbers<[1], [0], [0], [1], [0, 0, 1, 1], [], []>} : vector<256x128xbf16>, vector<128x128xbf16>, vector<256x128xf32> -> vector<256x128xf32>
    %c0_3 = arith.constant 0 : index
    %c0_4 = arith.constant 0 : index
    %3 = vector.load %arg4[%c0_3, %c0_4] : memref<1x128xf32, #tpu.memory_space<vmem>>, vector<1x128xf32>
    %4 = vector.broadcast %3 : vector<1x128xf32> to vector<256x128xf32>
    %5 = arith.addf %2, %4 : vector<256x128xf32>
    %c0_5 = arith.constant 0 : index
    %c0_6 = arith.constant 0 : index
    %6 = vector.load %arg5[%c0_5, %c0_6] : memref<256x128xf32, #tpu.memory_space<vmem>>, vector<256x128xf32>
    tpu.vector_store %arg5[%c0_5, %c0_6], %5 {strides = array<i32>} : memref<256x128xf32, #tpu.memory_space<vmem>>, vector<256x128xf32>,
    return
  }
  func.func @transform_0(%arg0: i32, %arg1: i32) -> (i32, i32) {
    %c0_i32 = arith.constant 0 : i32
    %c0_i32_0 = arith.constant 0 : i32
    return %arg0, %c0_i32 : i32, i32
  }
  func.func @transform_1(%arg0: i32, %arg1: i32) -> (i32, i32) {
    %c0_i32 = arith.constant 0 : i32
    %c0_i32_0 = arith.constant 0 : i32
    return %c0_i32, %arg1 : i32, i32
  }
  func.func @transform_2(%arg0: i32, %arg1: i32) -> (i32, i32) {
    %c0_i32 = arith.constant 0 : i32
    %c0_i32_0 = arith.constant 0 : i32
    return %c0_i32, %arg1 : i32, i32
  }
  func.func @transform_3(%arg0: i32, %arg1: i32) -> (i32, i32) {
    %c0_i32 = arith.constant 0 : i32
    return %arg0, %arg1 : i32, i32
  }
}

</mosaic_0001>

<llo_original>
// kernel: decoder_rnn_forward.5
$region0: #{decoder_rnn_forward.5}
  #allocation0 [shape = 'u32[]', space=smem, size = 0x4, offset = 0x4, fixed_abs, tag = 'smem constant byte address 0x4 - core index']
  #allocation1 [shape = 'u32[144,128]{1,0:T(1,128)}', space=vmem, size = 0x12000, scoped, tag = 'internal scratch']
  %s0 = inlined_call_operand.hbm [shape: bf16[256,128], index: 0, kind: input, shape index: {}]
  %s1 = inlined_call_operand.hbm [shape: bf16[128,128], index: 1, kind: input, shape index: {}]
  %s2 = inlined_call_operand.hbm [shape: f32[1,128], index: 2, kind: input, shape index: {}]
  %s3 = inlined_call_operand.hbm [shape: f32[256,128], index: 3, kind: output, shape index: {}]
  %s4 = sld [smem:[#allocation0]]
  $region34: #{decoder_rnn_forward.5} parent=0
    _
  %s6 = ssub.s32 1, %s4
  %s7 = scalar_select 0, %s6, %s4
  $region1: #{decoder_rnn_forward.5} parent=0
    #allocation2 [shape = 'u8[65536]{0}', space=vmem, size = 0x10000, scoped, tag = 'input window, operand 0, single buffered']
    #allocation3 [shape = 's32[1]{0}', space=sflag, size = 0x4, scoped, tag = 'scoped memory for decoder_rnn_forward.5']
    #allocation4 [shape = 's32[1]{0}', space=sflag, size = 0x4, scoped, tag = 'scoped memory for decoder_rnn_forward.5']
    #allocation5 [shape = 'u8[32768]{0}', space=vmem, size = 0x8000, scoped, tag = 'input window, operand 1, single buffered']
    #allocation6 [shape = 's32[1]{0}', space=sflag, size = 0x4, scoped, tag = 'scoped memory for decoder_rnn_forward.5']
    #allocation7 [shape = 'u8[512]{0}', space=vmem, size = 0x400, scoped, tag = 'input window, operand 2, single buffered']
    #allocation8 [shape = 'u8[131072]{0}', space=vmem, size = 0x20000, scoped, tag = 'output window, operand 0, single buffered']
    %8 = vsyncpa [#allocation3], 0
    %9 = vsyncpa [#allocation6], 0
    %10 = vsyncpa [#allocation4], 0
    // Predicated region
    $region2: #{decoder_rnn_forward.5} parent=1 // pred_check
      _
    $region3: #{decoder_rnn_forward.5} parent=1 // pred_check_branch
      %12 = sbr.rel (0) target = $region5
    $region4: #{decoder_rnn_forward.5} parent=1 // pred_region
      %s14 = ssub.s32 2048, 2048
      %15 = vsyncadd [#allocation3], %s14
      %s16 = sshll.u32 [#allocation2], 4
      %s17 = int_to_ptr.vmem [resolvable:$true] %s16
      %22 = dma.hbm_to_vmem [thread:$0]  %s0, 2048, %s17, [#allocation3], 64, 64, 4
    $region5: #{decoder_rnn_forward.5} parent=1 // pred_fallthru
      _
    // Predicated region
    $region6: #{decoder_rnn_forward.5} parent=1 // pred_check
      _
    $region7: #{decoder_rnn_forward.5} parent=1 // pred_check_branch
      %24 = sbr.rel (0) target = $region9
    $region8: #{decoder_rnn_forward.5} parent=1 // pred_region
      %s26 = ssub.s32 1024, 1024
      %27 = vsyncadd [#allocation6], %s26
      %s28 = sshll.u32 [#allocation5], 4
      %s29 = int_to_ptr.vmem [resolvable:$true] %s28
      %34 = dma.hbm_to_vmem [thread:$0]  %s1, 1024, %s29, [#allocation6], 64, 64, 4
    $region9: #{decoder_rnn_forward.5} parent=1 // pred_fallthru
      _
    // Predicated region
    $region10: #{decoder_rnn_forward.5} parent=1 // pred_check
      _
    $region11: #{decoder_rnn_forward.5} parent=1 // pred_check_branch
      %36 = sbr.rel (0) target = $region13
    $region12: #{decoder_rnn_forward.5} parent=1 // pred_region
      %s38 = ssub.s32 16, 16
      %39 = vsyncadd [#allocation6], %s38
      %s41 = sshll.u32 [#allocation7], 4
      %s42 = int_to_ptr.vmem [resolvable:$true] %s41
      %44 = dma.hbm_to_vmem [thread:$0]  %s2, 16, %s42, [#allocation6]
    $region13: #{decoder_rnn_forward.5} parent=1 // pred_fallthru
      _
    // Predicated region
    $region14: #{decoder_rnn_forward.5} parent=1 // pred_check
      _
    $region15: #{decoder_rnn_forward.5} parent=1 // pred_check_branch
      %46 = sbr.rel (0) target = $region17
    $region16: #{decoder_rnn_forward.5} parent=1 // pred_region
      %47 = dma.done [#allocation3], 2048
    $region17: #{decoder_rnn_forward.5} parent=1 // pred_fallthru
      _
    // Predicated region
    $region18: #{decoder_rnn_forward.5} parent=1 // pred_check
      _
    $region19: #{decoder_rnn_forward.5} parent=1 // pred_check_branch
      %49 = sbr.rel (0) target = $region21
    $region20: #{decoder_rnn_forward.5} parent=1 // pred_region
      %50 = dma.done [#allocation6], 1024
    $region21: #{decoder_rnn_forward.5} parent=1 // pred_fallthru
      _
    // Predicated region
    $region22: #{decoder_rnn_forward.5} parent=1 // pred_check
      _
    $region23: #{decoder_rnn_forward.5} parent=1 // pred_check_branch
      %52 = sbr.rel (0) target = $region25
    $region24: #{decoder_rnn_forward.5} parent=1 // pred_region
      %53 = dma.done [#allocation6], 16
    $region25: #{decoder_rnn_forward.5} parent=1 // pred_fallthru
      _
    %v55 = vld [vmem:[#allocation2] sm:$0xf]
    %v56 = vld [vmem:[#allocation2 + $0x4] sm:$0xf]
    %v57 = vld [vmem:[#allocation2 + $0x8] sm:$0xf]
    %v58 = vld [vmem:[#allocation2 + $0xc] sm:$0xf]
    %v59 = vld [vmem:[#allocation2 + $0x10] sm:$0xf]
    %v60 = vld [vmem:[#allocation2 + $0x14] sm:$0xf]
    %v61 = vld [vmem:[#allocation2 + $0x18] sm:$0xf]
    %v62 = vld [vmem:[#allocation2 + $0x1c] sm:$0xf]
    %v63 = vld [vmem:[#allocation2 + $0x20] sm:$0xf]
    %v64 = vld [vmem:[#allocation2 + $0x24] sm:$0xf]
    %v65 = vld [vmem:[#allocation2 + $0x28] sm:$0xf]
    %v66 = vld [vmem:[#allocation2 + $0x2c] sm:$0xf]
    %v67 = vld [vmem:[#allocation2 + $0x30] sm:$0xf]
    %v68 = vld [vmem:[#allocation2 + $0x34] sm:$0xf]
    %v69 = vld [vmem:[#allocation2 + $0x38] sm:$0xf]
    %v70 = vld [vmem:[#allocation2 + $0x3c] sm:$0xf]
    %v71 = vld [vmem:[#allocation2 + $0x40] sm:$0xf]
    %v72 = vld [vmem:[#allocation2 + $0x44] sm:$0xf]
    %v73 = vld [vmem:[#allocation2 + $0x48] sm:$0xf]
    %v74 = vld [vmem:[#allocation2 + $0x4c] sm:$0xf]
    %v75 = vld [vmem:[#allocation2 + $0x50] sm:$0xf]
    %v76 = vld [vmem:[#allocation2 + $0x54] sm:$0xf]
    %v77 = vld [vmem:[#allocation2 + $0x58] sm:$0xf]
    %v78 = vld [vmem:[#allocation2 + $0x5c] sm:$0xf]
    %v79 = vld [vmem:[#allocation2 + $0x60] sm:$0xf]
    %v80 = vld [vmem:[#allocation2 + $0x64] sm:$0xf]
    %v81 = vld [vmem:[#allocation2 + $0x68] sm:$0xf]
    %v82 = vld [vmem:[#allocation2 + $0x6c] sm:$0xf]
    %v83 = vld [vmem:[#allocation2 + $0x70] sm:$0xf]
    %v84 = vld [vmem:[#allocation2 + $0x74] sm:$0xf]
    %v85 = vld [vmem:[#allocation2 + $0x78] sm:$0xf]
    %v86 = vld [vmem:[#allocation2 + $0x7c] sm:$0xf]
    %v87 = vld [vmem:[#allocation5] sm:$0xf]
    %v88 = vld [vmem:[#allocation5 + $0x4] sm:$0xf]
    %v89 = vld [vmem:[#allocation5 + $0x8] sm:$0xf]
    %v90 = vld [vmem:[#allocation5 + $0xc] sm:$0xf]
    %v91 = vld [vmem:[#allocation5 + $0x10] sm:$0xf]
    %v92 = vld [vmem:[#allocation5 + $0x14] sm:$0xf]
    %v93 = vld [vmem:[#allocation5 + $0x18] sm:$0xf]
    %v94 = vld [vmem:[#allocation5 + $0x1c] sm:$0xf]
    %v95 = vld [vmem:[#allocation5 + $0x20] sm:$0xf]
    %v96 = vld [vmem:[#allocation5 + $0x24] sm:$0xf]
    %v97 = vld [vmem:[#allocation5 + $0x28] sm:$0xf]
    %v98 = vld [vmem:[#allocation5 + $0x2c] sm:$0xf]
    %v99 = vld [vmem:[#allocation5 + $0x30] sm:$0xf]
    %v100 = vld [vmem:[#allocation5 + $0x34] sm:$0xf]
    %v101 = vld [vmem:[#allocation5 + $0x38] sm:$0xf]
    %v102 = vld [vmem:[#allocation5 + $0x3c] sm:$0xf]
    %v103 = vld [vmem:[#allocation7] sm:$0x1]
    %v105 = vlaneseq
    %v106 = vshrl.u32 %v105, 7
    %v107 = vsub.s32 0, %v106
    %v108 = vrot.slane %v103, %v107
    %v142 = vunpack.c.l.b16 %v55
    %v143 = vunpack.c.l.b16 %v56
    %v144 = vunpack.c.l.b16 %v57
    %v145 = vunpack.c.l.b16 %v58
    %v146 = vunpack.c.l.b16 %v59
    %v147 = vunpack.c.l.b16 %v60
    %v148 = vunpack.c.l.b16 %v61
    %v149 = vunpack.c.l.b16 %v62
    %v150 = vunpack.c.l.b16 %v63
    %v151 = vunpack.c.l.b16 %v64
    %v152 = vunpack.c.l.b16 %v65
    %v153 = vunpack.c.l.b16 %v66
    %v154 = vunpack.c.l.b16 %v67
    %v155 = vunpack.c.l.b16 %v68
    %v156 = vunpack.c.l.b16 %v69
    %v157 = vunpack.c.l.b16 %v70
    %v158 = vunpack.c.l.b16 %v71
    %v159 = vunpack.c.l.b16 %v72
    %v160 = vunpack.c.l.b16 %v73
    %v161 = vunpack.c.l.b16 %v74
    %v162 = vunpack.c.l.b16 %v75
    %v163 = vunpack.c.l.b16 %v76
    %v164 = vunpack.c.l.b16 %v77
    %v165 = vunpack.c.l.b16 %v78
    %v166 = vunpack.c.l.b16 %v79
    %v167 = vunpack.c.l.b16 %v80
    %v168 = vunpack.c.l.b16 %v81
    %v169 = vunpack.c.l.b16 %v82
    %v170 = vunpack.c.l.b16 %v83
    %v171 = vunpack.c.l.b16 %v84
    %v172 = vunpack.c.l.b16 %v85
    %v173 = vunpack.c.l.b16 %v86
    %v174 = vpack.c.b16 %v143, %v142
    %v175 = vpack.c.b16 %v145, %v144
    %v176 = vpack.c.b16 %v147, %v146
    %v177 = vpack.c.b16 %v149, %v148
    %v178 = vpack.c.b16 %v151, %v150
    %v179 = vpack.c.b16 %v153, %v152
    %v180 = vpack.c.b16 %v155, %v154
    %v181 = vpack.c.b16 %v157, %v156
    %v182 = vpack.c.b16 %v159, %v158
    %v183 = vpack.c.b16 %v161, %v160
    %v184 = vpack.c.b16 %v163, %v162
    %v185 = vpack.c.b16 %v165, %v164
    %v186 = vpack.c.b16 %v167, %v166
    %v187 = vpack.c.b16 %v169, %v168
    %v188 = vpack.c.b16 %v171, %v170
    %v189 = vpack.c.b16 %v173, %v172
    %v222 = vunpack.c.l.b16 %v87
    %v223 = vunpack.c.l.b16 %v88
    %v224 = vunpack.c.l.b16 %v89
    %v225 = vunpack.c.l.b16 %v90
    %v226 = vunpack.c.l.b16 %v91
    %v227 = vunpack.c.l.b16 %v92
    %v228 = vunpack.c.l.b16 %v93
    %v229 = vunpack.c.l.b16 %v94
    %v230 = vunpack.c.l.b16 %v95
    %v231 = vunpack.c.l.b16 %v96
    %v232 = vunpack.c.l.b16 %v97
    %v233 = vunpack.c.l.b16 %v98
    %v234 = vunpack.c.l.b16 %v99
    %v235 = vunpack.c.l.b16 %v100
    %v236 = vunpack.c.l.b16 %v101
    %v237 = vunpack.c.l.b16 %v102
    %v238 = vpack.c.b16 %v223, %v222
    %v239 = vpack.c.b16 %v225, %v224
    %v240 = vpack.c.b16 %v227, %v226
    %v241 = vpack.c.b16 %v229, %v228
    %v242 = vpack.c.b16 %v231, %v230
    %v243 = vpack.c.b16 %v233, %v232
    %v244 = vpack.c.b16 %v235, %v234
    %v245 = vpack.c.b16 %v237, %v236
    %254 = vmatprep.subr.bf16.mxu0 0
    %255 = vmatpush1.bf16.msra.mxu0 %v238
    %256 = vmatprep.subr.bf16.mxu0 0
    %257 = vmatpush1.bf16.msra.mxu0 %v239
    %258 = vmatprep.subr.bf16.mxu0 0
    %259 = vmatpush1.bf16.msra.mxu0 %v240
    %260 = vmatprep.subr.bf16.mxu0 0
    %261 = vmatpush1.bf16.msra.mxu0 %v241
    %262 = vmatprep.subr.bf16.mxu0 0
    %263 = vmatpush1.bf16.msra.mxu0 %v242
    %264 = vmatprep.subr.bf16.mxu0 0
    %265 = vmatpush1.bf16.msra.mxu0 %v243
    %266 = vmatprep.subr.bf16.mxu0 0
    %267 = vmatpush1.bf16.msra.mxu0 %v244
    %268 = vmatprep.subr.bf16.mxu0 0
    %269 = vmatpush1.bf16.msra.mxu0 %v245
    %270 = vmatprep.subr.bf16.mxu0 0
    %271 = vmatpush1.bf16.msra.mxu0 0
    %272 = vmatprep.subr.bf16.mxu0 0
    %273 = vmatpush1.bf16.msra.mxu0 0
    %274 = vmatprep.subr.bf16.mxu0 0
    %275 = vmatpush1.bf16.msra.mxu0 0
    %276 = vmatprep.subr.bf16.mxu0 0
    %277 = vmatpush1.bf16.msra.mxu0 0
    %278 = vmatprep.subr.bf16.mxu0 0
    %279 = vmatpush1.bf16.msra.mxu0 0
    %280 = vmatprep.subr.bf16.mxu0 0
    %281 = vmatpush1.bf16.msra.mxu0 0
    %282 = vmatprep.subr.bf16.mxu0 0
    %283 = vmatpush1.bf16.msra.mxu0 0
    %284 = vmatprep.subr.bf16.mxu0 0
    %285 = vmatpush1.bf16.msra.mxu0 0
    %286 = vmatprep.mubr.bf16.mxu0 0
    %287 = vmatmul.mubr.bf16.gmra.mrb[0].mxu0 %v174
    %v288 = vpop.f32.mrb[0].mxu0
    %v289 = vadd.f32 %v108, %v288
    %v290 = vpop.f32.mrb[0].mxu0
    %v291 = vpop.f32.mrb[0].mxu0
    %v292 = vadd.f32 %v108, %v291
    %v293 = vpop.f32.mrb[0].mxu0
    %294 = vmatprep.mubr.bf16.mxu0 0
    %295 = vmatmul.mubr.bf16.gmra.mrb[0].mxu0 %v175
    %v296 = vpop.f32.mrb[0].mxu0
    %v297 = vadd.f32 %v108, %v296
    %v298 = vpop.f32.mrb[0].mxu0
    %v299 = vpop.f32.mrb[0].mxu0
    %v300 = vadd.f32 %v108, %v299
    %v301 = vpop.f32.mrb[0].mxu0
    %302 = vmatprep.mubr.bf16.mxu0 0
    %303 = vmatmul.mubr.bf16.gmra.mrb[0].mxu0 %v176
    %v304 = vpop.f32.mrb[0].mxu0
    %v305 = vadd.f32 %v108, %v304
    %v306 = vpop.f32.mrb[0].mxu0
    %v307 = vpop.f32.mrb[0].mxu0
    %v308 = vadd.f32 %v108, %v307
    %v309 = vpop.f32.mrb[0].mxu0
    %310 = vmatprep.mubr.bf16.mxu0 0
    %311 = vmatmul.mubr.bf16.gmra.mrb[0].mxu0 %v177
    %v312 = vpop.f32.mrb[0].mxu0
    %v313 = vadd.f32 %v108, %v312
    %v314 = vpop.f32.mrb[0].mxu0
    %v315 = vpop.f32.mrb[0].mxu0
    %v316 = vadd.f32 %v108, %v315
    %v317 = vpop.f32.mrb[0].mxu0
    %318 = vmatprep.mubr.bf16.mxu0 0
    %319 = vmatmul.mubr.bf16.gmra.mrb[0].mxu0 %v178
    %v320 = vpop.f32.mrb[0].mxu0
    %v321 = vadd.f32 %v108, %v320
    %v322 = vpop.f32.mrb[0].mxu0
    %v323 = vpop.f32.mrb[0].mxu0
    %v324 = vadd.f32 %v108, %v323
    %v325 = vpop.f32.mrb[0].mxu0
    %326 = vmatprep.mubr.bf16.mxu0 0
    %327 = vmatmul.mubr.bf16.gmra.mrb[0].mxu0 %v179
    %v328 = vpop.f32.mrb[0].mxu0
    %v329 = vadd.f32 %v108, %v328
    %v330 = vpop.f32.mrb[0].mxu0
    %v331 = vpop.f32.mrb[0].mxu0
    %v332 = vadd.f32 %v108, %v331
    %v333 = vpop.f32.mrb[0].mxu0
    %334 = vmatprep.mubr.bf16.mxu0 0
    %335 = vmatmul.mubr.bf16.gmra.mrb[0].mxu0 %v180
    %v336 = vpop.f32.mrb[0].mxu0
    %v337 = vadd.f32 %v108, %v336
    %v338 = vpop.f32.mrb[0].mxu0
    %v339 = vpop.f32.mrb[0].mxu0
    %v340 = vadd.f32 %v108, %v339
    %v341 = vpop.f32.mrb[0].mxu0
    %342 = vmatprep.mubr.bf16.mxu0 0
    %343 = vmatmul.mubr.bf16.gmra.mrb[0].mxu0 %v181
    %v344 = vpop.f32.mrb[0].mxu0
    %v345 = vadd.f32 %v108, %v344
    %v346 = vpop.f32.mrb[0].mxu0
    %v347 = vpop.f32.mrb[0].mxu0
    %v348 = vadd.f32 %v108, %v347
    %v349 = vpop.f32.mrb[0].mxu0
    %350 = vmatprep.mubr.bf16.mxu0 0
    %351 = vmatmul.mubr.bf16.gmra.mrb[0].mxu0 %v182
    %v352 = vpop.f32.mrb[0].mxu0
    %v353 = vadd.f32 %v108, %v352
    %v354 = vpop.f32.mrb[0].mxu0
    %v355 = vpop.f32.mrb[0].mxu0
    %v356 = vadd.f32 %v108, %v355
    %v357 = vpop.f32.mrb[0].mxu0
    %358 = vmatprep.mubr.bf16.mxu0 0
    %359 = vmatmul.mubr.bf16.gmra.mrb[0].mxu0 %v183
    %v360 = vpop.f32.mrb[0].mxu0
    %v361 = vadd.f32 %v108, %v360
    %v362 = vpop.f32.mrb[0].mxu0
    %v363 = vpop.f32.mrb[0].mxu0
    %v364 = vadd.f32 %v108, %v363
    %v365 = vpop.f32.mrb[0].mxu0
    %366 = vmatprep.mubr.bf16.mxu0 0
    %367 = vmatmul.mubr.bf16.gmra.mrb[0].mxu0 %v184
    %v368 = vpop.f32.mrb[0].mxu0
    %v369 = vadd.f32 %v108, %v368
    %v370 = vpop.f32.mrb[0].mxu0
    %v371 = vpop.f32.mrb[0].mxu0
    %v372 = vadd.f32 %v108, %v371
    %v373 = vpop.f32.mrb[0].mxu0
    %374 = vmatprep.mubr.bf16.mxu0 0
    %375 = vmatmul.mubr.bf16.gmra.mrb[0].mxu0 %v185
    %v376 = vpop.f32.mrb[0].mxu0
    %v377 = vadd.f32 %v108, %v376
    %v378 = vpop.f32.mrb[0].mxu0
    %v379 = vpop.f32.mrb[0].mxu0
    %v380 = vadd.f32 %v108, %v379
    %v381 = vpop.f32.mrb[0].mxu0
    %382 = vmatprep.mubr.bf16.mxu0 0
    %383 = vmatmul.mubr.bf16.gmra.mrb[0].mxu0 %v186
    %v384 = vpop.f32.mrb[0].mxu0
    %v385 = vadd.f32 %v108, %v384
    %v386 = vpop.f32.mrb[0].mxu0
    %v387 = vpop.f32.mrb[0].mxu0
    %v388 = vadd.f32 %v108, %v387
    %v389 = vpop.f32.mrb[0].mxu0
    %390 = vmatprep.mubr.bf16.mxu0 0
    %391 = vmatmul.mubr.bf16.gmra.mrb[0].mxu0 %v187
    %v392 = vpop.f32.mrb[0].mxu0
    %v393 = vadd.f32 %v108, %v392
    %v394 = vpop.f32.mrb[0].mxu0
    %v395 = vpop.f32.mrb[0].mxu0
    %v396 = vadd.f32 %v108, %v395
    %v397 = vpop.f32.mrb[0].mxu0
    %398 = vmatprep.mubr.bf16.mxu0 0
    %399 = vmatmul.mubr.bf16.gmra.mrb[0].mxu0 %v188
    %v400 = vpop.f32.mrb[0].mxu0
    %v401 = vadd.f32 %v108, %v400
    %v402 = vpop.f32.mrb[0].mxu0
    %v403 = vpop.f32.mrb[0].mxu0
    %v404 = vadd.f32 %v108, %v403
    %v405 = vpop.f32.mrb[0].mxu0
    %406 = vmatprep.mubr.bf16.mxu0 0
    %407 = vmatmul.mubr.bf16.gmra.mrb[0].mxu0 %v189
    %v408 = vpop.f32.mrb[0].mxu0
    %v409 = vadd.f32 %v108, %v408
    %v410 = vpop.f32.mrb[0].mxu0
    %v411 = vpop.f32.mrb[0].mxu0
    %v412 = vadd.f32 %v108, %v411
    %v413 = vpop.f32.mrb[0].mxu0
    %414 = vdwg.mxu0
    %415 = vst [vmem:[#allocation8] sm:$0xff] %v289
    %416 = vst [vmem:[#allocation8 + $0x8] sm:$0xff] %v292
    %417 = vst [vmem:[#allocation8 + $0x10] sm:$0xff] %v297
    %418 = vst [vmem:[#allocation8 + $0x18] sm:$0xff] %v300
    %419 = vst [vmem:[#allocation8 + $0x20] sm:$0xff] %v305
    %420 = vst [vmem:[#allocation8 + $0x28] sm:$0xff] %v308
    %421 = vst [vmem:[#allocation8 + $0x30] sm:$0xff] %v313
    %422 = vst [vmem:[#allocation8 + $0x38] sm:$0xff] %v316
    %423 = vst [vmem:[#allocation8 + $0x40] sm:$0xff] %v321
    %424 = vst [vmem:[#allocation8 + $0x48] sm:$0xff] %v324
    %425 = vst [vmem:[#allocation8 + $0x50] sm:$0xff] %v329
    %426 = vst [vmem:[#allocation8 + $0x58] sm:$0xff] %v332
    %427 = vst [vmem:[#allocation8 + $0x60] sm:$0xff] %v337
    %428 = vst [vmem:[#allocation8 + $0x68] sm:$0xff] %v340
    %429 = vst [vmem:[#allocation8 + $0x70] sm:$0xff] %v345
    %430 = vst [vmem:[#allocation8 + $0x78] sm:$0xff] %v348
    %431 = vst [vmem:[#allocation8 + $0x80] sm:$0xff] %v353
    %432 = vst [vmem:[#allocation8 + $0x88] sm:$0xff] %v356
    %433 = vst [vmem:[#allocation8 + $0x90] sm:$0xff] %v361
    %434 = vst [vmem:[#allocation8 + $0x98] sm:$0xff] %v364
    %435 = vst [vmem:[#allocation8 + $0xa0] sm:$0xff] %v369
    %436 = vst [vmem:[#allocation8 + $0xa8] sm:$0xff] %v372
    %437 = vst [vmem:[#allocation8 + $0xb0] sm:$0xff] %v377
    %438 = vst [vmem:[#allocation8 + $0xb8] sm:$0xff] %v380
    %439 = vst [vmem:[#allocation8 + $0xc0] sm:$0xff] %v385
    %440 = vst [vmem:[#allocation8 + $0xc8] sm:$0xff] %v388
    %441 = vst [vmem:[#allocation8 + $0xd0] sm:$0xff] %v393
    %442 = vst [vmem:[#allocation8 + $0xd8] sm:$0xff] %v396
    %443 = vst [vmem:[#allocation8 + $0xe0] sm:$0xff] %v401
    %444 = vst [vmem:[#allocation8 + $0xe8] sm:$0xff] %v404
    %445 = vst [vmem:[#allocation8 + $0xf0] sm:$0xff] %v409
    %446 = vst [vmem:[#allocation8 + $0xf8] sm:$0xff] %v412
    // Predicated region
    $region26: #{decoder_rnn_forward.5} parent=1 // pred_check
      _
    $region27: #{decoder_rnn_forward.5} parent=1 // pred_check_branch
      %448 = sbr.rel (0) target = $region29
    $region28: #{decoder_rnn_forward.5} parent=1 // pred_region
      %s450 = ssub.s32 4096, 4096
      %451 = vsyncadd [#allocation4], %s450
      %s452 = sshll.u32 [#allocation8], 4
      %s453 = int_to_ptr.vmem [resolvable:$true] %s452
      %458 = dma.vmem_to_hbm [thread:$0]  %s453, 4096, %s3, [#allocation4], 128, 128, 8
    $region29: #{decoder_rnn_forward.5} parent=1 // pred_fallthru
      _
    // Predicated region
    $region30: #{decoder_rnn_forward.5} parent=1 // pred_check
      _
    $region31: #{decoder_rnn_forward.5} parent=1 // pred_check_branch
      %460 = sbr.rel (0) target = $region33
    $region32: #{decoder_rnn_forward.5} parent=1 // pred_region
      %461 = dma.done [#allocation4], 4096
    $region33: #{decoder_rnn_forward.5} parent=1 // pred_fallthru
      _
    %462 = vsyncpa [#allocation3], 1
    %463 = vsyncpa [#allocation6], 1
    %464 = vsyncpa [#allocation4], 1

// kernel: decoder_rnn_forward.3
$region0: #{decoder_rnn_forward.3}
  #allocation0 [shape = 'u32[]', space=smem, size = 0x4, offset = 0x4, fixed_abs, tag = 'smem constant byte address 0x4 - core index']
  #allocation1 [shape = 'u32[144,128]{1,0:T(1,128)}', space=vmem, size = 0x12000, scoped, tag = 'internal scratch']
  %s0 = inlined_call_operand.hbm [shape: bf16[256,128], index: 0, kind: input, shape index: {}]
  %s1 = inlined_call_operand.hbm [shape: bf16[128,512], index: 1, kind: input, shape index: {}]
  %s2 = inlined_call_operand.hbm [shape: f32[1,512], index: 2, kind: input, shape index: {}]
  %s3 = inlined_call_operand.hbm [shape: f32[256,512], index: 3, kind: output, shape index: {}]
  %s4 = sld [smem:[#allocation0]]
  $region57: #{decoder_rnn_forward.3} parent=0
    _
  %s6 = ssub.s32 1, %s4
  %s7 = scalar_select 0, %s6, %s4
  $region1: #{decoder_rnn_forward.3} parent=0
    #allocation2 [shape = 'u8[65536]{0}', space=vmem, size = 0x10000, scoped, tag = 'input window, operand 0, single buffered']
    #allocation3 [shape = 's32[2]{0}', space=sflag, size = 0x8, scoped, tag = 'scoped memory for decoder_rnn_forward.3']
    #allocation4 [shape = 's32[2]{0}', space=sflag, size = 0x8, scoped, tag = 'scoped memory for decoder_rnn_forward.3']
    #allocation5 [shape = 'u8[131072]{0}', space=vmem, size = 0x20000, scoped, tag = 'input window, operand 1']
    #allocation6 [shape = 's32[2]{0}', space=sflag, size = 0x8, scoped, tag = 'scoped memory for decoder_rnn_forward.3']
    #allocation7 [shape = 'u8[2048]{0}', space=vmem, size = 0x800, scoped, tag = 'input window, operand 2']
    #allocation8 [shape = 'u8[524288]{0}', space=vmem, size = 0x80000, scoped, tag = 'output window, operand 0']
    %8 = vsyncpa [#allocation3], 0
    %9 = vsyncpa [#allocation6], 0
    %s10 = scalar_lea.sflag [#allocation6], 1
    %11 = vsyncpa %s10, 0
    %12 = vsyncpa [#allocation4], 0
    %s13 = scalar_lea.sflag [#allocation4], 1
    %14 = vsyncpa %s13, 0
    loop: start=0, step=1, limit=4
    $region2: #{decoder_rnn_forward.3} parent=1 // loop_pre_header
      _
    $region3: #{decoder_rnn_forward.3} parent=1 // loop_header
      %s16 = sphi 0, %s20
      %p17 = scmp.ge.s32.totalorder %s16, 4
      %s23 = sphi 0, %s35
      %s24 = sphi 0, %s31
      %s25 = sphi 0, %s23
      %s26 = sphi 0, %s24
      %s27 = sphi 0, %s25
      %s28 = sphi 0, %s26
      %s38 = sphi 0, %s40
      %s41 = sphi 0, %s38
      %s42 = sphi 0, %s41
      %s58 = sphi 0, %s42
      %s64 = sphi 0, %s66
      %s67 = sphi 0, %s64
      %s68 = sphi 0, %s67
      %s84 = sphi 0, %s68
      %s90 = sphi 0, %s92
      %s93 = sphi 0, %s90
      %s94 = sphi 0, %s93
      %s110 = sphi 0, %s94
      %s118 = sphi 0, %s120
      %s121 = sphi 0, %s118
      %s122 = sphi 0, %s121
      %s138 = sphi 0, %s122
    $region4: #{decoder_rnn_forward.3} parent=1 // loop_header_branch
      %19 = sbr.rel (%p17) target = $region8
    $region5: #{decoder_rnn_forward.3} parent=1 // loop_body
      %s21 = ssub.s32 %s16, 1
      %s22 = ssub.s32 %s16, 2
      %s29 = sadd.s32 1, %s24
      %p30 = scmp.ge.s32.totalorder %s29, 2
      %s31 = scalar_select %p30, 0, %s29
      %s32 = sadd.s32 1, %s23
      %s33 = scalar_select %p30, %s32, %s23
      %p34 = scmp.ge.s32.totalorder %s33, 1
      %s35 = scalar_select %p34, 0, %s33
      %s36 = ssub.s32 %s23, %s35
      %p37 = scmp.eq.s32.totalorder %s36, 0
      %s39 = sadd.s32 %s38, 1
      %s40 = scalar_select %p37, %s38, %s39
      %p43 = pneg %p37
      %p44 = scmp.eq.s32.totalorder %s16, 1
      %p45 = por %p43, %p44
      %p46 = scmp.ne.s32.totalorder %s38, %s41
      %p47 = scmp.eq.s32.totalorder %s16, 0
      %p48 = por %p46, %p47
      %p49 = scmp.ne.s32.totalorder %s38, %s41
      %p50 = scmp.eq.s32.totalorder %s21, 1
      %p51 = por %p49, %p50
      %p52 = scmp.ne.s32.totalorder %s41, %s42
      %p53 = scmp.eq.s32.totalorder %s21, 0
      %p54 = por %p52, %p53
      %p55 = scmp.ne.s32.totalorder %s41, %s42
      %p56 = scmp.eq.s32.totalorder %s22, 1
      %p57 = por %p55, %p56
      %p59 = scmp.ne.s32.totalorder %s42, %s58
      %p60 = scmp.eq.s32.totalorder %s22, 0
      %p61 = por %p59, %p60
      %s62 = ssub.s32 %s24, %s31
      %p63 = scmp.eq.s32.totalorder %s62, 0
      %s65 = sadd.s32 %s64, 1
      %s66 = scalar_select %p63, %s64, %s65
      %p69 = pneg %p63
      %p70 = scmp.eq.s32.totalorder %s16, 1
      %p71 = por %p69, %p70
      %p72 = scmp.ne.s32.totalorder %s64, %s67
      %p73 = scmp.eq.s32.totalorder %s16, 0
      %p74 = por %p72, %p73
      %p75 = scmp.ne.s32.totalorder %s64, %s67
      %p76 = scmp.eq.s32.totalorder %s21, 1
      %p77 = por %p75, %p76
      %p78 = scmp.ne.s32.totalorder %s67, %s68
      %p79 = scmp.eq.s32.totalorder %s21, 0
      %p80 = por %p78, %p79
      %p81 = scmp.ne.s32.totalorder %s67, %s68
      %p82 = scmp.eq.s32.totalorder %s22, 1
      %p83 = por %p81, %p82
      %p85 = scmp.ne.s32.totalorder %s68, %s84
      %p86 = scmp.eq.s32.totalorder %s22, 0
      %p87 = por %p85, %p86
      %s88 = ssub.s32 %s24, %s31
      %p89 = scmp.eq.s32.totalorder %s88, 0
      %s91 = sadd.s32 %s90, 1
      %s92 = scalar_select %p89, %s90, %s91
      %p95 = pneg %p89
      %p96 = scmp.eq.s32.totalorder %s16, 1
      %p97 = por %p95, %p96
      %p98 = scmp.ne.s32.totalorder %s90, %s93
      %p99 = scmp.eq.s32.totalorder %s16, 0
      %p100 = por %p98, %p99
      %p101 = scmp.ne.s32.totalorder %s90, %s93
      %p102 = scmp.eq.s32.totalorder %s21, 1
      %p103 = por %p101, %p102
      %p104 = scmp.ne.s32.totalorder %s93, %s94
      %p105 = scmp.eq.s32.totalorder %s21, 0
      %p106 = por %p104, %p105
      %p107 = scmp.ne.s32.totalorder %s93, %s94
      %p108 = scmp.eq.s32.totalorder %s22, 1
      %p109 = por %p107, %p108
      %p111 = scmp.ne.s32.totalorder %s94, %s110
      %p112 = scmp.eq.s32.totalorder %s22, 0
      %p113 = por %p111, %p112
      %s114 = ssub.s32 %s23, %s35
      %s115 = ssub.s32 %s24, %s31
      %s116 = sor.u32 %s114, %s115
      %p117 = scmp.eq.s32.totalorder %s116, 0
      %s119 = sadd.s32 %s118, 1
      %s120 = scalar_select %p117, %s118, %s119
      %p123 = pneg %p117
      %p124 = scmp.eq.s32.totalorder %s16, 1
      %p125 = por %p123, %p124
      %p126 = scmp.ne.s32.totalorder %s118, %s121
      %p127 = scmp.eq.s32.totalorder %s16, 0
      %p128 = por %p126, %p127
      %p129 = scmp.ne.s32.totalorder %s118, %s121
      %p130 = scmp.eq.s32.totalorder %s21, 1
      %p131 = por %p129, %p130
      %p132 = scmp.ne.s32.totalorder %s121, %s122
      %p133 = scmp.eq.s32.totalorder %s21, 0
      %p134 = por %p132, %p133
      %p135 = scmp.ne.s32.totalorder %s121, %s122
      %p136 = scmp.eq.s32.totalorder %s22, 1
      %p137 = por %p135, %p136
      %p139 = scmp.ne.s32.totalorder %s122, %s138
      %p140 = scmp.eq.s32.totalorder %s22, 0
      %p141 = por %p139, %p140
      %p142 = scmp.le.s32.totalorder 1, %s16
      %p143 = scmp.lt.s32.totalorder %s16, 3
      %p144 = pnand %p142, %p143
      %p145 = pneg %p144
      // Predicated region
      $region9: #{decoder_rnn_forward.3} parent=5 // pred_check
        _
      $region10: #{decoder_rnn_forward.3} parent=5 // pred_check_branch
        %147 = sbr.rel (%p144) target = $region12
      $region11: #{decoder_rnn_forward.3} parent=5 // pred_region
        %s148 = ssub.s32 %s16, 1
        // Predicated region
        $region13: #{decoder_rnn_forward.3} parent=11 // pred_check
          %p149 = pneg %p54
        $region14: #{decoder_rnn_forward.3} parent=11 // pred_check_branch
          %151 = sbr.rel (%p149) target = $region16
        $region15: #{decoder_rnn_forward.3} parent=11 // pred_region
          %s152 = smul.u32 32, %s25
          %s154 = ssub.s32 2048, 2048
          %155 = vsyncadd [#allocation3], %s154
          %s156 = smul.addr %s152, 64
          %s157 = scalar_lea.hbm %s0, %s156
          %s158 = sshll.u32 [#allocation2], 4
          %s159 = int_to_ptr.vmem [resolvable:$true] %s158
          %164 = dma.hbm_to_vmem [thread:$0]  %s157, 2048, %s159, [#allocation3], 64, 64, 4
        $region16: #{decoder_rnn_forward.3} parent=11 // pred_fallthru
          _
      $region12: #{decoder_rnn_forward.3} parent=5 // pred_fallthru
        _
      %p165 = scmp.lt.s32.totalorder %s16, 2
      // Predicated region
      $region17: #{decoder_rnn_forward.3} parent=5 // pred_check
        %p166 = pneg %p165
      $region18: #{decoder_rnn_forward.3} parent=5 // pred_check_branch
        %168 = sbr.rel (%p166) target = $region20
      $region19: #{decoder_rnn_forward.3} parent=5 // pred_region
        // Predicated region
        $region21: #{decoder_rnn_forward.3} parent=19 // pred_check
          %p169 = pneg %p74
        $region22: #{decoder_rnn_forward.3} parent=19 // pred_check_branch
          %171 = sbr.rel (%p169) target = $region24
        $region23: #{decoder_rnn_forward.3} parent=19 // pred_region
          %s172 = sand.u32 %s16, 1
          %s173 = scalar_lea.sflag [#allocation6], %s172
          %s174 = sand.u32 %s64, 1
          %s175 = smul.addr %s174, 128
          %s176 = scalar_lea.vmem [#allocation5], %s175
          %s177 = smul.u32 2, %s24
          %s179 = ssub.s32 2048, 2048
          %180 = vsyncadd %s173, %s179
          %s181 = smul.addr %s177, 64
          %s182 = scalar_lea.hbm %s1, %s181
          %s183 = sshll.u32 %s176, 4
          %s184 = int_to_ptr.vmem [resolvable:$true] %s183
          %189 = dma.hbm_to_vmem [thread:$0]  %s182, 2048, %s184, %s173, 256, 128, 8
        $region24: #{decoder_rnn_forward.3} parent=19 // pred_fallthru
          _
        // Predicated region
        $region25: #{decoder_rnn_forward.3} parent=19 // pred_check
          %p190 = pneg %p100
        $region26: #{decoder_rnn_forward.3} parent=19 // pred_check_branch
          %192 = sbr.rel (%p190) target = $region28
        $region27: #{decoder_rnn_forward.3} parent=19 // pred_region
          %s193 = sand.u32 %s16, 1
          %s194 = scalar_lea.sflag [#allocation6], %s193
          %s195 = sand.u32 %s90, 1
          %s196 = smul.addr %s195, 2
          %s197 = scalar_lea.vmem [#allocation7], %s196
          %s198 = smul.u32 2, %s24
          %s200 = ssub.s32 32, 32
          %201 = vsyncadd %s194, %s200
          %s202 = smul.addr %s198, 16
          %s203 = scalar_lea.hbm %s2, %s202
          %s205 = sshll.u32 %s197, 4
          %s206 = int_to_ptr.vmem [resolvable:$true] %s205
          %208 = dma.hbm_to_vmem [thread:$0]  %s203, 32, %s206, %s194
        $region28: #{decoder_rnn_forward.3} parent=19 // pred_fallthru
          _
      $region20: #{decoder_rnn_forward.3} parent=5 // pred_fallthru
        _
      %p209 = scmp.le.s32.totalorder 1, %s16
      %p210 = scmp.lt.s32.totalorder %s16, 3
      %p211 = pnand %p209, %p210
      %p212 = pneg %p211
      // Predicated region
      $region29: #{decoder_rnn_forward.3} parent=5 // pred_check
        _
      $region30: #{decoder_rnn_forward.3} parent=5 // pred_check_branch
        %214 = sbr.rel (%p211) target = $region32
      $region31: #{decoder_rnn_forward.3} parent=5 // pred_region
        %s215 = ssub.s32 %s16, 1
        // Predicated region
        $region33: #{decoder_rnn_forward.3} parent=31 // pred_check
          %p216 = pneg %p54
        $region34: #{decoder_rnn_forward.3} parent=31 // pred_check_branch
          %218 = sbr.rel (%p216) target = $region36
        $region35: #{decoder_rnn_forward.3} parent=31 // pred_region
          %219 = dma.done [#allocation3], 2048
        $region36: #{decoder_rnn_forward.3} parent=31 // pred_fallthru
          _
        %s220 = sand.u32 %s21, 1
        %s221 = scalar_lea.sflag [#allocation6], %s220
        %s222 = sand.u32 %s67, 1
        %s223 = smul.addr %s222, 128
        %s224 = scalar_lea.vmem [#allocation5], %s223
        // Predicated region
        $region37: #{decoder_rnn_forward.3} parent=31 // pred_check
          %p225 = pneg %p80
        $region38: #{decoder_rnn_forward.3} parent=31 // pred_check_branch
          %227 = sbr.rel (%p225) target = $region40
        $region39: #{decoder_rnn_forward.3} parent=31 // pred_region
          %228 = dma.done %s221, 2048
        $region40: #{decoder_rnn_forward.3} parent=31 // pred_fallthru
          _
        %s229 = sand.u32 %s21, 1
        %s230 = scalar_lea.sflag [#allocation6], %s229
        %s231 = sand.u32 %s93, 1
        %s232 = smul.addr %s231, 2
        %s233 = scalar_lea.vmem [#allocation7], %s232
        // Predicated region
        $region41: #{decoder_rnn_forward.3} parent=31 // pred_check
          %p234 = pneg %p106
        $region42: #{decoder_rnn_forward.3} parent=31 // pred_check_branch
          %236 = sbr.rel (%p234) target = $region44
        $region43: #{decoder_rnn_forward.3} parent=31 // pred_region
          %237 = dma.done %s230, 32
        $region44: #{decoder_rnn_forward.3} parent=31 // pred_fallthru
          _
        %p238 = pneg %p54
        %p239 = pneg %p51
        %s240 = sand.u32 %s21, 1
        %s241 = scalar_lea.sflag [#allocation6], %s240
        %s242 = sand.u32 %s67, 1
        %s243 = smul.addr %s242, 128
        %s244 = scalar_lea.vmem [#allocation5], %s243
        %p245 = pneg %p80
        %p246 = pneg %p77
        %s247 = sand.u32 %s21, 1
        %s248 = scalar_lea.sflag [#allocation6], %s247
        %s249 = sand.u32 %s93, 1
        %s250 = smul.addr %s249, 2
        %s251 = scalar_lea.vmem [#allocation7], %s250
        %p252 = pneg %p106
        %p253 = pneg %p103
        %p254 = pneg %p134
        %p255 = pneg %p131
        %s256 = sand.u32 %s121, 1
        %s257 = scalar_lea.sflag [#allocation4], %s256
        %s258 = sand.u32 %s121, 1
        %s259 = smul.addr %s258, 512
        %s260 = scalar_lea.vmem [#allocation8], %s259
        %s261 = smul.u32 32, %s25
        %s262 = smul.u32 2, %s26
        %s263 = smul.u32 2, %s26
        %s264 = smul.u32 32, %s25
        %s265 = smul.u32 2, %s26
        %v267 = vld [vmem:[#allocation2] sm:$0xf]
        %v268 = vld [vmem:[#allocation2 + $0x4] sm:$0xf]
        %v269 = vld [vmem:[#allocation2 + $0x8] sm:$0xf]
        %v270 = vld [vmem:[#allocation2 + $0xc] sm:$0xf]
        %v271 = vld [vmem:[#allocation2 + $0x10] sm:$0xf]
        %v272 = vld [vmem:[#allocation2 + $0x14] sm:$0xf]
        %v273 = vld [vmem:[#allocation2 + $0x18] sm:$0xf]
        %v274 = vld [vmem:[#allocation2 + $0x1c] sm:$0xf]
        %v275 = vld [vmem:[#allocation2 + $0x20] sm:$0xf]
        %v276 = vld [vmem:[#allocation2 + $0x24] sm:$0xf]
        %v277 = vld [vmem:[#allocation2 + $0x28] sm:$0xf]
        %v278 = vld [vmem:[#allocation2 + $0x2c] sm:$0xf]
        %v279 = vld [vmem:[#allocation2 + $0x30] sm:$0xf]
        %v280 = vld [vmem:[#allocation2 + $0x34] sm:$0xf]
        %v281 = vld [vmem:[#allocation2 + $0x38] sm:$0xf]
        %v282 = vld [vmem:[#allocation2 + $0x3c] sm:$0xf]
        %v283 = vld [vmem:[#allocation2 + $0x40] sm:$0xf]
        %v284 = vld [vmem:[#allocation2 + $0x44] sm:$0xf]
        %v285 = vld [vmem:[#allocation2 + $0x48] sm:$0xf]
        %v286 = vld [vmem:[#allocation2 + $0x4c] sm:$0xf]
        %v287 = vld [vmem:[#allocation2 + $0x50] sm:$0xf]
        %v288 = vld [vmem:[#allocation2 + $0x54] sm:$0xf]
        %v289 = vld [vmem:[#allocation2 + $0x58] sm:$0xf]
        %v290 = vld [vmem:[#allocation2 + $0x5c] sm:$0xf]
        %v291 = vld [vmem:[#allocation2 + $0x60] sm:$0xf]
        %v292 = vld [vmem:[#allocation2 + $0x64] sm:$0xf]
        %v293 = vld [vmem:[#allocation2 + $0x68] sm:$0xf]
        %v294 = vld [vmem:[#allocation2 + $0x6c] sm:$0xf]
        %v295 = vld [vmem:[#allocation2 + $0x70] sm:$0xf]
        %v296 = vld [vmem:[#allocation2 + $0x74] sm:$0xf]
        %v297 = vld [vmem:[#allocation2 + $0x78] sm:$0xf]
        %v298 = vld [vmem:[#allocation2 + $0x7c] sm:$0xf]
        %v299 = vld [vmem:[%s224] sm:$0xff]
        %v300 = vld [vmem:[%s224 + $0x8] sm:$0xff]
        %v301 = vld [vmem:[%s224 + $0x10] sm:$0xff]
        %v302 = vld [vmem:[%s224 + $0x18] sm:$0xff]
        %v303 = vld [vmem:[%s224 + $0x20] sm:$0xff]
        %v304 = vld [vmem:[%s224 + $0x28] sm:$0xff]
        %v305 = vld [vmem:[%s224 + $0x30] sm:$0xff]
        %v306 = vld [vmem:[%s224 + $0x38] sm:$0xff]
        %v307 = vld [vmem:[%s224 + $0x40] sm:$0xff]
        %v308 = vld [vmem:[%s224 + $0x48] sm:$0xff]
        %v309 = vld [vmem:[%s224 + $0x50] sm:$0xff]
        %v310 = vld [vmem:[%s224 + $0x58] sm:$0xff]
        %v311 = vld [vmem:[%s224 + $0x60] sm:$0xff]
        %v312 = vld [vmem:[%s224 + $0x68] sm:$0xff]
        %v313 = vld [vmem:[%s224 + $0x70] sm:$0xff]
        %v314 = vld [vmem:[%s224 + $0x78] sm:$0xff]
        %v315 = vld [vmem:[%s233] sm:$0x3]
        %v317 = vlaneseq
        %v318 = vshrl.u32 %v317, 7
        %v319 = vsub.s32 0, %v318
        %v320 = vrot.slane %v315, %v319
        %v321 = vlaneseq
        %v322 = vshrl.u32 %v321, 7
        %v323 = vsub.s32 1, %v322
        %v324 = vrot.slane %v315, %v323
        %v359 = vunpack.c.l.b16 %v267
        %v360 = vunpack.c.l.b16 %v268
        %v361 = vunpack.c.l.b16 %v269
        %v362 = vunpack.c.l.b16 %v270
        %v363 = vunpack.c.l.b16 %v271
        %v364 = vunpack.c.l.b16 %v272
        %v365 = vunpack.c.l.b16 %v273
        %v366 = vunpack.c.l.b16 %v274
        %v367 = vunpack.c.l.b16 %v275
        %v368 = vunpack.c.l.b16 %v276
        %v369 = vunpack.c.l.b16 %v277
        %v370 = vunpack.c.l.b16 %v278
        %v371 = vunpack.c.l.b16 %v279
        %v372 = vunpack.c.l.b16 %v280
        %v373 = vunpack.c.l.b16 %v281
        %v374 = vunpack.c.l.b16 %v282
        %v375 = vunpack.c.l.b16 %v283
        %v376 = vunpack.c.l.b16 %v284
        %v377 = vunpack.c.l.b16 %v285
        %v378 = vunpack.c.l.b16 %v286
        %v379 = vunpack.c.l.b16 %v287
        %v380 = vunpack.c.l.b16 %v288
        %v381 = vunpack.c.l.b16 %v289
        %v382 = vunpack.c.l.b16 %v290
        %v383 = vunpack.c.l.b16 %v291
        %v384 = vunpack.c.l.b16 %v292
        %v385 = vunpack.c.l.b16 %v293
        %v386 = vunpack.c.l.b16 %v294
        %v387 = vunpack.c.l.b16 %v295
        %v388 = vunpack.c.l.b16 %v296
        %v389 = vunpack.c.l.b16 %v297
        %v390 = vunpack.c.l.b16 %v298
        %v391 = vpack.c.b16 %v360, %v359
        %v392 = vpack.c.b16 %v362, %v361
        %v393 = vpack.c.b16 %v364, %v363
        %v394 = vpack.c.b16 %v366, %v365
        %v395 = vpack.c.b16 %v368, %v367
        %v396 = vpack.c.b16 %v370, %v369
        %v397 = vpack.c.b16 %v372, %v371
        %v398 = vpack.c.b16 %v374, %v373
        %v399 = vpack.c.b16 %v376, %v375
        %v400 = vpack.c.b16 %v378, %v377
        %v401 = vpack.c.b16 %v380, %v379
        %v402 = vpack.c.b16 %v382, %v381
        %v403 = vpack.c.b16 %v384, %v383
        %v404 = vpack.c.b16 %v386, %v385
        %v405 = vpack.c.b16 %v388, %v387
        %v406 = vpack.c.b16 %v390, %v389
        %v439 = vunpack.c.l.b16 %v299
        %v440 = vunpack.c.h.b16 %v299
        %v441 = vunpack.c.l.b16 %v300
        %v442 = vunpack.c.h.b16 %v300
        %v443 = vunpack.c.l.b16 %v301
        %v444 = vunpack.c.h.b16 %v301
        %v445 = vunpack.c.l.b16 %v302
        %v446 = vunpack.c.h.b16 %v302
        %v447 = vunpack.c.l.b16 %v303
        %v448 = vunpack.c.h.b16 %v303
        %v449 = vunpack.c.l.b16 %v304
        %v450 = vunpack.c.h.b16 %v304
        %v451 = vunpack.c.l.b16 %v305
        %v452 = vunpack.c.h.b16 %v305
        %v453 = vunpack.c.l.b16 %v306
        %v454 = vunpack.c.h.b16 %v306
        %v455 = vunpack.c.l.b16 %v307
        %v456 = vunpack.c.h.b16 %v307
        %v457 = vunpack.c.l.b16 %v308
        %v458 = vunpack.c.h.b16 %v308
        %v459 = vunpack.c.l.b16 %v309
        %v460 = vunpack.c.h.b16 %v309
        %v461 = vunpack.c.l.b16 %v310
        %v462 = vunpack.c.h.b16 %v310
        %v463 = vunpack.c.l.b16 %v311
        %v464 = vunpack.c.h.b16 %v311
        %v465 = vunpack.c.l.b16 %v312
        %v466 = vunpack.c.h.b16 %v312
        %v467 = vunpack.c.l.b16 %v313
        %v468 = vunpack.c.h.b16 %v313
        %v469 = vunpack.c.l.b16 %v314
        %v470 = vunpack.c.h.b16 %v314
        %v471 = vpack.c.b16 %v441, %v439
        %v472 = vpack.c.b16 %v442, %v440
        %v473 = vpack.c.b16 %v445, %v443
        %v474 = vpack.c.b16 %v446, %v444
        %v475 = vpack.c.b16 %v449, %v447
        %v476 = vpack.c.b16 %v450, %v448
        %v477 = vpack.c.b16 %v453, %v451
        %v478 = vpack.c.b16 %v454, %v452
        %v479 = vpack.c.b16 %v457, %v455
        %v480 = vpack.c.b16 %v458, %v456
        %v481 = vpack.c.b16 %v461, %v459
        %v482 = vpack.c.b16 %v462, %v460
        %v483 = vpack.c.b16 %v465, %v463
        %v484 = vpack.c.b16 %v466, %v464
        %v485 = vpack.c.b16 %v469, %v467
        %v486 = vpack.c.b16 %v470, %v468
        %503 = vmatprep.subr.bf16.mxu0 %v472
        %504 = vmatpush1.bf16.msra.mxu0 %v471
        %505 = vmatprep.subr.bf16.mxu0 %v474
        %506 = vmatpush1.bf16.msra.mxu0 %v473
        %507 = vmatprep.subr.bf16.mxu0 %v476
        %508 = vmatpush1.bf16.msra.mxu0 %v475
        %509 = vmatprep.subr.bf16.mxu0 %v478
        %510 = vmatpush1.bf16.msra.mxu0 %v477
        %511 = vmatprep.subr.bf16.mxu0 %v480
        %512 = vmatpush1.bf16.msra.mxu0 %v479
        %513 = vmatprep.subr.bf16.mxu0 %v482
        %514 = vmatpush1.bf16.msra.mxu0 %v481
        %515 = vmatprep.subr.bf16.mxu0 %v484
        %516 = vmatpush1.bf16.msra.mxu0 %v483
        %517 = vmatprep.subr.bf16.mxu0 %v486
        %518 = vmatpush1.bf16.msra.mxu0 %v485
        %519 = vmatprep.subr.bf16.mxu0 0
        %520 = vmatpush1.bf16.msra.mxu0 0
        %521 = vmatprep.subr.bf16.mxu0 0
        %522 = vmatpush1.bf16.msra.mxu0 0
        %523 = vmatprep.subr.bf16.mxu0 0
        %524 = vmatpush1.bf16.msra.mxu0 0
        %525 = vmatprep.subr.bf16.mxu0 0
        %526 = vmatpush1.bf16.msra.mxu0 0
        %527 = vmatprep.subr.bf16.mxu0 0
        %528 = vmatpush1.bf16.msra.mxu0 0
        %529 = vmatprep.subr.bf16.mxu0 0
        %530 = vmatpush1.bf16.msra.mxu0 0
        %531 = vmatprep.subr.bf16.mxu0 0
        %532 = vmatpush1.bf16.msra.mxu0 0
        %533 = vmatprep.subr.bf16.mxu0 0
        %534 = vmatpush1.bf16.msra.mxu0 0
        %535 = vmatprep.mubr.bf16.mxu0 0
        %536 = vmatmul.mubr.bf16.gmra.mrb[0].mxu0 %v391
        %v537 = vpop.f32.mrb[0].mxu0
        %v538 = vadd.f32 %v320, %v537
        %v539 = vpop.f32.mrb[0].mxu0
        %v540 = vadd.f32 %v324, %v539
        %v541 = vpop.f32.mrb[0].mxu0
        %v542 = vadd.f32 %v320, %v541
        %v543 = vpop.f32.mrb[0].mxu0
        %v544 = vadd.f32 %v324, %v543
        %545 = vmatprep.mubr.bf16.mxu0 0
        %546 = vmatmul.mubr.bf16.gmra.mrb[0].mxu0 %v392
        %v547 = vpop.f32.mrb[0].mxu0
        %v548 = vadd.f32 %v320, %v547
        %v549 = vpop.f32.mrb[0].mxu0
        %v550 = vadd.f32 %v324, %v549
        %v551 = vpop.f32.mrb[0].mxu0
        %v552 = vadd.f32 %v320, %v551
        %v553 = vpop.f32.mrb[0].mxu0
        %v554 = vadd.f32 %v324, %v553
        %555 = vmatprep.mubr.bf16.mxu0 0
        %556 = vmatmul.mubr.bf16.gmra.mrb[0].mxu0 %v393
        %v557 = vpop.f32.mrb[0].mxu0
        %v558 = vadd.f32 %v320, %v557
        %v559 = vpop.f32.mrb[0].mxu0
        %v560 = vadd.f32 %v324, %v559
        %v561 = vpop.f32.mrb[0].mxu0
        %v562 = vadd.f32 %v320, %v561
        %v563 = vpop.f32.mrb[0].mxu0
        %v564 = vadd.f32 %v324, %v563
        %565 = vmatprep.mubr.bf16.mxu0 0
        %566 = vmatmul.mubr.bf16.gmra.mrb[0].mxu0 %v394
        %v567 = vpop.f32.mrb[0].mxu0
        %v568 = vadd.f32 %v320, %v567
        %v569 = vpop.f32.mrb[0].mxu0
        %v570 = vadd.f32 %v324, %v569
        %v571 = vpop.f32.mrb[0].mxu0
        %v572 = vadd.f32 %v320, %v571
        %v573 = vpop.f32.mrb[0].mxu0
        %v574 = vadd.f32 %v324, %v573
        %575 = vmatprep.mubr.bf16.mxu0 0
        %576 = vmatmul.mubr.bf16.gmra.mrb[0].mxu0 %v395
        %v577 = vpop.f32.mrb[0].mxu0
        %v578 = vadd.f32 %v320, %v577
        %v579 = vpop.f32.mrb[0].mxu0
        %v580 = vadd.f32 %v324, %v579
        %v581 = vpop.f32.mrb[0].mxu0
        %v582 = vadd.f32 %v320, %v581
        %v583 = vpop.f32.mrb[0].mxu0
        %v584 = vadd.f32 %v324, %v583
        %585 = vmatprep.mubr.bf16.mxu0 0
        %586 = vmatmul.mubr.bf16.gmra.mrb[0].mxu0 %v396
        %v587 = vpop.f32.mrb[0].mxu0
        %v588 = vadd.f32 %v320, %v587
        %v589 = vpop.f32.mrb[0].mxu0
        %v590 = vadd.f32 %v324, %v589
        %v591 = vpop.f32.mrb[0].mxu0
        %v592 = vadd.f32 %v320, %v591
        %v593 = vpop.f32.mrb[0].mxu0
        %v594 = vadd.f32 %v324, %v593
        %595 = vmatprep.mubr.bf16.mxu0 0
        %596 = vmatmul.mubr.bf16.gmra.mrb[0].mxu0 %v397
        %v597 = vpop.f32.mrb[0].mxu0
        %v598 = vadd.f32 %v320, %v597
        %v599 = vpop.f32.mrb[0].mxu0
        %v600 = vadd.f32 %v324, %v599
        %v601 = vpop.f32.mrb[0].mxu0
        %v602 = vadd.f32 %v320, %v601
        %v603 = vpop.f32.mrb[0].mxu0
        %v604 = vadd.f32 %v324, %v603
        %605 = vmatprep.mubr.bf16.mxu0 0
        %606 = vmatmul.mubr.bf16.gmra.mrb[0].mxu0 %v398
        %v607 = vpop.f32.mrb[0].mxu0
        %v608 = vadd.f32 %v320, %v607
        %v609 = vpop.f32.mrb[0].mxu0
        %v610 = vadd.f32 %v324, %v609
        %v611 = vpop.f32.mrb[0].mxu0
        %v612 = vadd.f32 %v320, %v611
        %v613 = vpop.f32.mrb[0].mxu0
        %v614 = vadd.f32 %v324, %v613
        %615 = vmatprep.mubr.bf16.mxu0 0
        %616 = vmatmul.mubr.bf16.gmra.mrb[0].mxu0 %v399
        %v617 = vpop.f32.mrb[0].mxu0
        %v618 = vadd.f32 %v320, %v617
        %v619 = vpop.f32.mrb[0].mxu0
        %v620 = vadd.f32 %v324, %v619
        %v621 = vpop.f32.mrb[0].mxu0
        %v622 = vadd.f32 %v320, %v621
        %v623 = vpop.f32.mrb[0].mxu0
        %v624 = vadd.f32 %v324, %v623
        %625 = vmatprep.mubr.bf16.mxu0 0
        %626 = vmatmul.mubr.bf16.gmra.mrb[0].mxu0 %v400
        %v627 = vpop.f32.mrb[0].mxu0
        %v628 = vadd.f32 %v320, %v627
        %v629 = vpop.f32.mrb[0].mxu0
        %v630 = vadd.f32 %v324, %v629
        %v631 = vpop.f32.mrb[0].mxu0
        %v632 = vadd.f32 %v320, %v631
        %v633 = vpop.f32.mrb[0].mxu0
        %v634 = vadd.f32 %v324, %v633
        %635 = vmatprep.mubr.bf16.mxu0 0
        %636 = vmatmul.mubr.bf16.gmra.mrb[0].mxu0 %v401
        %v637 = vpop.f32.mrb[0].mxu0
        %v638 = vadd.f32 %v320, %v637
        %v639 = vpop.f32.mrb[0].mxu0
        %v640 = vadd.f32 %v324, %v639
        %v641 = vpop.f32.mrb[0].mxu0
        %v642 = vadd.f32 %v320, %v641
        %v643 = vpop.f32.mrb[0].mxu0
        %v644 = vadd.f32 %v324, %v643
        %645 = vmatprep.mubr.bf16.mxu0 0
        %646 = vmatmul.mubr.bf16.gmra.mrb[0].mxu0 %v402
        %v647 = vpop.f32.mrb[0].mxu0
        %v648 = vadd.f32 %v320, %v647
        %v649 = vpop.f32.mrb[0].mxu0
        %v650 = vadd.f32 %v324, %v649
        %v651 = vpop.f32.mrb[0].mxu0
        %v652 = vadd.f32 %v320, %v651
        %v653 = vpop.f32.mrb[0].mxu0
        %v654 = vadd.f32 %v324, %v653
        %655 = vmatprep.mubr.bf16.mxu0 0
        %656 = vmatmul.mubr.bf16.gmra.mrb[0].mxu0 %v403
        %v657 = vpop.f32.mrb[0].mxu0
        %v658 = vadd.f32 %v320, %v657
        %v659 = vpop.f32.mrb[0].mxu0
        %v660 = vadd.f32 %v324, %v659
        %v661 = vpop.f32.mrb[0].mxu0
        %v662 = vadd.f32 %v320, %v661
        %v663 = vpop.f32.mrb[0].mxu0
        %v664 = vadd.f32 %v324, %v663
        %665 = vmatprep.mubr.bf16.mxu0 0
        %666 = vmatmul.mubr.bf16.gmra.mrb[0].mxu0 %v404
        %v667 = vpop.f32.mrb[0].mxu0
        %v668 = vadd.f32 %v320, %v667
        %v669 = vpop.f32.mrb[0].mxu0
        %v670 = vadd.f32 %v324, %v669
        %v671 = vpop.f32.mrb[0].mxu0
        %v672 = vadd.f32 %v320, %v671
        %v673 = vpop.f32.mrb[0].mxu0
        %v674 = vadd.f32 %v324, %v673
        %675 = vmatprep.mubr.bf16.mxu0 0
        %676 = vmatmul.mubr.bf16.gmra.mrb[0].mxu0 %v405
        %v677 = vpop.f32.mrb[0].mxu0
        %v678 = vadd.f32 %v320, %v677
        %v679 = vpop.f32.mrb[0].mxu0
        %v680 = vadd.f32 %v324, %v679
        %v681 = vpop.f32.mrb[0].mxu0
        %v682 = vadd.f32 %v320, %v681
        %v683 = vpop.f32.mrb[0].mxu0
        %v684 = vadd.f32 %v324, %v683
        %685 = vmatprep.mubr.bf16.mxu0 0
        %686 = vmatmul.mubr.bf16.gmra.mrb[0].mxu0 %v406
        %v687 = vpop.f32.mrb[0].mxu0
        %v688 = vadd.f32 %v320, %v687
        %v689 = vpop.f32.mrb[0].mxu0
        %v690 = vadd.f32 %v324, %v689
        %v691 = vpop.f32.mrb[0].mxu0
        %v692 = vadd.f32 %v320, %v691
        %v693 = vpop.f32.mrb[0].mxu0
        %v694 = vadd.f32 %v324, %v693
        %695 = vdwg.mxu0
        %696 = vst [vmem:[%s260] sm:$0xff] %v538
        %697 = vst [vmem:[%s260 + $0x8] sm:$0xff] %v540
        %698 = vst [vmem:[%s260 + $0x10] sm:$0xff] %v542
        %699 = vst [vmem:[%s260 + $0x18] sm:$0xff] %v544
        %700 = vst [vmem:[%s260 + $0x20] sm:$0xff] %v548
        %701 = vst [vmem:[%s260 + $0x28] sm:$0xff] %v550
        %702 = vst [vmem:[%s260 + $0x30] sm:$0xff] %v552
        %703 = vst [vmem:[%s260 + $0x38] sm:$0xff] %v554
        %704 = vst [vmem:[%s260 + $0x40] sm:$0xff] %v558
        %705 = vst [vmem:[%s260 + $0x48] sm:$0xff] %v560
        %706 = vst [vmem:[%s260 + $0x50] sm:$0xff] %v562
        %707 = vst [vmem:[%s260 + $0x58] sm:$0xff] %v564
        %708 = vst [vmem:[%s260 + $0x60] sm:$0xff] %v568
        %709 = vst [vmem:[%s260 + $0x68] sm:$0xff] %v570
        %710 = vst [vmem:[%s260 + $0x70] sm:$0xff] %v572
        %711 = vst [vmem:[%s260 + $0x78] sm:$0xff] %v574
        %712 = vst [vmem:[%s260 + $0x80] sm:$0xff] %v578
        %713 = vst [vmem:[%s260 + $0x88] sm:$0xff] %v580
        %714 = vst [vmem:[%s260 + $0x90] sm:$0xff] %v582
        %715 = vst [vmem:[%s260 + $0x98] sm:$0xff] %v584
        %716 = vst [vmem:[%s260 + $0xa0] sm:$0xff] %v588
        %717 = vst [vmem:[%s260 + $0xa8] sm:$0xff] %v590
        %718 = vst [vmem:[%s260 + $0xb0] sm:$0xff] %v592
        %719 = vst [vmem:[%s260 + $0xb8] sm:$0xff] %v594
        %720 = vst [vmem:[%s260 + $0xc0] sm:$0xff] %v598
        %721 = vst [vmem:[%s260 + $0xc8] sm:$0xff] %v600
        %722 = vst [vmem:[%s260 + $0xd0] sm:$0xff] %v602
        %723 = vst [vmem:[%s260 + $0xd8] sm:$0xff] %v604
        %724 = vst [vmem:[%s260 + $0xe0] sm:$0xff] %v608
        %725 = vst [vmem:[%s260 + $0xe8] sm:$0xff] %v610
        %726 = vst [vmem:[%s260 + $0xf0] sm:$0xff] %v612
        %727 = vst [vmem:[%s260 + $0xf8] sm:$0xff] %v614
        %728 = vst [vmem:[%s260 + $0x100] sm:$0xff] %v618
        %729 = vst [vmem:[%s260 + $0x108] sm:$0xff] %v620
        %730 = vst [vmem:[%s260 + $0x110] sm:$0xff] %v622
        %731 = vst [vmem:[%s260 + $0x118] sm:$0xff] %v624
        %732 = vst [vmem:[%s260 + $0x120] sm:$0xff] %v628
        %733 = vst [vmem:[%s260 + $0x128] sm:$0xff] %v630
        %734 = vst [vmem:[%s260 + $0x130] sm:$0xff] %v632
        %735 = vst [vmem:[%s260 + $0x138] sm:$0xff] %v634
        %736 = vst [vmem:[%s260 + $0x140] sm:$0xff] %v638
        %737 = vst [vmem:[%s260 + $0x148] sm:$0xff] %v640
        %738 = vst [vmem:[%s260 + $0x150] sm:$0xff] %v642
        %739 = vst [vmem:[%s260 + $0x158] sm:$0xff] %v644
        %740 = vst [vmem:[%s260 + $0x160] sm:$0xff] %v648
        %741 = vst [vmem:[%s260 + $0x168] sm:$0xff] %v650
        %742 = vst [vmem:[%s260 + $0x170] sm:$0xff] %v652
        %743 = vst [vmem:[%s260 + $0x178] sm:$0xff] %v654
        %744 = vst [vmem:[%s260 + $0x180] sm:$0xff] %v658
        %745 = vst [vmem:[%s260 + $0x188] sm:$0xff] %v660
        %746 = vst [vmem:[%s260 + $0x190] sm:$0xff] %v662
        %747 = vst [vmem:[%s260 + $0x198] sm:$0xff] %v664
        %748 = vst [vmem:[%s260 + $0x1a0] sm:$0xff] %v668
        %749 = vst [vmem:[%s260 + $0x1a8] sm:$0xff] %v670
        %750 = vst [vmem:[%s260 + $0x1b0] sm:$0xff] %v672
        %751 = vst [vmem:[%s260 + $0x1b8] sm:$0xff] %v674
        %752 = vst [vmem:[%s260 + $0x1c0] sm:$0xff] %v678
        %753 = vst [vmem:[%s260 + $0x1c8] sm:$0xff] %v680
        %754 = vst [vmem:[%s260 + $0x1d0] sm:$0xff] %v682
        %755 = vst [vmem:[%s260 + $0x1d8] sm:$0xff] %v684
        %756 = vst [vmem:[%s260 + $0x1e0] sm:$0xff] %v688
        %757 = vst [vmem:[%s260 + $0x1e8] sm:$0xff] %v690
        %758 = vst [vmem:[%s260 + $0x1f0] sm:$0xff] %v692
        %759 = vst [vmem:[%s260 + $0x1f8] sm:$0xff] %v694
        %s760 = sand.u32 %s121, 1
        %s761 = scalar_lea.sflag [#allocation4], %s760
        %s762 = sand.u32 %s121, 1
        %s763 = smul.addr %s762, 512
        %s764 = scalar_lea.vmem [#allocation8], %s763
        // Predicated region
        $region45: #{decoder_rnn_forward.3} parent=31 // pred_check
          %p765 = pneg %p131
        $region46: #{decoder_rnn_forward.3} parent=31 // pred_check_branch
          %767 = sbr.rel (%p765) target = $region48
        $region47: #{decoder_rnn_forward.3} parent=31 // pred_region
          %s768 = smul.u32 32, %s25
          %s769 = smul.u32 2, %s26
          %s771 = ssub.s32 8192, 8192
          %772 = vsyncadd %s761, %s771
          %s773 = smul.addr %s768, 4
          %s774 = sadd.s32 %s769, %s773
          %s775 = smul.addr %s774, 128
          %s776 = scalar_lea.hbm %s3, %s775
          %s777 = sshll.u32 %s764, 4
          %s778 = int_to_ptr.vmem [resolvable:$true] %s777
          %783 = dma.vmem_to_hbm [thread:$0]  %s778, 8192, %s776, %s761, 256, 512, 16
        $region48: #{decoder_rnn_forward.3} parent=31 // pred_fallthru
          _
      $region32: #{decoder_rnn_forward.3} parent=5 // pred_fallthru
        _
      %p784 = scmp.le.s32.totalorder 2, %s16
      // Predicated region
      $region49: #{decoder_rnn_forward.3} parent=5 // pred_check
        %p785 = pneg %p784
      $region50: #{decoder_rnn_forward.3} parent=5 // pred_check_branch
        %787 = sbr.rel (%p785) target = $region52
      $region51: #{decoder_rnn_forward.3} parent=5 // pred_region
        %s788 = ssub.s32 %s16, 2
        // Predicated region
        $region53: #{decoder_rnn_forward.3} parent=51 // pred_check
          %p789 = pneg %p137
        $region54: #{decoder_rnn_forward.3} parent=51 // pred_check_branch
          %791 = sbr.rel (%p789) target = $region56
        $region55: #{decoder_rnn_forward.3} parent=51 // pred_region
          %s792 = sand.u32 %s122, 1
          %s793 = scalar_lea.sflag [#allocation4], %s792
          %s794 = sand.u32 %s122, 1
          %s795 = smul.addr %s794, 512
          %s796 = scalar_lea.vmem [#allocation8], %s795
          %797 = dma.done %s793, 8192
        $region56: #{decoder_rnn_forward.3} parent=51 // pred_fallthru
          _
      $region52: #{decoder_rnn_forward.3} parent=5 // pred_fallthru
        _
    $region6: #{decoder_rnn_forward.3} parent=1 // loop_footer
      %s20 = sadd.s32 1, %s16
    $region7: #{decoder_rnn_forward.3} parent=1 // loop_footer_branch
      %15 = sbr.rel target = $region3
    $region8: #{decoder_rnn_forward.3} parent=1 // loop_exit
      _
    %798 = vsyncpa [#allocation3], 1
    %s799 = scalar_lea.sflag [#allocation3], 1
    %800 = vsyncpa %s799, 1
    %801 = vsyncpa [#allocation6], 1
    %s802 = scalar_lea.sflag [#allocation6], 1
    %803 = vsyncpa %s802, 1
    %804 = vsyncpa [#allocation4], 1
    %s805 = scalar_lea.sflag [#allocation4], 1
    %806 = vsyncpa %s805, 1

// kernel: decoder_rnn_forward.4
$region0: #{decoder_rnn_forward.4}
  #allocation0 [shape = 'u32[]', space=smem, size = 0x4, offset = 0x4, fixed_abs, tag = 'smem constant byte address 0x4 - core index']
  #allocation1 [shape = 'u32[144,128]{1,0:T(1,128)}', space=vmem, size = 0x12000, scoped, tag = 'internal scratch']
  #allocation2 [shape = 'bf16[128,512]{1,0:T(16,128)(2,1)}', space=vmem, size = 0x20000, scoped, tag = 'scratch operand']
  #allocation3 [shape = 'f32[8,128]{1,0:T(8,128)}', space=vmem, size = 0x1000, scoped, tag = 'scratch operand']
  #allocation4 [shape = 'f32[8,128]{1,0:T(8,128)}', space=vmem, size = 0x1000, scoped, tag = 'scratch operand']
  #allocation10 [shape = 's32[]', space=sflag, size = 0x4, offset = 0, fixed_abs, tag = 'sflag constant byte address 0x0 - dummy sync flag']
  %s0 = inlined_call_operand.hbm [shape: f32[32,8,512], index: 0, kind: input, shape index: {}]
  %s1 = inlined_call_operand.hbm [shape: bf16[128,512], index: 1, kind: input, shape index: {}]
  %s2 = inlined_call_operand.hbm [shape: f32[32,8,128], index: 2, kind: output, shape index: {}]
  %s3 = sld [smem:[#allocation0]]
  $region46: #{decoder_rnn_forward.4} parent=0
    _
  %s5 = ssub.s32 1, %s3
  %s6 = scalar_select 0, %s5, %s3
  $region1: #{decoder_rnn_forward.4} parent=0
    #allocation5 [shape = 'u8[524288]{0}', space=vmem, size = 0x80000, scoped, tag = 'input window, operand 0']
    #allocation6 [shape = 's32[2]{0}', space=sflag, size = 0x8, scoped, tag = 'scoped memory for decoder_rnn_forward.4']
    #allocation7 [shape = 's32[2]{0}', space=sflag, size = 0x8, scoped, tag = 'scoped memory for decoder_rnn_forward.4']
    #allocation8 [shape = 'u8[131072]{0}', space=vmem, size = 0x20000, scoped, tag = 'output window, operand 0']
    %7 = vsyncpa [#allocation6], 0
    %s8 = scalar_lea.sflag [#allocation6], 1
    %9 = vsyncpa %s8, 0
    %10 = vsyncpa [#allocation7], 0
    %s11 = scalar_lea.sflag [#allocation7], 1
    %12 = vsyncpa %s11, 0
    loop: start=0, step=1, limit=4
    $region2: #{decoder_rnn_forward.4} parent=1 // loop_pre_header
      _
    $region3: #{decoder_rnn_forward.4} parent=1 // loop_header
      %s14 = sphi 0, %s18
      %p15 = scmp.ge.s32.totalorder %s14, 4
      %s24 = sphi 0, %s26
      %s27 = sphi 0, %s24
      %s28 = sphi 0, %s27
      %s44 = sphi 0, %s28
      %s50 = sphi 0, %s52
      %s53 = sphi 0, %s50
      %s54 = sphi 0, %s53
      %s70 = sphi 0, %s54
    $region4: #{decoder_rnn_forward.4} parent=1 // loop_header_branch
      %17 = sbr.rel (%p15) target = $region8
    $region5: #{decoder_rnn_forward.4} parent=1 // loop_body
      %s19 = ssub.s32 %s14, 1
      %s20 = ssub.s32 %s14, 2
      %s21 = sadd.s32 %s14, 1
      %s22 = ssub.s32 %s14, %s21
      %p23 = scmp.eq.s32.totalorder %s22, 0
      %s25 = sadd.s32 %s24, 1
      %s26 = scalar_select %p23, %s24, %s25
      %p29 = pneg %p23
      %p30 = scmp.eq.s32.totalorder %s14, 1
      %p31 = por %p29, %p30
      %p32 = scmp.ne.s32.totalorder %s24, %s27
      %p33 = scmp.eq.s32.totalorder %s14, 0
      %p34 = por %p32, %p33
      %p35 = scmp.ne.s32.totalorder %s24, %s27
      %p36 = scmp.eq.s32.totalorder %s19, 1
      %p37 = por %p35, %p36
      %p38 = scmp.ne.s32.totalorder %s27, %s28
      %p39 = scmp.eq.s32.totalorder %s19, 0
      %p40 = por %p38, %p39
      %p41 = scmp.ne.s32.totalorder %s27, %s28
      %p42 = scmp.eq.s32.totalorder %s20, 1
      %p43 = por %p41, %p42
      %p45 = scmp.ne.s32.totalorder %s28, %s44
      %p46 = scmp.eq.s32.totalorder %s20, 0
      %p47 = por %p45, %p46
      %s48 = ssub.s32 %s14, %s21
      %p49 = scmp.eq.s32.totalorder %s48, 0
      %s51 = sadd.s32 %s50, 1
      %s52 = scalar_select %p49, %s50, %s51
      %p55 = pneg %p49
      %p56 = scmp.eq.s32.totalorder %s14, 1
      %p57 = por %p55, %p56
      %p58 = scmp.ne.s32.totalorder %s50, %s53
      %p59 = scmp.eq.s32.totalorder %s14, 0
      %p60 = por %p58, %p59
      %p61 = scmp.ne.s32.totalorder %s50, %s53
      %p62 = scmp.eq.s32.totalorder %s19, 1
      %p63 = por %p61, %p62
      %p64 = scmp.ne.s32.totalorder %s53, %s54
      %p65 = scmp.eq.s32.totalorder %s19, 0
      %p66 = por %p64, %p65
      %p67 = scmp.ne.s32.totalorder %s53, %s54
      %p68 = scmp.eq.s32.totalorder %s20, 1
      %p69 = por %p67, %p68
      %p71 = scmp.ne.s32.totalorder %s54, %s70
      %p72 = scmp.eq.s32.totalorder %s20, 0
      %p73 = por %p71, %p72
      %p74 = scmp.le.s32.totalorder 1, %s14
      %p75 = scmp.lt.s32.totalorder %s14, 3
      %p76 = pnand %p74, %p75
      %p77 = pneg %p76
      // Predicated region
      $region9: #{decoder_rnn_forward.4} parent=5 // pred_check
        _
      $region10: #{decoder_rnn_forward.4} parent=5 // pred_check_branch
        %79 = sbr.rel (%p76) target = $region12
      $region11: #{decoder_rnn_forward.4} parent=5 // pred_region
        %s80 = ssub.s32 %s14, 1
      $region12: #{decoder_rnn_forward.4} parent=5 // pred_fallthru
        _
      %p81 = scmp.lt.s32.totalorder %s14, 2
      // Predicated region
      $region13: #{decoder_rnn_forward.4} parent=5 // pred_check
        %p82 = pneg %p81
      $region14: #{decoder_rnn_forward.4} parent=5 // pred_check_branch
        %84 = sbr.rel (%p82) target = $region16
      $region15: #{decoder_rnn_forward.4} parent=5 // pred_region
        // Predicated region
        $region17: #{decoder_rnn_forward.4} parent=15 // pred_check
          %p85 = pneg %p34
        $region18: #{decoder_rnn_forward.4} parent=15 // pred_check_branch
          %87 = sbr.rel (%p85) target = $region20
        $region19: #{decoder_rnn_forward.4} parent=15 // pred_region
          %s88 = sand.u32 %s24, 1
          %s89 = scalar_lea.sflag [#allocation6], %s88
          %s90 = sand.u32 %s24, 1
          %s91 = smul.addr %s90, 512
          %s92 = scalar_lea.vmem [#allocation5], %s91
          %s93 = smul.u32 16, %s14
          %s95 = ssub.s32 8192, 8192
          %96 = vsyncadd %s89, %s95
          %s97 = smul.addr %s93, 4
          %s98 = smul.addr %s97, 128
          %s99 = scalar_lea.hbm %s0, %s98
          %s100 = sshll.u32 %s92, 4
          %s101 = int_to_ptr.vmem [resolvable:$true] %s100
          %106 = dma.hbm_to_vmem [thread:$0]  %s99, 8192, %s101, %s89, 512, 512, 32
        $region20: #{decoder_rnn_forward.4} parent=15 // pred_fallthru
          _
      $region16: #{decoder_rnn_forward.4} parent=5 // pred_fallthru
        _
      %p107 = scmp.le.s32.totalorder 1, %s14
      %p108 = scmp.lt.s32.totalorder %s14, 3
      %p109 = pnand %p107, %p108
      %p110 = pneg %p109
      // Predicated region
      $region21: #{decoder_rnn_forward.4} parent=5 // pred_check
        _
      $region22: #{decoder_rnn_forward.4} parent=5 // pred_check_branch
        %112 = sbr.rel (%p109) target = $region24
      $region23: #{decoder_rnn_forward.4} parent=5 // pred_region
        %s113 = ssub.s32 %s14, 1
        %s114 = sand.u32 %s27, 1
        %s115 = scalar_lea.sflag [#allocation6], %s114
        %s116 = sand.u32 %s27, 1
        %s117 = smul.addr %s116, 512
        %s118 = scalar_lea.vmem [#allocation5], %s117
        // Predicated region
        $region25: #{decoder_rnn_forward.4} parent=23 // pred_check
          %p119 = pneg %p40
        $region26: #{decoder_rnn_forward.4} parent=23 // pred_check_branch
          %121 = sbr.rel (%p119) target = $region28
        $region27: #{decoder_rnn_forward.4} parent=23 // pred_region
          %122 = dma.done %s115, 8192
        $region28: #{decoder_rnn_forward.4} parent=23 // pred_fallthru
          _
        %s123 = sand.u32 %s27, 1
        %s124 = scalar_lea.sflag [#allocation6], %s123
        %s125 = sand.u32 %s27, 1
        %s126 = smul.addr %s125, 512
        %s127 = scalar_lea.vmem [#allocation5], %s126
        %p128 = pneg %p40
        %p129 = pneg %p37
        %p130 = pneg %p66
        %p131 = pneg %p63
        %s132 = sand.u32 %s53, 1
        %s133 = scalar_lea.sflag [#allocation7], %s132
        %s134 = sand.u32 %s53, 1
        %s135 = smul.addr %s134, 128
        %s136 = scalar_lea.vmem [#allocation8], %s135
        %s137 = smul.u32 16, %s19
        %s138 = smul.u32 16, %s19
        %p140 = scmp.eq.s32.totalorder %s19, 0
        // Predicated region
        $region29: #{decoder_rnn_forward.4} parent=23 // pred_check
          %p141 = pneg %p140
        $region30: #{decoder_rnn_forward.4} parent=23 // pred_check_branch
          %143 = sbr.rel (%p141) target = $region32
        $region31: #{decoder_rnn_forward.4} parent=23 // pred_region
          $region33: #{decoder_rnn_forward.4} parent=31
            #allocation9 [shape = 's32[1]{0}', space=sflag, size = 0x4, scoped, tag = 'scoped memory for decoder_rnn_forward.4']
            #allocation11 [shape = 'u32[9]{0}', space=smem, size = 0x24, scoped, tag = 'DMA stride descriptor']
            %s145 = sshll.u32 1, 14
            %s146 = sxor.u32 4294967295, %s145
            %s148 = sld [smem:[#allocation0]]
            %s149 = sadd.s32 2, %s148
            %s151 = sshll.u32 7, 26
            %s152 = sxor.u32 4294967295, %s151
            %s153 = sand.u32 0, %s152
            %s154 = sshll.u32 %s149, 26
            %s155 = sor.u32 %s153, %s154
            %s156 = sshll.u32 [#allocation2], 4
            %s157 = int_to_ptr.vmem [resolvable:$true] %s156
            %160 = sst [smem:[#allocation11]] 512
            %s161 = scalar_lea.smem [#allocation11], 1
            %162 = sst [smem:[%s161]] 512
            %s163 = scalar_lea.smem [#allocation11], 2
            %164 = sst [smem:[%s163]] 4
            %s165 = scalar_lea.smem [#allocation11], 3
            %166 = sst [smem:[%s165]] 64
            %s167 = scalar_lea.smem [#allocation11], 4
            %168 = sst [smem:[%s167]] 128
            %s169 = scalar_lea.smem [#allocation11], 5
            %170 = sst [smem:[%s169]] 2
            %s171 = scalar_lea.smem [#allocation11], 6
            %172 = sst [smem:[%s171]] 256
            %s173 = scalar_lea.smem [#allocation11], 7
            %174 = sst [smem:[%s173]] 64
            %s175 = scalar_lea.smem [#allocation11], 8
            %176 = sst [smem:[%s175]] 4
            %178 = dma.general %s1, 4096, %s157, [#allocation9], [#allocation10], [#allocation11], %s155, 0
            %s179 = smul.u32 4, 16
            %s180 = smul.u32 %s179, 4
            %s181 = sshll.u32 %s180, 4
            %182 = dma.done [#allocation9], %s181
          %183 = vst [vmem:[#allocation3] sm:$0xff] 0.0
          %184 = vst [vmem:[#allocation4] sm:$0xff] 0.0
        $region32: #{decoder_rnn_forward.4} parent=23 // pred_fallthru
          _
        %v185 = vld [vmem:[#allocation3] sm:$0xff]
        %v186 = vld [vmem:[#allocation4] sm:$0xff]
        %v187 = vld [vmem:[%s118] sm:$0xff]
        %v188 = vld [vmem:[%s118 + $0x8] sm:$0xff]
        %v189 = vld [vmem:[%s118 + $0x10] sm:$0xff]
        %v190 = vld [vmem:[%s118 + $0x18] sm:$0xff]
        %v191 = vpack.c.bf16 %v185, %v185
        %v192 = vld [vmem:[#allocation2] sm:$0xff]
        %v193 = vld [vmem:[#allocation2 + $0x8] sm:$0xff]
        %v194 = vld [vmem:[#allocation2 + $0x10] sm:$0xff]
        %v195 = vld [vmem:[#allocation2 + $0x18] sm:$0xff]
        %v196 = vld [vmem:[#allocation2 + $0x20] sm:$0xff]
        %v197 = vld [vmem:[#allocation2 + $0x28] sm:$0xff]
        %v198 = vld [vmem:[#allocation2 + $0x30] sm:$0xff]
        %v199 = vld [vmem:[#allocation2 + $0x38] sm:$0xff]
        %v200 = vld [vmem:[#allocation2 + $0x40] sm:$0xff]
        %v201 = vld [vmem:[#allocation2 + $0x48] sm:$0xff]
        %v202 = vld [vmem:[#allocation2 + $0x50] sm:$0xff]
        %v203 = vld [vmem:[#allocation2 + $0x58] sm:$0xff]
        %v204 = vld [vmem:[#allocation2 + $0x60] sm:$0xff]
        %v205 = vld [vmem:[#allocation2 + $0x68] sm:$0xff]
        %v206 = vld [vmem:[#allocation2 + $0x70] sm:$0xff]
        %v207 = vld [vmem:[#allocation2 + $0x78] sm:$0xff]
        %v208 = vld [vmem:[#allocation2 + $0x80] sm:$0xff]
        %v209 = vld [vmem:[#allocation2 + $0x88] sm:$0xff]
        %v210 = vld [vmem:[#allocation2 + $0x90] sm:$0xff]
        %v211 = vld [vmem:[#allocation2 + $0x98] sm:$0xff]
        %v212 = vld [vmem:[#allocation2 + $0xa0] sm:$0xff]
        %v213 = vld [vmem:[#allocation2 + $0xa8] sm:$0xff]
        %v214 = vld [vmem:[#allocation2 + $0xb0] sm:$0xff]
        %v215 = vld [vmem:[#allocation2 + $0xb8] sm:$0xff]
        %v216 = vld [vmem:[#allocation2 + $0xc0] sm:$0xff]
        %v217 = vld [vmem:[#allocation2 + $0xc8] sm:$0xff]
        %v218 = vld [vmem:[#allocation2 + $0xd0] sm:$0xff]
        %v219 = vld [vmem:[#allocation2 + $0xd8] sm:$0xff]
        %v220 = vld [vmem:[#allocation2 + $0xe0] sm:$0xff]
        %v221 = vld [vmem:[#allocation2 + $0xe8] sm:$0xff]
        %v222 = vld [vmem:[#allocation2 + $0xf0] sm:$0xff]
        %v223 = vld [vmem:[#allocation2 + $0xf8] sm:$0xff]
        %224 = vmatprep.subr.bf16.mxu0 %v193
        %225 = vmatpush1.bf16.msra.mxu0 %v192
        %226 = vmatprep.subr.bf16.mxu0 %v197
        %227 = vmatpush1.bf16.msra.mxu0 %v196
        %228 = vmatprep.subr.bf16.mxu0 %v201
        %229 = vmatpush1.bf16.msra.mxu0 %v200
        %230 = vmatprep.subr.bf16.mxu0 %v205
        %231 = vmatpush1.bf16.msra.mxu0 %v204
        %232 = vmatprep.subr.bf16.mxu0 %v209
        %233 = vmatpush1.bf16.msra.mxu0 %v208
        %234 = vmatprep.subr.bf16.mxu0 %v213
        %235 = vmatpush1.bf16.msra.mxu0 %v212
        %236 = vmatprep.subr.bf16.mxu0 %v217
        %237 = vmatpush1.bf16.msra.mxu0 %v216
        %238 = vmatprep.subr.bf16.mxu0 %v221
        %239 = vmatpush1.bf16.msra.mxu0 %v220
        %240 = vmatprep.subr.bf16.mxu0 0
        %241 = vmatpush1.bf16.msra.mxu0 0
        %242 = vmatprep.subr.bf16.mxu0 0
        %243 = vmatpush1.bf16.msra.mxu0 0
        %244 = vmatprep.subr.bf16.mxu0 0
        %245 = vmatpush1.bf16.msra.mxu0 0
        %246 = vmatprep.subr.bf16.mxu0 0
        %247 = vmatpush1.bf16.msra.mxu0 0
        %248 = vmatprep.subr.bf16.mxu0 0
        %249 = vmatpush1.bf16.msra.mxu0 0
        %250 = vmatprep.subr.bf16.mxu0 0
        %251 = vmatpush1.bf16.msra.mxu0 0
        %252 = vmatprep.subr.bf16.mxu0 0
        %253 = vmatpush1.bf16.msra.mxu0 0
        %254 = vmatprep.subr.bf16.mxu0 0
        %255 = vmatpush1.bf16.msra.mxu0 0
        %256 = vmatprep.mubr.bf16.mxu0 0
        %257 = vmatmul.mubr.bf16.gmra.mrb[0].mxu0 %v191
        %v258 = vpop.f32.mrb[0].mxu0
        %v259 = vadd.f32 0.0, %v258
        %v260 = vpop.f32.mrb[0].mxu0
        %v261 = vadd.f32 0.0, %v260
        %v262 = vpop.f32.mrb[0].mxu0
        %v263 = vpop.f32.mrb[0].mxu0
        %264 = vdwg.mxu0
        %265 = vmatprep.subr.bf16.mxu0 %v195
        %266 = vmatpush1.bf16.msra.mxu0 %v194
        %267 = vmatprep.subr.bf16.mxu0 %v199
        %268 = vmatpush1.bf16.msra.mxu0 %v198
        %269 = vmatprep.subr.bf16.mxu0 %v203
        %270 = vmatpush1.bf16.msra.mxu0 %v202
        %271 = vmatprep.subr.bf16.mxu0 %v207
        %272 = vmatpush1.bf16.msra.mxu0 %v206
        %273 = vmatprep.subr.bf16.mxu0 %v211
        %274 = vmatpush1.bf16.msra.mxu0 %v210
        %275 = vmatprep.subr.bf16.mxu0 %v215
        %276 = vmatpush1.bf16.msra.mxu0 %v214
        %277 = vmatprep.subr.bf16.mxu0 %v219
        %278 = vmatpush1.bf16.msra.mxu0 %v218
        %279 = vmatprep.subr.bf16.mxu0 %v223
        %280 = vmatpush1.bf16.msra.mxu0 %v222
        %281 = vmatprep.subr.bf16.mxu0 0
        %282 = vmatpush1.bf16.msra.mxu0 0
        %283 = vmatprep.subr.bf16.mxu0 0
        %284 = vmatpush1.bf16.msra.mxu0 0
        %285 = vmatprep.subr.bf16.mxu0 0
        %286 = vmatpush1.bf16.msra.mxu0 0
        %287 = vmatprep.subr.bf16.mxu0 0
        %288 = vmatpush1.bf16.msra.mxu0 0
        %289 = vmatprep.subr.bf16.mxu0 0
        %290 = vmatpush1.bf16.msra.mxu0 0
        %291 = vmatprep.subr.bf16.mxu0 0
        %292 = vmatpush1.bf16.msra.mxu0 0
        %293 = vmatprep.subr.bf16.mxu0 0
        %294 = vmatpush1.bf16.msra.mxu0 0
        %295 = vmatprep.subr.bf16.mxu0 0
        %296 = vmatpush1.bf16.msra.mxu0 0
        %297 = vmatprep.mubr.bf16.mxu0 0
        %298 = vmatmul.mubr.bf16.gmra.mrb[0].mxu0 %v191
        %v299 = vpop.f32.mrb[0].mxu0
        %v300 = vadd.f32 0.0, %v299
        %v301 = vpop.f32.mrb[0].mxu0
        %v302 = vadd.f32 0.0, %v301
        %v303 = vpop.f32.mrb[0].mxu0
        %v304 = vpop.f32.mrb[0].mxu0
        %305 = vdwg.mxu0
        %v306 = vadd.f32 %v187, %v259
        %v307 = vadd.f32 %v188, %v261
        %v308 = vadd.f32 %v189, %v300
        %v309 = vadd.f32 %v190, %v302
        %v310 = vxor.u32 %v306, 2147483648
        %v311 = vmul.f32 %v310, 1.442695
        %v312 = vpow.pop %v311
        %v313 = vadd.f32 %v312, 1.0
        %v314 = vrcp.pop %v313
        %v315 = vmul.f32 1.0, %v314
        %v316 = vxor.u32 %v307, 2147483648
        %v317 = vmul.f32 %v316, 1.442695
        %v318 = vpow.pop %v317
        %v319 = vadd.f32 %v318, 1.0
        %v320 = vrcp.pop %v319
        %v321 = vmul.f32 1.0, %v320
        %v322 = vtanh.pop %v308
        %v323 = vxor.u32 %v309, 2147483648
        %v324 = vmul.f32 %v323, 1.442695
        %v325 = vpow.pop %v324
        %v326 = vadd.f32 %v325, 1.0
        %v327 = vrcp.pop %v326
        %v328 = vmul.f32 1.0, %v327
        %v329 = vmul.f32 %v321, %v186
        %v330 = vmul.f32 %v315, %v322
        %v331 = vadd.f32 %v329, %v330
        %v332 = vtanh.pop %v331
        %v333 = vmul.f32 %v328, %v332
        %334 = vst [vmem:[%s136] sm:$0xff] %v333
        %s335 = scalar_lea.vmem %s118, 32 [#allocation5]
        %v336 = vld [vmem:[%s335] sm:$0xff]
        %v337 = vld [vmem:[%s335 + $0x8] sm:$0xff]
        %v338 = vld [vmem:[%s335 + $0x10] sm:$0xff]
        %v339 = vld [vmem:[%s335 + $0x18] sm:$0xff]
        %v340 = vpack.c.bf16 %v333, %v333
        %v341 = vld [vmem:[#allocation2] sm:$0xff]
        %v342 = vld [vmem:[#allocation2 + $0x8] sm:$0xff]
        %v343 = vld [vmem:[#allocation2 + $0x10] sm:$0xff]
        %v344 = vld [vmem:[#allocation2 + $0x18] sm:$0xff]
        %v345 = vld [vmem:[#allocation2 + $0x20] sm:$0xff]
        %v346 = vld [vmem:[#allocation2 + $0x28] sm:$0xff]
        %v347 = vld [vmem:[#allocation2 + $0x30] sm:$0xff]
        %v348 = vld [vmem:[#allocation2 + $0x38] sm:$0xff]
        %v349 = vld [vmem:[#allocation2 + $0x40] sm:$0xff]
        %v350 = vld [vmem:[#allocation2 + $0x48] sm:$0xff]
        %v351 = vld [vmem:[#allocation2 + $0x50] sm:$0xff]
        %v352 = vld [vmem:[#allocation2 + $0x58] sm:$0xff]
        %v353 = vld [vmem:[#allocation2 + $0x60] sm:$0xff]
        %v354 = vld [vmem:[#allocation2 + $0x68] sm:$0xff]
        %v355 = vld [vmem:[#allocation2 + $0x70] sm:$0xff]
        %v356 = vld [vmem:[#allocation2 + $0x78] sm:$0xff]
        %v357 = vld [vmem:[#allocation2 + $0x80] sm:$0xff]
        %v358 = vld [vmem:[#allocation2 + $0x88] sm:$0xff]
        %v359 = vld [vmem:[#allocation2 + $0x90] sm:$0xff]
        %v360 = vld [vmem:[#allocation2 + $0x98] sm:$0xff]
        %v361 = vld [vmem:[#allocation2 + $0xa0] sm:$0xff]
        %v362 = vld [vmem:[#allocation2 + $0xa8] sm:$0xff]
        %v363 = vld [vmem:[#allocation2 + $0xb0] sm:$0xff]
        %v364 = vld [vmem:[#allocation2 + $0xb8] sm:$0xff]
        %v365 = vld [vmem:[#allocation2 + $0xc0] sm:$0xff]
        %v366 = vld [vmem:[#allocation2 + $0xc8] sm:$0xff]
        %v367 = vld [vmem:[#allocation2 + $0xd0] sm:$0xff]
        %v368 = vld [vmem:[#allocation2 + $0xd8] sm:$0xff]
        %v369 = vld [vmem:[#allocation2 + $0xe0] sm:$0xff]
        %v370 = vld [vmem:[#allocation2 + $0xe8] sm:$0xff]
        %v371 = vld [vmem:[#allocation2 + $0xf0] sm:$0xff]
        %v372 = vld [vmem:[#allocation2 + $0xf8] sm:$0xff]
        %373 = vmatprep.subr.bf16.mxu0 %v342
        %374 = vmatpush1.bf16.msra.mxu0 %v341
        %375 = vmatprep.subr.bf16.mxu0 %v346
        %376 = vmatpush1.bf16.msra.mxu0 %v345
        %377 = vmatprep.subr.bf16.mxu0 %v350
        %378 = vmatpush1.bf16.msra.mxu0 %v349
        %379 = vmatprep.subr.bf16.mxu0 %v354
        %380 = vmatpush1.bf16.msra.mxu0 %v353
        %381 = vmatprep.subr.bf16.mxu0 %v358
        %382 = vmatpush1.bf16.msra.mxu0 %v357
        %383 = vmatprep.subr.bf16.mxu0 %v362
        %384 = vmatpush1.bf16.msra.mxu0 %v361
        %385 = vmatprep.subr.bf16.mxu0 %v366
        %386 = vmatpush1.bf16.msra.mxu0 %v365
        %387 = vmatprep.subr.bf16.mxu0 %v370
        %388 = vmatpush1.bf16.msra.mxu0 %v369
        %389 = vmatprep.subr.bf16.mxu0 0
        %390 = vmatpush1.bf16.msra.mxu0 0
        %391 = vmatprep.subr.bf16.mxu0 0
        %392 = vmatpush1.bf16.msra.mxu0 0
        %393 = vmatprep.subr.bf16.mxu0 0
        %394 = vmatpush1.bf16.msra.mxu0 0
        %395 = vmatprep.subr.bf16.mxu0 0
        %396 = vmatpush1.bf16.msra.mxu0 0
        %397 = vmatprep.subr.bf16.mxu0 0
        %398 = vmatpush1.bf16.msra.mxu0 0
        %399 = vmatprep.subr.bf16.mxu0 0
        %400 = vmatpush1.bf16.msra.mxu0 0
        %401 = vmatprep.subr.bf16.mxu0 0
        %402 = vmatpush1.bf16.msra.mxu0 0
        %403 = vmatprep.subr.bf16.mxu0 0
        %404 = vmatpush1.bf16.msra.mxu0 0
        %405 = vmatprep.mubr.bf16.mxu0 0
        %406 = vmatmul.mubr.bf16.gmra.mrb[0].mxu0 %v340
        %v407 = vpop.f32.mrb[0].mxu0
        %v408 = vadd.f32 0.0, %v407
        %v409 = vpop.f32.mrb[0].mxu0
        %v410 = vadd.f32 0.0, %v409
        %v411 = vpop.f32.mrb[0].mxu0
        %v412 = vpop.f32.mrb[0].mxu0
        %413 = vdwg.mxu0
        %414 = vmatprep.subr.bf16.mxu0 %v344
        %415 = vmatpush1.bf16.msra.mxu0 %v343
        %416 = vmatprep.subr.bf16.mxu0 %v348
        %417 = vmatpush1.bf16.msra.mxu0 %v347
        %418 = vmatprep.subr.bf16.mxu0 %v352
        %419 = vmatpush1.bf16.msra.mxu0 %v351
        %420 = vmatprep.subr.bf16.mxu0 %v356
        %421 = vmatpush1.bf16.msra.mxu0 %v355
        %422 = vmatprep.subr.bf16.mxu0 %v360
        %423 = vmatpush1.bf16.msra.mxu0 %v359
        %424 = vmatprep.subr.bf16.mxu0 %v364
        %425 = vmatpush1.bf16.msra.mxu0 %v363
        %426 = vmatprep.subr.bf16.mxu0 %v368
        %427 = vmatpush1.bf16.msra.mxu0 %v367
        %428 = vmatprep.subr.bf16.mxu0 %v372
        %429 = vmatpush1.bf16.msra.mxu0 %v371
        %430 = vmatprep.subr.bf16.mxu0 0
        %431 = vmatpush1.bf16.msra.mxu0 0
        %432 = vmatprep.subr.bf16.mxu0 0
        %433 = vmatpush1.bf16.msra.mxu0 0
        %434 = vmatprep.subr.bf16.mxu0 0
        %435 = vmatpush1.bf16.msra.mxu0 0
        %436 = vmatprep.subr.bf16.mxu0 0
        %437 = vmatpush1.bf16.msra.mxu0 0
        %438 = vmatprep.subr.bf16.mxu0 0
        %439 = vmatpush1.bf16.msra.mxu0 0
        %440 = vmatprep.subr.bf16.mxu0 0
        %441 = vmatpush1.bf16.msra.mxu0 0
        %442 = vmatprep.subr.bf16.mxu0 0
        %443 = vmatpush1.bf16.msra.mxu0 0
        %444 = vmatprep.subr.bf16.mxu0 0
        %445 = vmatpush1.bf16.msra.mxu0 0
        %446 = vmatprep.mubr.bf16.mxu0 0
        %447 = vmatmul.mubr.bf16.gmra.mrb[0].mxu0 %v340
        %v448 = vpop.f32.mrb[0].mxu0
        %v449 = vadd.f32 0.0, %v448
        %v450 = vpop.f32.mrb[0].mxu0
        %v451 = vadd.f32 0.0, %v450
        %v452 = vpop.f32.mrb[0].mxu0
        %v453 = vpop.f32.mrb[0].mxu0
        %454 = vdwg.mxu0
        %v455 = vadd.f32 %v336, %v408
        %v456 = vadd.f32 %v337, %v410
        %v457 = vadd.f32 %v338, %v449
        %v458 = vadd.f32 %v339, %v451
        %v459 = vxor.u32 %v455, 2147483648
        %v460 = vmul.f32 %v459, 1.442695
        %v461 = vpow.pop %v460
        %v462 = vadd.f32 %v461, 1.0
        %v463 = vrcp.pop %v462
        %v464 = vmul.f32 1.0, %v463
        %v465 = vxor.u32 %v456, 2147483648
        %v466 = vmul.f32 %v465, 1.442695
        %v467 = vpow.pop %v466
        %v468 = vadd.f32 %v467, 1.0
        %v469 = vrcp.pop %v468
        %v470 = vmul.f32 1.0, %v469
        %v471 = vtanh.pop %v457
        %v472 = vxor.u32 %v458, 2147483648
        %v473 = vmul.f32 %v472, 1.442695
        %v474 = vpow.pop %v473
        %v475 = vadd.f32 %v474, 1.0
        %v476 = vrcp.pop %v475
        %v477 = vmul.f32 1.0, %v476
        %v478 = vmul.f32 %v470, %v331
        %v479 = vmul.f32 %v464, %v471
        %v480 = vadd.f32 %v478, %v479
        %v481 = vtanh.pop %v480
        %v482 = vmul.f32 %v477, %v481
        %s483 = scalar_lea.vmem %s136, 8 [#allocation8]
        %484 = vst [vmem:[%s483] sm:$0xff] %v482
        %s485 = scalar_lea.vmem %s118, 64 [#allocation5]
        %v486 = vld [vmem:[%s485] sm:$0xff]
        %v487 = vld [vmem:[%s485 + $0x8] sm:$0xff]
        %v488 = vld [vmem:[%s485 + $0x10] sm:$0xff]
        %v489 = vld [vmem:[%s485 + $0x18] sm:$0xff]
        %v490 = vpack.c.bf16 %v482, %v482
        %v491 = vld [vmem:[#allocation2] sm:$0xff]
        %v492 = vld [vmem:[#allocation2 + $0x8] sm:$0xff]
        %v493 = vld [vmem:[#allocation2 + $0x10] sm:$0xff]
        %v494 = vld [vmem:[#allocation2 + $0x18] sm:$0xff]
        %v495 = vld [vmem:[#allocation2 + $0x20] sm:$0xff]
        %v496 = vld [vmem:[#allocation2 + $0x28] sm:$0xff]
        %v497 = vld [vmem:[#allocation2 + $0x30] sm:$0xff]
        %v498 = vld [vmem:[#allocation2 + $0x38] sm:$0xff]
        %v499 = vld [vmem:[#allocation2 + $0x40] sm:$0xff]
        %v500 = vld [vmem:[#allocation2 + $0x48] sm:$0xff]
        %v501 = vld [vmem:[#allocation2 + $0x50] sm:$0xff]
        %v502 = vld [vmem:[#allocation2 + $0x58] sm:$0xff]
        %v503 = vld [vmem:[#allocation2 + $0x60] sm:$0xff]
        %v504 = vld [vmem:[#allocation2 + $0x68] sm:$0xff]
        %v505 = vld [vmem:[#allocation2 + $0x70] sm:$0xff]
        %v506 = vld [vmem:[#allocation2 + $0x78] sm:$0xff]
        %v507 = vld [vmem:[#allocation2 + $0x80] sm:$0xff]
        %v508 = vld [vmem:[#allocation2 + $0x88] sm:$0xff]
        %v509 = vld [vmem:[#allocation2 + $0x90] sm:$0xff]
        %v510 = vld [vmem:[#allocation2 + $0x98] sm:$0xff]
        %v511 = vld [vmem:[#allocation2 + $0xa0] sm:$0xff]
        %v512 = vld [vmem:[#allocation2 + $0xa8] sm:$0xff]
        %v513 = vld [vmem:[#allocation2 + $0xb0] sm:$0xff]
        %v514 = vld [vmem:[#allocation2 + $0xb8] sm:$0xff]
        %v515 = vld [vmem:[#allocation2 + $0xc0] sm:$0xff]
        %v516 = vld [vmem:[#allocation2 + $0xc8] sm:$0xff]
        %v517 = vld [vmem:[#allocation2 + $0xd0] sm:$0xff]
        %v518 = vld [vmem:[#allocation2 + $0xd8] sm:$0xff]
        %v519 = vld [vmem:[#allocation2 + $0xe0] sm:$0xff]
        %v520 = vld [vmem:[#allocation2 + $0xe8] sm:$0xff]
        %v521 = vld [vmem:[#allocation2 + $0xf0] sm:$0xff]
        %v522 = vld [vmem:[#allocation2 + $0xf8] sm:$0xff]
        %523 = vmatprep.subr.bf16.mxu0 %v492
        %524 = vmatpush1.bf16.msra.mxu0 %v491
        %525 = vmatprep.subr.bf16.mxu0 %v496
        %526 = vmatpush1.bf16.msra.mxu0 %v495
        %527 = vmatprep.subr.bf16.mxu0 %v500
        %528 = vmatpush1.bf16.msra.mxu0 %v499
        %529 = vmatprep.subr.bf16.mxu0 %v504
        %530 = vmatpush1.bf16.msra.mxu0 %v503
        %531 = vmatprep.subr.bf16.mxu0 %v508
        %532 = vmatpush1.bf16.msra.mxu0 %v507
        %533 = vmatprep.subr.bf16.mxu0 %v512
        %534 = vmatpush1.bf16.msra.mxu0 %v511
        %535 = vmatprep.subr.bf16.mxu0 %v516
        %536 = vmatpush1.bf16.msra.mxu0 %v515
        %537 = vmatprep.subr.bf16.mxu0 %v520
        %538 = vmatpush1.bf16.msra.mxu0 %v519
        %539 = vmatprep.subr.bf16.mxu0 0
        %540 = vmatpush1.bf16.msra.mxu0 0
        %541 = vmatprep.subr.bf16.mxu0 0
        %542 = vmatpush1.bf16.msra.mxu0 0
        %543 = vmatprep.subr.bf16.mxu0 0
        %544 = vmatpush1.bf16.msra.mxu0 0
        %545 = vmatprep.subr.bf16.mxu0 0
        %546 = vmatpush1.bf16.msra.mxu0 0
        %547 = vmatprep.subr.bf16.mxu0 0
        %548 = vmatpush1.bf16.msra.mxu0 0
        %549 = vmatprep.subr.bf16.mxu0 0
        %550 = vmatpush1.bf16.msra.mxu0 0
        %551 = vmatprep.subr.bf16.mxu0 0
        %552 = vmatpush1.bf16.msra.mxu0 0
        %553 = vmatprep.subr.bf16.mxu0 0
        %554 = vmatpush1.bf16.msra.mxu0 0
        %555 = vmatprep.mubr.bf16.mxu0 0
        %556 = vmatmul.mubr.bf16.gmra.mrb[0].mxu0 %v490
        %v557 = vpop.f32.mrb[0].mxu0
        %v558 = vadd.f32 0.0, %v557
        %v559 = vpop.f32.mrb[0].mxu0
        %v560 = vadd.f32 0.0, %v559
        %v561 = vpop.f32.mrb[0].mxu0
        %v562 = vpop.f32.mrb[0].mxu0
        %563 = vdwg.mxu0
        %564 = vmatprep.subr.bf16.mxu0 %v494
        %565 = vmatpush1.bf16.msra.mxu0 %v493
        %566 = vmatprep.subr.bf16.mxu0 %v498
        %567 = vmatpush1.bf16.msra.mxu0 %v497
        %568 = vmatprep.subr.bf16.mxu0 %v502
        %569 = vmatpush1.bf16.msra.mxu0 %v501
        %570 = vmatprep.subr.bf16.mxu0 %v506
        %571 = vmatpush1.bf16.msra.mxu0 %v505
        %572 = vmatprep.subr.bf16.mxu0 %v510
        %573 = vmatpush1.bf16.msra.mxu0 %v509
        %574 = vmatprep.subr.bf16.mxu0 %v514
        %575 = vmatpush1.bf16.msra.mxu0 %v513
        %576 = vmatprep.subr.bf16.mxu0 %v518
        %577 = vmatpush1.bf16.msra.mxu0 %v517
        %578 = vmatprep.subr.bf16.mxu0 %v522
        %579 = vmatpush1.bf16.msra.mxu0 %v521
        %580 = vmatprep.subr.bf16.mxu0 0
        %581 = vmatpush1.bf16.msra.mxu0 0
        %582 = vmatprep.subr.bf16.mxu0 0
        %583 = vmatpush1.bf16.msra.mxu0 0
        %584 = vmatprep.subr.bf16.mxu0 0
        %585 = vmatpush1.bf16.msra.mxu0 0
        %586 = vmatprep.subr.bf16.mxu0 0
        %587 = vmatpush1.bf16.msra.mxu0 0
        %588 = vmatprep.subr.bf16.mxu0 0
        %589 = vmatpush1.bf16.msra.mxu0 0
        %590 = vmatprep.subr.bf16.mxu0 0
        %591 = vmatpush1.bf16.msra.mxu0 0
        %592 = vmatprep.subr.bf16.mxu0 0
        %593 = vmatpush1.bf16.msra.mxu0 0
        %594 = vmatprep.subr.bf16.mxu0 0
        %595 = vmatpush1.bf16.msra.mxu0 0
        %596 = vmatprep.mubr.bf16.mxu0 0
        %597 = vmatmul.mubr.bf16.gmra.mrb[0].mxu0 %v490
        %v598 = vpop.f32.mrb[0].mxu0
        %v599 = vadd.f32 0.0, %v598
        %v600 = vpop.f32.mrb[0].mxu0
        %v601 = vadd.f32 0.0, %v600
        %v602 = vpop.f32.mrb[0].mxu0
        %v603 = vpop.f32.mrb[0].mxu0
        %604 = vdwg.mxu0
        %v605 = vadd.f32 %v486, %v558
        %v606 = vadd.f32 %v487, %v560
        %v607 = vadd.f32 %v488, %v599
        %v608 = vadd.f32 %v489, %v601
        %v609 = vxor.u32 %v605, 2147483648
        %v610 = vmul.f32 %v609, 1.442695
        %v611 = vpow.pop %v610
        %v612 = vadd.f32 %v611, 1.0
        %v613 = vrcp.pop %v612
        %v614 = vmul.f32 1.0, %v613
        %v615 = vxor.u32 %v606, 2147483648
        %v616 = vmul.f32 %v615, 1.442695
        %v617 = vpow.pop %v616
        %v618 = vadd.f32 %v617, 1.0
        %v619 = vrcp.pop %v618
        %v620 = vmul.f32 1.0, %v619
        %v621 = vtanh.pop %v607
        %v622 = vxor.u32 %v608, 2147483648
        %v623 = vmul.f32 %v622, 1.442695
        %v624 = vpow.pop %v623
        %v625 = vadd.f32 %v624, 1.0
        %v626 = vrcp.pop %v625
        %v627 = vmul.f32 1.0, %v626
        %v628 = vmul.f32 %v620, %v480
        %v629 = vmul.f32 %v614, %v621
        %v630 = vadd.f32 %v628, %v629
        %v631 = vtanh.pop %v630
        %v632 = vmul.f32 %v627, %v631
        %s633 = scalar_lea.vmem %s136, 16 [#allocation8]
        %634 = vst [vmem:[%s633] sm:$0xff] %v632
        %s635 = scalar_lea.vmem %s118, 96 [#allocation5]
        %v636 = vld [vmem:[%s635] sm:$0xff]
        %v637 = vld [vmem:[%s635 + $0x8] sm:$0xff]
        %v638 = vld [vmem:[%s635 + $0x10] sm:$0xff]
        %v639 = vld [vmem:[%s635 + $0x18] sm:$0xff]
        %v640 = vpack.c.bf16 %v632, %v632
        %v641 = vld [vmem:[#allocation2] sm:$0xff]
        %v642 = vld [vmem:[#allocation2 + $0x8] sm:$0xff]
        %v643 = vld [vmem:[#allocation2 + $0x10] sm:$0xff]
        %v644 = vld [vmem:[#allocation2 + $0x18] sm:$0xff]
        %v645 = vld [vmem:[#allocation2 + $0x20] sm:$0xff]
        %v646 = vld [vmem:[#allocation2 + $0x28] sm:$0xff]
        %v647 = vld [vmem:[#allocation2 + $0x30] sm:$0xff]
        %v648 = vld [vmem:[#allocation2 + $0x38] sm:$0xff]
        %v649 = vld [vmem:[#allocation2 + $0x40] sm:$0xff]
        %v650 = vld [vmem:[#allocation2 + $0x48] sm:$0xff]
        %v651 = vld [vmem:[#allocation2 + $0x50] sm:$0xff]
        %v652 = vld [vmem:[#allocation2 + $0x58] sm:$0xff]
        %v653 = vld [vmem:[#allocation2 + $0x60] sm:$0xff]
        %v654 = vld [vmem:[#allocation2 + $0x68] sm:$0xff]
        %v655 = vld [vmem:[#allocation2 + $0x70] sm:$0xff]
        %v656 = vld [vmem:[#allocation2 + $0x78] sm:$0xff]
        %v657 = vld [vmem:[#allocation2 + $0x80] sm:$0xff]
        %v658 = vld [vmem:[#allocation2 + $0x88] sm:$0xff]
        %v659 = vld [vmem:[#allocation2 + $0x90] sm:$0xff]
        %v660 = vld [vmem:[#allocation2 + $0x98] sm:$0xff]
        %v661 = vld [vmem:[#allocation2 + $0xa0] sm:$0xff]
        %v662 = vld [vmem:[#allocation2 + $0xa8] sm:$0xff]
        %v663 = vld [vmem:[#allocation2 + $0xb0] sm:$0xff]
        %v664 = vld [vmem:[#allocation2 + $0xb8] sm:$0xff]
        %v665 = vld [vmem:[#allocation2 + $0xc0] sm:$0xff]
        %v666 = vld [vmem:[#allocation2 + $0xc8] sm:$0xff]
        %v667 = vld [vmem:[#allocation2 + $0xd0] sm:$0xff]
        %v668 = vld [vmem:[#allocation2 + $0xd8] sm:$0xff]
        %v669 = vld [vmem:[#allocation2 + $0xe0] sm:$0xff]
        %v670 = vld [vmem:[#allocation2 + $0xe8] sm:$0xff]
        %v671 = vld [vmem:[#allocation2 + $0xf0] sm:$0xff]
        %v672 = vld [vmem:[#allocation2 + $0xf8] sm:$0xff]
        %673 = vmatprep.subr.bf16.mxu0 %v642
        %674 = vmatpush1.bf16.msra.mxu0 %v641
        %675 = vmatprep.subr.bf16.mxu0 %v646
        %676 = vmatpush1.bf16.msra.mxu0 %v645
        %677 = vmatprep.subr.bf16.mxu0 %v650
        %678 = vmatpush1.bf16.msra.mxu0 %v649
        %679 = vmatprep.subr.bf16.mxu0 %v654
        %680 = vmatpush1.bf16.msra.mxu0 %v653
        %681 = vmatprep.subr.bf16.mxu0 %v658
        %682 = vmatpush1.bf16.msra.mxu0 %v657
        %683 = vmatprep.subr.bf16.mxu0 %v662
        %684 = vmatpush1.bf16.msra.mxu0 %v661
        %685 = vmatprep.subr.bf16.mxu0 %v666
        %686 = vmatpush1.bf16.msra.mxu0 %v665
        %687 = vmatprep.subr.bf16.mxu0 %v670
        %688 = vmatpush1.bf16.msra.mxu0 %v669
        %689 = vmatprep.subr.bf16.mxu0 0
        %690 = vmatpush1.bf16.msra.mxu0 0
        %691 = vmatprep.subr.bf16.mxu0 0
        %692 = vmatpush1.bf16.msra.mxu0 0
        %693 = vmatprep.subr.bf16.mxu0 0
        %694 = vmatpush1.bf16.msra.mxu0 0
        %695 = vmatprep.subr.bf16.mxu0 0
        %696 = vmatpush1.bf16.msra.mxu0 0
        %697 = vmatprep.subr.bf16.mxu0 0
        %698 = vmatpush1.bf16.msra.mxu0 0
        %699 = vmatprep.subr.bf16.mxu0 0
        %700 = vmatpush1.bf16.msra.mxu0 0
        %701 = vmatprep.subr.bf16.mxu0 0
        %702 = vmatpush1.bf16.msra.mxu0 0
        %703 = vmatprep.subr.bf16.mxu0 0
        %704 = vmatpush1.bf16.msra.mxu0 0
        %705 = vmatprep.mubr.bf16.mxu0 0
        %706 = vmatmul.mubr.bf16.gmra.mrb[0].mxu0 %v640
        %v707 = vpop.f32.mrb[0].mxu0
        %v708 = vadd.f32 0.0, %v707
        %v709 = vpop.f32.mrb[0].mxu0
        %v710 = vadd.f32 0.0, %v709
        %v711 = vpop.f32.mrb[0].mxu0
        %v712 = vpop.f32.mrb[0].mxu0
        %713 = vdwg.mxu0
        %714 = vmatprep.subr.bf16.mxu0 %v644
        %715 = vmatpush1.bf16.msra.mxu0 %v643
        %716 = vmatprep.subr.bf16.mxu0 %v648
        %717 = vmatpush1.bf16.msra.mxu0 %v647
        %718 = vmatprep.subr.bf16.mxu0 %v652
        %719 = vmatpush1.bf16.msra.mxu0 %v651
        %720 = vmatprep.subr.bf16.mxu0 %v656
        %721 = vmatpush1.bf16.msra.mxu0 %v655
        %722 = vmatprep.subr.bf16.mxu0 %v660
        %723 = vmatpush1.bf16.msra.mxu0 %v659
        %724 = vmatprep.subr.bf16.mxu0 %v664
        %725 = vmatpush1.bf16.msra.mxu0 %v663
        %726 = vmatprep.subr.bf16.mxu0 %v668
        %727 = vmatpush1.bf16.msra.mxu0 %v667
        %728 = vmatprep.subr.bf16.mxu0 %v672
        %729 = vmatpush1.bf16.msra.mxu0 %v671
        %730 = vmatprep.subr.bf16.mxu0 0
        %731 = vmatpush1.bf16.msra.mxu0 0
        %732 = vmatprep.subr.bf16.mxu0 0
        %733 = vmatpush1.bf16.msra.mxu0 0
        %734 = vmatprep.subr.bf16.mxu0 0
        %735 = vmatpush1.bf16.msra.mxu0 0
        %736 = vmatprep.subr.bf16.mxu0 0
        %737 = vmatpush1.bf16.msra.mxu0 0
        %738 = vmatprep.subr.bf16.mxu0 0
        %739 = vmatpush1.bf16.msra.mxu0 0
        %740 = vmatprep.subr.bf16.mxu0 0
        %741 = vmatpush1.bf16.msra.mxu0 0
        %742 = vmatprep.subr.bf16.mxu0 0
        %743 = vmatpush1.bf16.msra.mxu0 0
        %744 = vmatprep.subr.bf16.mxu0 0
        %745 = vmatpush1.bf16.msra.mxu0 0
        %746 = vmatprep.mubr.bf16.mxu0 0
        %747 = vmatmul.mubr.bf16.gmra.mrb[0].mxu0 %v640
        %v748 = vpop.f32.mrb[0].mxu0
        %v749 = vadd.f32 0.0, %v748
        %v750 = vpop.f32.mrb[0].mxu0
        %v751 = vadd.f32 0.0, %v750
        %v752 = vpop.f32.mrb[0].mxu0
        %v753 = vpop.f32.mrb[0].mxu0
        %754 = vdwg.mxu0
        %v755 = vadd.f32 %v636, %v708
        %v756 = vadd.f32 %v637, %v710
        %v757 = vadd.f32 %v638, %v749
        %v758 = vadd.f32 %v639, %v751
        %v759 = vxor.u32 %v755, 2147483648
        %v760 = vmul.f32 %v759, 1.442695
        %v761 = vpow.pop %v760
        %v762 = vadd.f32 %v761, 1.0
        %v763 = vrcp.pop %v762
        %v764 = vmul.f32 1.0, %v763
        %v765 = vxor.u32 %v756, 2147483648
        %v766 = vmul.f32 %v765, 1.442695
        %v767 = vpow.pop %v766
        %v768 = vadd.f32 %v767, 1.0
        %v769 = vrcp.pop %v768
        %v770 = vmul.f32 1.0, %v769
        %v771 = vtanh.pop %v757
        %v772 = vxor.u32 %v758, 2147483648
        %v773 = vmul.f32 %v772, 1.442695
        %v774 = vpow.pop %v773
        %v775 = vadd.f32 %v774, 1.0
        %v776 = vrcp.pop %v775
        %v777 = vmul.f32 1.0, %v776
        %v778 = vmul.f32 %v770, %v630
        %v779 = vmul.f32 %v764, %v771
        %v780 = vadd.f32 %v778, %v779
        %v781 = vtanh.pop %v780
        %v782 = vmul.f32 %v777, %v781
        %s783 = scalar_lea.vmem %s136, 24 [#allocation8]
        %784 = vst [vmem:[%s783] sm:$0xff] %v782
        %s785 = scalar_lea.vmem %s118, 128 [#allocation5]
        %v786 = vld [vmem:[%s785] sm:$0xff]
        %v787 = vld [vmem:[%s785 + $0x8] sm:$0xff]
        %v788 = vld [vmem:[%s785 + $0x10] sm:$0xff]
        %v789 = vld [vmem:[%s785 + $0x18] sm:$0xff]
        %v790 = vpack.c.bf16 %v782, %v782
        %v791 = vld [vmem:[#allocation2] sm:$0xff]
        %v792 = vld [vmem:[#allocation2 + $0x8] sm:$0xff]
        %v793 = vld [vmem:[#allocation2 + $0x10] sm:$0xff]
        %v794 = vld [vmem:[#allocation2 + $0x18] sm:$0xff]
        %v795 = vld [vmem:[#allocation2 + $0x20] sm:$0xff]
        %v796 = vld [vmem:[#allocation2 + $0x28] sm:$0xff]
        %v797 = vld [vmem:[#allocation2 + $0x30] sm:$0xff]
        %v798 = vld [vmem:[#allocation2 + $0x38] sm:$0xff]
        %v799 = vld [vmem:[#allocation2 + $0x40] sm:$0xff]
        %v800 = vld [vmem:[#allocation2 + $0x48] sm:$0xff]
        %v801 = vld [vmem:[#allocation2 + $0x50] sm:$0xff]
        %v802 = vld [vmem:[#allocation2 + $0x58] sm:$0xff]
        %v803 = vld [vmem:[#allocation2 + $0x60] sm:$0xff]
        %v804 = vld [vmem:[#allocation2 + $0x68] sm:$0xff]
        %v805 = vld [vmem:[#allocation2 + $0x70] sm:$0xff]
        %v806 = vld [vmem:[#allocation2 + $0x78] sm:$0xff]
        %v807 = vld [vmem:[#allocation2 + $0x80] sm:$0xff]
        %v808 = vld [vmem:[#allocation2 + $0x88] sm:$0xff]
        %v809 = vld [vmem:[#allocation2 + $0x90] sm:$0xff]
        %v810 = vld [vmem:[#allocation2 + $0x98] sm:$0xff]
        %v811 = vld [vmem:[#allocation2 + $0xa0] sm:$0xff]
        %v812 = vld [vmem:[#allocation2 + $0xa8] sm:$0xff]
        %v813 = vld [vmem:[#allocation2 + $0xb0] sm:$0xff]
        %v814 = vld [vmem:[#allocation2 + $0xb8] sm:$0xff]
        %v815 = vld [vmem:[#allocation2 + $0xc0] sm:$0xff]
        %v816 = vld [vmem:[#allocation2 + $0xc8] sm:$0xff]
        %v817 = vld [vmem:[#allocation2 + $0xd0] sm:$0xff]
        %v818 = vld [vmem:[#allocation2 + $0xd8] sm:$0xff]
        %v819 = vld [vmem:[#allocation2 + $0xe0] sm:$0xff]
        %v820 = vld [vmem:[#allocation2 + $0xe8] sm:$0xff]
        %v821 = vld [vmem:[#allocation2 + $0xf0] sm:$0xff]
        %v822 = vld [vmem:[#allocation2 + $0xf8] sm:$0xff]
        %823 = vmatprep.subr.bf16.mxu0 %v792
        %824 = vmatpush1.bf16.msra.mxu0 %v791
        %825 = vmatprep.subr.bf16.mxu0 %v796
        %826 = vmatpush1.bf16.msra.mxu0 %v795
        %827 = vmatprep.subr.bf16.mxu0 %v800
        %828 = vmatpush1.bf16.msra.mxu0 %v799
        %829 = vmatprep.subr.bf16.mxu0 %v804
        %830 = vmatpush1.bf16.msra.mxu0 %v803
        %831 = vmatprep.subr.bf16.mxu0 %v808
        %832 = vmatpush1.bf16.msra.mxu0 %v807
        %833 = vmatprep.subr.bf16.mxu0 %v812
        %834 = vmatpush1.bf16.msra.mxu0 %v811
        %835 = vmatprep.subr.bf16.mxu0 %v816
        %836 = vmatpush1.bf16.msra.mxu0 %v815
        %837 = vmatprep.subr.bf16.mxu0 %v820
        %838 = vmatpush1.bf16.msra.mxu0 %v819
        %839 = vmatprep.subr.bf16.mxu0 0
        %840 = vmatpush1.bf16.msra.mxu0 0
        %841 = vmatprep.subr.bf16.mxu0 0
        %842 = vmatpush1.bf16.msra.mxu0 0
        %843 = vmatprep.subr.bf16.mxu0 0
        %844 = vmatpush1.bf16.msra.mxu0 0
        %845 = vmatprep.subr.bf16.mxu0 0
        %846 = vmatpush1.bf16.msra.mxu0 0
        %847 = vmatprep.subr.bf16.mxu0 0
        %848 = vmatpush1.bf16.msra.mxu0 0
        %849 = vmatprep.subr.bf16.mxu0 0
        %850 = vmatpush1.bf16.msra.mxu0 0
        %851 = vmatprep.subr.bf16.mxu0 0
        %852 = vmatpush1.bf16.msra.mxu0 0
        %853 = vmatprep.subr.bf16.mxu0 0
        %854 = vmatpush1.bf16.msra.mxu0 0
        %855 = vmatprep.mubr.bf16.mxu0 0
        %856 = vmatmul.mubr.bf16.gmra.mrb[0].mxu0 %v790
        %v857 = vpop.f32.mrb[0].mxu0
        %v858 = vadd.f32 0.0, %v857
        %v859 = vpop.f32.mrb[0].mxu0
        %v860 = vadd.f32 0.0, %v859
        %v861 = vpop.f32.mrb[0].mxu0
        %v862 = vpop.f32.mrb[0].mxu0
        %863 = vdwg.mxu0
        %864 = vmatprep.subr.bf16.mxu0 %v794
        %865 = vmatpush1.bf16.msra.mxu0 %v793
        %866 = vmatprep.subr.bf16.mxu0 %v798
        %867 = vmatpush1.bf16.msra.mxu0 %v797
        %868 = vmatprep.subr.bf16.mxu0 %v802
        %869 = vmatpush1.bf16.msra.mxu0 %v801
        %870 = vmatprep.subr.bf16.mxu0 %v806
        %871 = vmatpush1.bf16.msra.mxu0 %v805
        %872 = vmatprep.subr.bf16.mxu0 %v810
        %873 = vmatpush1.bf16.msra.mxu0 %v809
        %874 = vmatprep.subr.bf16.mxu0 %v814
        %875 = vmatpush1.bf16.msra.mxu0 %v813
        %876 = vmatprep.subr.bf16.mxu0 %v818
        %877 = vmatpush1.bf16.msra.mxu0 %v817
        %878 = vmatprep.subr.bf16.mxu0 %v822
        %879 = vmatpush1.bf16.msra.mxu0 %v821
        %880 = vmatprep.subr.bf16.mxu0 0
        %881 = vmatpush1.bf16.msra.mxu0 0
        %882 = vmatprep.subr.bf16.mxu0 0
        %883 = vmatpush1.bf16.msra.mxu0 0
        %884 = vmatprep.subr.bf16.mxu0 0
        %885 = vmatpush1.bf16.msra.mxu0 0
        %886 = vmatprep.subr.bf16.mxu0 0
        %887 = vmatpush1.bf16.msra.mxu0 0
        %888 = vmatprep.subr.bf16.mxu0 0
        %889 = vmatpush1.bf16.msra.mxu0 0
        %890 = vmatprep.subr.bf16.mxu0 0
        %891 = vmatpush1.bf16.msra.mxu0 0
        %892 = vmatprep.subr.bf16.mxu0 0
        %893 = vmatpush1.bf16.msra.mxu0 0
        %894 = vmatprep.subr.bf16.mxu0 0
        %895 = vmatpush1.bf16.msra.mxu0 0
        %896 = vmatprep.mubr.bf16.mxu0 0
        %897 = vmatmul.mubr.bf16.gmra.mrb[0].mxu0 %v790
        %v898 = vpop.f32.mrb[0].mxu0
        %v899 = vadd.f32 0.0, %v898
        %v900 = vpop.f32.mrb[0].mxu0
        %v901 = vadd.f32 0.0, %v900
        %v902 = vpop.f32.mrb[0].mxu0
        %v903 = vpop.f32.mrb[0].mxu0
        %904 = vdwg.mxu0
        %v905 = vadd.f32 %v786, %v858
        %v906 = vadd.f32 %v787, %v860
        %v907 = vadd.f32 %v788, %v899
        %v908 = vadd.f32 %v789, %v901
        %v909 = vxor.u32 %v905, 2147483648
        %v910 = vmul.f32 %v909, 1.442695
        %v911 = vpow.pop %v910
        %v912 = vadd.f32 %v911, 1.0
        %v913 = vrcp.pop %v912
        %v914 = vmul.f32 1.0, %v913
        %v915 = vxor.u32 %v906, 2147483648
        %v916 = vmul.f32 %v915, 1.442695
        %v917 = vpow.pop %v916
        %v918 = vadd.f32 %v917, 1.0
        %v919 = vrcp.pop %v918
        %v920 = vmul.f32 1.0, %v919
        %v921 = vtanh.pop %v907
        %v922 = vxor.u32 %v908, 2147483648
        %v923 = vmul.f32 %v922, 1.442695
        %v924 = vpow.pop %v923
        %v925 = vadd.f32 %v924, 1.0
        %v926 = vrcp.pop %v925
        %v927 = vmul.f32 1.0, %v926
        %v928 = vmul.f32 %v920, %v780
        %v929 = vmul.f32 %v914, %v921
        %v930 = vadd.f32 %v928, %v929
        %v931 = vtanh.pop %v930
        %v932 = vmul.f32 %v927, %v931
        %s933 = scalar_lea.vmem %s136, 32 [#allocation8]
        %934 = vst [vmem:[%s933] sm:$0xff] %v932
        %s935 = scalar_lea.vmem %s118, 160 [#allocation5]
        %v936 = vld [vmem:[%s935] sm:$0xff]
        %v937 = vld [vmem:[%s935 + $0x8] sm:$0xff]
        %v938 = vld [vmem:[%s935 + $0x10] sm:$0xff]
        %v939 = vld [vmem:[%s935 + $0x18] sm:$0xff]
        %v940 = vpack.c.bf16 %v932, %v932
        %v941 = vld [vmem:[#allocation2] sm:$0xff]
        %v942 = vld [vmem:[#allocation2 + $0x8] sm:$0xff]
        %v943 = vld [vmem:[#allocation2 + $0x10] sm:$0xff]
        %v944 = vld [vmem:[#allocation2 + $0x18] sm:$0xff]
        %v945 = vld [vmem:[#allocation2 + $0x20] sm:$0xff]
        %v946 = vld [vmem:[#allocation2 + $0x28] sm:$0xff]
        %v947 = vld [vmem:[#allocation2 + $0x30] sm:$0xff]
        %v948 = vld [vmem:[#allocation2 + $0x38] sm:$0xff]
        %v949 = vld [vmem:[#allocation2 + $0x40] sm:$0xff]
        %v950 = vld [vmem:[#allocation2 + $0x48] sm:$0xff]
        %v951 = vld [vmem:[#allocation2 + $0x50] sm:$0xff]
        %v952 = vld [vmem:[#allocation2 + $0x58] sm:$0xff]
        %v953 = vld [vmem:[#allocation2 + $0x60] sm:$0xff]
        %v954 = vld [vmem:[#allocation2 + $0x68] sm:$0xff]
        %v955 = vld [vmem:[#allocation2 + $0x70] sm:$0xff]
        %v956 = vld [vmem:[#allocation2 + $0x78] sm:$0xff]
        %v957 = vld [vmem:[#allocation2 + $0x80] sm:$0xff]
        %v958 = vld [vmem:[#allocation2 + $0x88] sm:$0xff]
        %v959 = vld [vmem:[#allocation2 + $0x90] sm:$0xff]
        %v960 = vld [vmem:[#allocation2 + $0x98] sm:$0xff]
        %v961 = vld [vmem:[#allocation2 + $0xa0] sm:$0xff]
        %v962 = vld [vmem:[#allocation2 + $0xa8] sm:$0xff]
        %v963 = vld [vmem:[#allocation2 + $0xb0] sm:$0xff]
        %v964 = vld [vmem:[#allocation2 + $0xb8] sm:$0xff]
        %v965 = vld [vmem:[#allocation2 + $0xc0] sm:$0xff]
        %v966 = vld [vmem:[#allocation2 + $0xc8] sm:$0xff]
        %v967 = vld [vmem:[#allocation2 + $0xd0] sm:$0xff]
        %v968 = vld [vmem:[#allocation2 + $0xd8] sm:$0xff]
        %v969 = vld [vmem:[#allocation2 + $0xe0] sm:$0xff]
        %v970 = vld [vmem:[#allocation2 + $0xe8] sm:$0xff]
        %v971 = vld [vmem:[#allocation2 + $0xf0] sm:$0xff]
        %v972 = vld [vmem:[#allocation2 + $0xf8] sm:$0xff]
        %973 = vmatprep.subr.bf16.mxu0 %v942
        %974 = vmatpush1.bf16.msra.mxu0 %v941
        %975 = vmatprep.subr.bf16.mxu0 %v946
        %976 = vmatpush1.bf16.msra.mxu0 %v945
        %977 = vmatprep.subr.bf16.mxu0 %v950
        %978 = vmatpush1.bf16.msra.mxu0 %v949
        %979 = vmatprep.subr.bf16.mxu0 %v954
        %980 = vmatpush1.bf16.msra.mxu0 %v953
        %981 = vmatprep.subr.bf16.mxu0 %v958
        %982 = vmatpush1.bf16.msra.mxu0 %v957
        %983 = vmatprep.subr.bf16.mxu0 %v962
        %984 = vmatpush1.bf16.msra.mxu0 %v961
        %985 = vmatprep.subr.bf16.mxu0 %v966
        %986 = vmatpush1.bf16.msra.mxu0 %v965
        %987 = vmatprep.subr.bf16.mxu0 %v970
        %988 = vmatpush1.bf16.msra.mxu0 %v969
        %989 = vmatprep.subr.bf16.mxu0 0
        %990 = vmatpush1.bf16.msra.mxu0 0
        %991 = vmatprep.subr.bf16.mxu0 0
        %992 = vmatpush1.bf16.msra.mxu0 0
        %993 = vmatprep.subr.bf16.mxu0 0
        %994 = vmatpush1.bf16.msra.mxu0 0
        %995 = vmatprep.subr.bf16.mxu0 0
        %996 = vmatpush1.bf16.msra.mxu0 0
        %997 = vmatprep.subr.bf16.mxu0 0
        %998 = vmatpush1.bf16.msra.mxu0 0
        %999 = vmatprep.subr.bf16.mxu0 0
        %1000 = vmatpush1.bf16.msra.mxu0 0
        %1001 = vmatprep.subr.bf16.mxu0 0
        %1002 = vmatpush1.bf16.msra.mxu0 0
        %1003 = vmatprep.subr.bf16.mxu0 0
        %1004 = vmatpush1.bf16.msra.mxu0 0
        %1005 = vmatprep.mubr.bf16.mxu0 0
        %1006 = vmatmul.mubr.bf16.gmra.mrb[0].mxu0 %v940
        %v1007 = vpop.f32.mrb[0].mxu0
        %v1008 = vadd.f32 0.0, %v1007
        %v1009 = vpop.f32.mrb[0].mxu0
        %v1010 = vadd.f32 0.0, %v1009
        %v1011 = vpop.f32.mrb[0].mxu0
        %v1012 = vpop.f32.mrb[0].mxu0
        %1013 = vdwg.mxu0
        %1014 = vmatprep.subr.bf16.mxu0 %v944
        %1015 = vmatpush1.bf16.msra.mxu0 %v943
        %1016 = vmatprep.subr.bf16.mxu0 %v948
        %1017 = vmatpush1.bf16.msra.mxu0 %v947
        %1018 = vmatprep.subr.bf16.mxu0 %v952
        %1019 = vmatpush1.bf16.msra.mxu0 %v951
        %1020 = vmatprep.subr.bf16.mxu0 %v956
        %1021 = vmatpush1.bf16.msra.mxu0 %v955
        %1022 = vmatprep.subr.bf16.mxu0 %v960
        %1023 = vmatpush1.bf16.msra.mxu0 %v959
        %1024 = vmatprep.subr.bf16.mxu0 %v964
        %1025 = vmatpush1.bf16.msra.mxu0 %v963
        %1026 = vmatprep.subr.bf16.mxu0 %v968
        %1027 = vmatpush1.bf16.msra.mxu0 %v967
        %1028 = vmatprep.subr.bf16.mxu0 %v972
        %1029 = vmatpush1.bf16.msra.mxu0 %v971
        %1030 = vmatprep.subr.bf16.mxu0 0
        %1031 = vmatpush1.bf16.msra.mxu0 0
        %1032 = vmatprep.subr.bf16.mxu0 0
        %1033 = vmatpush1.bf16.msra.mxu0 0
        %1034 = vmatprep.subr.bf16.mxu0 0
        %1035 = vmatpush1.bf16.msra.mxu0 0
        %1036 = vmatprep.subr.bf16.mxu0 0
        %1037 = vmatpush1.bf16.msra.mxu0 0
        %1038 = vmatprep.subr.bf16.mxu0 0
        %1039 = vmatpush1.bf16.msra.mxu0 0
        %1040 = vmatprep.subr.bf16.mxu0 0
        %1041 = vmatpush1.bf16.msra.mxu0 0
        %1042 = vmatprep.subr.bf16.mxu0 0
        %1043 = vmatpush1.bf16.msra.mxu0 0
        %1044 = vmatprep.subr.bf16.mxu0 0
        %1045 = vmatpush1.bf16.msra.mxu0 0
        %1046 = vmatprep.mubr.bf16.mxu0 0
        %1047 = vmatmul.mubr.bf16.gmra.mrb[0].mxu0 %v940
        %v1048 = vpop.f32.mrb[0].mxu0
        %v1049 = vadd.f32 0.0, %v1048
        %v1050 = vpop.f32.mrb[0].mxu0
        %v1051 = vadd.f32 0.0, %v1050
        %v1052 = vpop.f32.mrb[0].mxu0
        %v1053 = vpop.f32.mrb[0].mxu0
        %1054 = vdwg.mxu0
        %v1055 = vadd.f32 %v936, %v1008
        %v1056 = vadd.f32 %v937, %v1010
        %v1057 = vadd.f32 %v938, %v1049
        %v1058 = vadd.f32 %v939, %v1051
        %v1059 = vxor.u32 %v1055, 2147483648
        %v1060 = vmul.f32 %v1059, 1.442695
        %v1061 = vpow.pop %v1060
        %v1062 = vadd.f32 %v1061, 1.0
        %v1063 = vrcp.pop %v1062
        %v1064 = vmul.f32 1.0, %v1063
        %v1065 = vxor.u32 %v1056, 2147483648
        %v1066 = vmul.f32 %v1065, 1.442695
        %v1067 = vpow.pop %v1066
        %v1068 = vadd.f32 %v1067, 1.0
        %v1069 = vrcp.pop %v1068
        %v1070 = vmul.f32 1.0, %v1069
        %v1071 = vtanh.pop %v1057
        %v1072 = vxor.u32 %v1058, 2147483648
        %v1073 = vmul.f32 %v1072, 1.442695
        %v1074 = vpow.pop %v1073
        %v1075 = vadd.f32 %v1074, 1.0
        %v1076 = vrcp.pop %v1075
        %v1077 = vmul.f32 1.0, %v1076
        %v1078 = vmul.f32 %v1070, %v930
        %v1079 = vmul.f32 %v1064, %v1071
        %v1080 = vadd.f32 %v1078, %v1079
        %v1081 = vtanh.pop %v1080
        %v1082 = vmul.f32 %v1077, %v1081
        %s1083 = scalar_lea.vmem %s136, 40 [#allocation8]
        %1084 = vst [vmem:[%s1083] sm:$0xff] %v1082
        %s1085 = scalar_lea.vmem %s118, 192 [#allocation5]
        %v1086 = vld [vmem:[%s1085] sm:$0xff]
        %v1087 = vld [vmem:[%s1085 + $0x8] sm:$0xff]
        %v1088 = vld [vmem:[%s1085 + $0x10] sm:$0xff]
        %v1089 = vld [vmem:[%s1085 + $0x18] sm:$0xff]
        %v1090 = vpack.c.bf16 %v1082, %v1082
        %v1091 = vld [vmem:[#allocation2] sm:$0xff]
        %v1092 = vld [vmem:[#allocation2 + $0x8] sm:$0xff]
        %v1093 = vld [vmem:[#allocation2 + $0x10] sm:$0xff]
        %v1094 = vld [vmem:[#allocation2 + $0x18] sm:$0xff]
        %v1095 = vld [vmem:[#allocation2 + $0x20] sm:$0xff]
        %v1096 = vld [vmem:[#allocation2 + $0x28] sm:$0xff]
        %v1097 = vld [vmem:[#allocation2 + $0x30] sm:$0xff]
        %v1098 = vld [vmem:[#allocation2 + $0x38] sm:$0xff]
        %v1099 = vld [vmem:[#allocation2 + $0x40] sm:$0xff]
        %v1100 = vld [vmem:[#allocation2 + $0x48] sm:$0xff]
        %v1101 = vld [vmem:[#allocation2 + $0x50] sm:$0xff]
        %v1102 = vld [vmem:[#allocation2 + $0x58] sm:$0xff]
        %v1103 = vld [vmem:[#allocation2 + $0x60] sm:$0xff]
        %v1104 = vld [vmem:[#allocation2 + $0x68] sm:$0xff]
        %v1105 = vld [vmem:[#allocation2 + $0x70] sm:$0xff]
        %v1106 = vld [vmem:[#allocation2 + $0x78] sm:$0xff]
        %v1107 = vld [vmem:[#allocation2 + $0x80] sm:$0xff]
        %v1108 = vld [vmem:[#allocation2 + $0x88] sm:$0xff]
        %v1109 = vld [vmem:[#allocation2 + $0x90] sm:$0xff]
        %v1110 = vld [vmem:[#allocation2 + $0x98] sm:$0xff]
        %v1111 = vld [vmem:[#allocation2 + $0xa0] sm:$0xff]
        %v1112 = vld [vmem:[#allocation2 + $0xa8] sm:$0xff]
        %v1113 = vld [vmem:[#allocation2 + $0xb0] sm:$0xff]
        %v1114 = vld [vmem:[#allocation2 + $0xb8] sm:$0xff]
        %v1115 = vld [vmem:[#allocation2 + $0xc0] sm:$0xff]
        %v1116 = vld [vmem:[#allocation2 + $0xc8] sm:$0xff]
        %v1117 = vld [vmem:[#allocation2 + $0xd0] sm:$0xff]
        %v1118 = vld [vmem:[#allocation2 + $0xd8] sm:$0xff]
        %v1119 = vld [vmem:[#allocation2 + $0xe0] sm:$0xff]
        %v1120 = vld [vmem:[#allocation2 + $0xe8] sm:$0xff]
        %v1121 = vld [vmem:[#allocation2 + $0xf0] sm:$0xff]
        %v1122 = vld [vmem:[#allocation2 + $0xf8] sm:$0xff]
        %1123 = vmatprep.subr.bf16.mxu0 %v1092
        %1124 = vmatpush1.bf16.msra.mxu0 %v1091
        %1125 = vmatprep.subr.bf16.mxu0 %v1096
        %1126 = vmatpush1.bf16.msra.mxu0 %v1095
        %1127 = vmatprep.subr.bf16.mxu0 %v1100
        %1128 = vmatpush1.bf16.msra.mxu0 %v1099
        %1129 = vmatprep.subr.bf16.mxu0 %v1104
        %1130 = vmatpush1.bf16.msra.mxu0 %v1103
        %1131 = vmatprep.subr.bf16.mxu0 %v1108
        %1132 = vmatpush1.bf16.msra.mxu0 %v1107
        %1133 = vmatprep.subr.bf16.mxu0 %v1112
        %1134 = vmatpush1.bf16.msra.mxu0 %v1111
        %1135 = vmatprep.subr.bf16.mxu0 %v1116
        %1136 = vmatpush1.bf16.msra.mxu0 %v1115
        %1137 = vmatprep.subr.bf16.mxu0 %v1120
        %1138 = vmatpush1.bf16.msra.mxu0 %v1119
        %1139 = vmatprep.subr.bf16.mxu0 0
        %1140 = vmatpush1.bf16.msra.mxu0 0
        %1141 = vmatprep.subr.bf16.mxu0 0
        %1142 = vmatpush1.bf16.msra.mxu0 0
        %1143 = vmatprep.subr.bf16.mxu0 0
        %1144 = vmatpush1.bf16.msra.mxu0 0
        %1145 = vmatprep.subr.bf16.mxu0 0
        %1146 = vmatpush1.bf16.msra.mxu0 0
        %1147 = vmatprep.subr.bf16.mxu0 0
        %1148 = vmatpush1.bf16.msra.mxu0 0
        %1149 = vmatprep.subr.bf16.mxu0 0
        %1150 = vmatpush1.bf16.msra.mxu0 0
        %1151 = vmatprep.subr.bf16.mxu0 0
        %1152 = vmatpush1.bf16.msra.mxu0 0
        %1153 = vmatprep.subr.bf16.mxu0 0
        %1154 = vmatpush1.bf16.msra.mxu0 0
        %1155 = vmatprep.mubr.bf16.mxu0 0
        %1156 = vmatmul.mubr.bf16.gmra.mrb[0].mxu0 %v1090
        %v1157 = vpop.f32.mrb[0].mxu0
        %v1158 = vadd.f32 0.0, %v1157
        %v1159 = vpop.f32.mrb[0].mxu0
        %v1160 = vadd.f32 0.0, %v1159
        %v1161 = vpop.f32.mrb[0].mxu0
        %v1162 = vpop.f32.mrb[0].mxu0
        %1163 = vdwg.mxu0
        %1164 = vmatprep.subr.bf16.mxu0 %v1094
        %1165 = vmatpush1.bf16.msra.mxu0 %v1093
        %1166 = vmatprep.subr.bf16.mxu0 %v1098
        %1167 = vmatpush1.bf16.msra.mxu0 %v1097
        %1168 = vmatprep.subr.bf16.mxu0 %v1102
        %1169 = vmatpush1.bf16.msra.mxu0 %v1101
        %1170 = vmatprep.subr.bf16.mxu0 %v1106
        %1171 = vmatpush1.bf16.msra.mxu0 %v1105
        %1172 = vmatprep.subr.bf16.mxu0 %v1110
        %1173 = vmatpush1.bf16.msra.mxu0 %v1109
        %1174 = vmatprep.subr.bf16.mxu0 %v1114
        %1175 = vmatpush1.bf16.msra.mxu0 %v1113
        %1176 = vmatprep.subr.bf16.mxu0 %v1118
        %1177 = vmatpush1.bf16.msra.mxu0 %v1117
        %1178 = vmatprep.subr.bf16.mxu0 %v1122
        %1179 = vmatpush1.bf16.msra.mxu0 %v1121
        %1180 = vmatprep.subr.bf16.mxu0 0
        %1181 = vmatpush1.bf16.msra.mxu0 0
        %1182 = vmatprep.subr.bf16.mxu0 0
        %1183 = vmatpush1.bf16.msra.mxu0 0
        %1184 = vmatprep.subr.bf16.mxu0 0
        %1185 = vmatpush1.bf16.msra.mxu0 0
        %1186 = vmatprep.subr.bf16.mxu0 0
        %1187 = vmatpush1.bf16.msra.mxu0 0
        %1188 = vmatprep.subr.bf16.mxu0 0
        %1189 = vmatpush1.bf16.msra.mxu0 0
        %1190 = vmatprep.subr.bf16.mxu0 0
        %1191 = vmatpush1.bf16.msra.mxu0 0
        %1192 = vmatprep.subr.bf16.mxu0 0
        %1193 = vmatpush1.bf16.msra.mxu0 0
        %1194 = vmatprep.subr.bf16.mxu0 0
        %1195 = vmatpush1.bf16.msra.mxu0 0
        %1196 = vmatprep.mubr.bf16.mxu0 0
        %1197 = vmatmul.mubr.bf16.gmra.mrb[0].mxu0 %v1090
        %v1198 = vpop.f32.mrb[0].mxu0
        %v1199 = vadd.f32 0.0, %v1198
        %v1200 = vpop.f32.mrb[0].mxu0
        %v1201 = vadd.f32 0.0, %v1200
        %v1202 = vpop.f32.mrb[0].mxu0
        %v1203 = vpop.f32.mrb[0].mxu0
        %1204 = vdwg.mxu0
        %v1205 = vadd.f32 %v1086, %v1158
        %v1206 = vadd.f32 %v1087, %v1160
        %v1207 = vadd.f32 %v1088, %v1199
        %v1208 = vadd.f32 %v1089, %v1201
        %v1209 = vxor.u32 %v1205, 2147483648
        %v1210 = vmul.f32 %v1209, 1.442695
        %v1211 = vpow.pop %v1210
        %v1212 = vadd.f32 %v1211, 1.0
        %v1213 = vrcp.pop %v1212
        %v1214 = vmul.f32 1.0, %v1213
        %v1215 = vxor.u32 %v1206, 2147483648
        %v1216 = vmul.f32 %v1215, 1.442695
        %v1217 = vpow.pop %v1216
        %v1218 = vadd.f32 %v1217, 1.0
        %v1219 = vrcp.pop %v1218
        %v1220 = vmul.f32 1.0, %v1219
        %v1221 = vtanh.pop %v1207
        %v1222 = vxor.u32 %v1208, 2147483648
        %v1223 = vmul.f32 %v1222, 1.442695
        %v1224 = vpow.pop %v1223
        %v1225 = vadd.f32 %v1224, 1.0
        %v1226 = vrcp.pop %v1225
        %v1227 = vmul.f32 1.0, %v1226
        %v1228 = vmul.f32 %v1220, %v1080
        %v1229 = vmul.f32 %v1214, %v1221
        %v1230 = vadd.f32 %v1228, %v1229
        %v1231 = vtanh.pop %v1230
        %v1232 = vmul.f32 %v1227, %v1231
        %s1233 = scalar_lea.vmem %s136, 48 [#allocation8]
        %1234 = vst [vmem:[%s1233] sm:$0xff] %v1232
        %s1235 = scalar_lea.vmem %s118, 224 [#allocation5]
        %v1236 = vld [vmem:[%s1235] sm:$0xff]
        %v1237 = vld [vmem:[%s1235 + $0x8] sm:$0xff]
        %v1238 = vld [vmem:[%s1235 + $0x10] sm:$0xff]
        %v1239 = vld [vmem:[%s1235 + $0x18] sm:$0xff]
        %v1240 = vpack.c.bf16 %v1232, %v1232
        %v1241 = vld [vmem:[#allocation2] sm:$0xff]
        %v1242 = vld [vmem:[#allocation2 + $0x8] sm:$0xff]
        %v1243 = vld [vmem:[#allocation2 + $0x10] sm:$0xff]
        %v1244 = vld [vmem:[#allocation2 + $0x18] sm:$0xff]
        %v1245 = vld [vmem:[#allocation2 + $0x20] sm:$0xff]
        %v1246 = vld [vmem:[#allocation2 + $0x28] sm:$0xff]
        %v1247 = vld [vmem:[#allocation2 + $0x30] sm:$0xff]
        %v1248 = vld [vmem:[#allocation2 + $0x38] sm:$0xff]
        %v1249 = vld [vmem:[#allocation2 + $0x40] sm:$0xff]
        %v1250 = vld [vmem:[#allocation2 + $0x48] sm:$0xff]
        %v1251 = vld [vmem:[#allocation2 + $0x50] sm:$0xff]
        %v1252 = vld [vmem:[#allocation2 + $0x58] sm:$0xff]
        %v1253 = vld [vmem:[#allocation2 + $0x60] sm:$0xff]
        %v1254 = vld [vmem:[#allocation2 + $0x68] sm:$0xff]
        %v1255 = vld [vmem:[#allocation2 + $0x70] sm:$0xff]
        %v1256 = vld [vmem:[#allocation2 + $0x78] sm:$0xff]
        %v1257 = vld [vmem:[#allocation2 + $0x80] sm:$0xff]
        %v1258 = vld [vmem:[#allocation2 + $0x88] sm:$0xff]
        %v1259 = vld [vmem:[#allocation2 + $0x90] sm:$0xff]
        %v1260 = vld [vmem:[#allocation2 + $0x98] sm:$0xff]
        %v1261 = vld [vmem:[#allocation2 + $0xa0] sm:$0xff]
        %v1262 = vld [vmem:[#allocation2 + $0xa8] sm:$0xff]
        %v1263 = vld [vmem:[#allocation2 + $0xb0] sm:$0xff]
        %v1264 = vld [vmem:[#allocation2 + $0xb8] sm:$0xff]
        %v1265 = vld [vmem:[#allocation2 + $0xc0] sm:$0xff]
        %v1266 = vld [vmem:[#allocation2 + $0xc8] sm:$0xff]
        %v1267 = vld [vmem:[#allocation2 + $0xd0] sm:$0xff]
        %v1268 = vld [vmem:[#allocation2 + $0xd8] sm:$0xff]
        %v1269 = vld [vmem:[#allocation2 + $0xe0] sm:$0xff]
        %v1270 = vld [vmem:[#allocation2 + $0xe8] sm:$0xff]
        %v1271 = vld [vmem:[#allocation2 + $0xf0] sm:$0xff]
        %v1272 = vld [vmem:[#allocation2 + $0xf8] sm:$0xff]
        %1273 = vmatprep.subr.bf16.mxu0 %v1242
        %1274 = vmatpush1.bf16.msra.mxu0 %v1241
        %1275 = vmatprep.subr.bf16.mxu0 %v1246
        %1276 = vmatpush1.bf16.msra.mxu0 %v1245
        %1277 = vmatprep.subr.bf16.mxu0 %v1250
        %1278 = vmatpush1.bf16.msra.mxu0 %v1249
        %1279 = vmatprep.subr.bf16.mxu0 %v1254
        %1280 = vmatpush1.bf16.msra.mxu0 %v1253
        %1281 = vmatprep.subr.bf16.mxu0 %v1258
        %1282 = vmatpush1.bf16.msra.mxu0 %v1257
        %1283 = vmatprep.subr.bf16.mxu0 %v1262
        %1284 = vmatpush1.bf16.msra.mxu0 %v1261
        %1285 = vmatprep.subr.bf16.mxu0 %v1266
        %1286 = vmatpush1.bf16.msra.mxu0 %v1265
        %1287 = vmatprep.subr.bf16.mxu0 %v1270
        %1288 = vmatpush1.bf16.msra.mxu0 %v1269
        %1289 = vmatprep.subr.bf16.mxu0 0
        %1290 = vmatpush1.bf16.msra.mxu0 0
        %1291 = vmatprep.subr.bf16.mxu0 0
        %1292 = vmatpush1.bf16.msra.mxu0 0
        %1293 = vmatprep.subr.bf16.mxu0 0
        %1294 = vmatpush1.bf16.msra.mxu0 0
        %1295 = vmatprep.subr.bf16.mxu0 0
        %1296 = vmatpush1.bf16.msra.mxu0 0
        %1297 = vmatprep.subr.bf16.mxu0 0
        %1298 = vmatpush1.bf16.msra.mxu0 0
        %1299 = vmatprep.subr.bf16.mxu0 0
        %1300 = vmatpush1.bf16.msra.mxu0 0
        %1301 = vmatprep.subr.bf16.mxu0 0
        %1302 = vmatpush1.bf16.msra.mxu0 0
        %1303 = vmatprep.subr.bf16.mxu0 0
        %1304 = vmatpush1.bf16.msra.mxu0 0
        %1305 = vmatprep.mubr.bf16.mxu0 0
        %1306 = vmatmul.mubr.bf16.gmra.mrb[0].mxu0 %v1240
        %v1307 = vpop.f32.mrb[0].mxu0
        %v1308 = vadd.f32 0.0, %v1307
        %v1309 = vpop.f32.mrb[0].mxu0
        %v1310 = vadd.f32 0.0, %v1309
        %v1311 = vpop.f32.mrb[0].mxu0
        %v1312 = vpop.f32.mrb[0].mxu0
        %1313 = vdwg.mxu0
        %1314 = vmatprep.subr.bf16.mxu0 %v1244
        %1315 = vmatpush1.bf16.msra.mxu0 %v1243
        %1316 = vmatprep.subr.bf16.mxu0 %v1248
        %1317 = vmatpush1.bf16.msra.mxu0 %v1247
        %1318 = vmatprep.subr.bf16.mxu0 %v1252
        %1319 = vmatpush1.bf16.msra.mxu0 %v1251
        %1320 = vmatprep.subr.bf16.mxu0 %v1256
        %1321 = vmatpush1.bf16.msra.mxu0 %v1255
        %1322 = vmatprep.subr.bf16.mxu0 %v1260
        %1323 = vmatpush1.bf16.msra.mxu0 %v1259
        %1324 = vmatprep.subr.bf16.mxu0 %v1264
        %1325 = vmatpush1.bf16.msra.mxu0 %v1263
        %1326 = vmatprep.subr.bf16.mxu0 %v1268
        %1327 = vmatpush1.bf16.msra.mxu0 %v1267
        %1328 = vmatprep.subr.bf16.mxu0 %v1272
        %1329 = vmatpush1.bf16.msra.mxu0 %v1271
        %1330 = vmatprep.subr.bf16.mxu0 0
        %1331 = vmatpush1.bf16.msra.mxu0 0
        %1332 = vmatprep.subr.bf16.mxu0 0
        %1333 = vmatpush1.bf16.msra.mxu0 0
        %1334 = vmatprep.subr.bf16.mxu0 0
        %1335 = vmatpush1.bf16.msra.mxu0 0
        %1336 = vmatprep.subr.bf16.mxu0 0
        %1337 = vmatpush1.bf16.msra.mxu0 0
        %1338 = vmatprep.subr.bf16.mxu0 0
        %1339 = vmatpush1.bf16.msra.mxu0 0
        %1340 = vmatprep.subr.bf16.mxu0 0
        %1341 = vmatpush1.bf16.msra.mxu0 0
        %1342 = vmatprep.subr.bf16.mxu0 0
        %1343 = vmatpush1.bf16.msra.mxu0 0
        %1344 = vmatprep.subr.bf16.mxu0 0
        %1345 = vmatpush1.bf16.msra.mxu0 0
        %1346 = vmatprep.mubr.bf16.mxu0 0
        %1347 = vmatmul.mubr.bf16.gmra.mrb[0].mxu0 %v1240
        %v1348 = vpop.f32.mrb[0].mxu0
        %v1349 = vadd.f32 0.0, %v1348
        %v1350 = vpop.f32.mrb[0].mxu0
        %v1351 = vadd.f32 0.0, %v1350
        %v1352 = vpop.f32.mrb[0].mxu0
        %v1353 = vpop.f32.mrb[0].mxu0
        %1354 = vdwg.mxu0
        %v1355 = vadd.f32 %v1236, %v1308
        %v1356 = vadd.f32 %v1237, %v1310
        %v1357 = vadd.f32 %v1238, %v1349
        %v1358 = vadd.f32 %v1239, %v1351
        %v1359 = vxor.u32 %v1355, 2147483648
        %v1360 = vmul.f32 %v1359, 1.442695
        %v1361 = vpow.pop %v1360
        %v1362 = vadd.f32 %v1361, 1.0
        %v1363 = vrcp.pop %v1362
        %v1364 = vmul.f32 1.0, %v1363
        %v1365 = vxor.u32 %v1356, 2147483648
        %v1366 = vmul.f32 %v1365, 1.442695
        %v1367 = vpow.pop %v1366
        %v1368 = vadd.f32 %v1367, 1.0
        %v1369 = vrcp.pop %v1368
        %v1370 = vmul.f32 1.0, %v1369
        %v1371 = vtanh.pop %v1357
        %v1372 = vxor.u32 %v1358, 2147483648
        %v1373 = vmul.f32 %v1372, 1.442695
        %v1374 = vpow.pop %v1373
        %v1375 = vadd.f32 %v1374, 1.0
        %v1376 = vrcp.pop %v1375
        %v1377 = vmul.f32 1.0, %v1376
        %v1378 = vmul.f32 %v1370, %v1230
        %v1379 = vmul.f32 %v1364, %v1371
        %v1380 = vadd.f32 %v1378, %v1379
        %v1381 = vtanh.pop %v1380
        %v1382 = vmul.f32 %v1377, %v1381
        %s1383 = scalar_lea.vmem %s136, 56 [#allocation8]
        %1384 = vst [vmem:[%s1383] sm:$0xff] %v1382
        %s1385 = scalar_lea.vmem %s118, 256 [#allocation5]
        %v1386 = vld [vmem:[%s1385] sm:$0xff]
        %v1387 = vld [vmem:[%s1385 + $0x8] sm:$0xff]
        %v1388 = vld [vmem:[%s1385 + $0x10] sm:$0xff]
        %v1389 = vld [vmem:[%s1385 + $0x18] sm:$0xff]
        %v1390 = vpack.c.bf16 %v1382, %v1382
        %v1391 = vld [vmem:[#allocation2] sm:$0xff]
        %v1392 = vld [vmem:[#allocation2 + $0x8] sm:$0xff]
        %v1393 = vld [vmem:[#allocation2 + $0x10] sm:$0xff]
        %v1394 = vld [vmem:[#allocation2 + $0x18] sm:$0xff]
        %v1395 = vld [vmem:[#allocation2 + $0x20] sm:$0xff]
        %v1396 = vld [vmem:[#allocation2 + $0x28] sm:$0xff]
        %v1397 = vld [vmem:[#allocation2 + $0x30] sm:$0xff]
        %v1398 = vld [vmem:[#allocation2 + $0x38] sm:$0xff]
        %v1399 = vld [vmem:[#allocation2 + $0x40] sm:$0xff]
        %v1400 = vld [vmem:[#allocation2 + $0x48] sm:$0xff]
        %v1401 = vld [vmem:[#allocation2 + $0x50] sm:$0xff]
        %v1402 = vld [vmem:[#allocation2 + $0x58] sm:$0xff]
        %v1403 = vld [vmem:[#allocation2 + $0x60] sm:$0xff]
        %v1404 = vld [vmem:[#allocation2 + $0x68] sm:$0xff]
        %v1405 = vld [vmem:[#allocation2 + $0x70] sm:$0xff]
        %v1406 = vld [vmem:[#allocation2 + $0x78] sm:$0xff]
        %v1407 = vld [vmem:[#allocation2 + $0x80] sm:$0xff]
        %v1408 = vld [vmem:[#allocation2 + $0x88] sm:$0xff]
        %v1409 = vld [vmem:[#allocation2 + $0x90] sm:$0xff]
        %v1410 = vld [vmem:[#allocation2 + $0x98] sm:$0xff]
        %v1411 = vld [vmem:[#allocation2 + $0xa0] sm:$0xff]
        %v1412 = vld [vmem:[#allocation2 + $0xa8] sm:$0xff]
        %v1413 = vld [vmem:[#allocation2 + $0xb0] sm:$0xff]
        %v1414 = vld [vmem:[#allocation2 + $0xb8] sm:$0xff]
        %v1415 = vld [vmem:[#allocation2 + $0xc0] sm:$0xff]
        %v1416 = vld [vmem:[#allocation2 + $0xc8] sm:$0xff]
        %v1417 = vld [vmem:[#allocation2 + $0xd0] sm:$0xff]
        %v1418 = vld [vmem:[#allocation2 + $0xd8] sm:$0xff]
        %v1419 = vld [vmem:[#allocation2 + $0xe0] sm:$0xff]
        %v1420 = vld [vmem:[#allocation2 + $0xe8] sm:$0xff]
        %v1421 = vld [vmem:[#allocation2 + $0xf0] sm:$0xff]
        %v1422 = vld [vmem:[#allocation2 + $0xf8] sm:$0xff]
        %1423 = vmatprep.subr.bf16.mxu0 %v1392
        %1424 = vmatpush1.bf16.msra.mxu0 %v1391
        %1425 = vmatprep.subr.bf16.mxu0 %v1396
        %1426 = vmatpush1.bf16.msra.mxu0 %v1395
        %1427 = vmatprep.subr.bf16.mxu0 %v1400
        %1428 = vmatpush1.bf16.msra.mxu0 %v1399
        %1429 = vmatprep.subr.bf16.mxu0 %v1404
        %1430 = vmatpush1.bf16.msra.mxu0 %v1403
        %1431 = vmatprep.subr.bf16.mxu0 %v1408
        %1432 = vmatpush1.bf16.msra.mxu0 %v1407
        %1433 = vmatprep.subr.bf16.mxu0 %v1412
        %1434 = vmatpush1.bf16.msra.mxu0 %v1411
        %1435 = vmatprep.subr.bf16.mxu0 %v1416
        %1436 = vmatpush1.bf16.msra.mxu0 %v1415
        %1437 = vmatprep.subr.bf16.mxu0 %v1420
        %1438 = vmatpush1.bf16.msra.mxu0 %v1419
        %1439 = vmatprep.subr.bf16.mxu0 0
        %1440 = vmatpush1.bf16.msra.mxu0 0
        %1441 = vmatprep.subr.bf16.mxu0 0
        %1442 = vmatpush1.bf16.msra.mxu0 0
        %1443 = vmatprep.subr.bf16.mxu0 0
        %1444 = vmatpush1.bf16.msra.mxu0 0
        %1445 = vmatprep.subr.bf16.mxu0 0
        %1446 = vmatpush1.bf16.msra.mxu0 0
        %1447 = vmatprep.subr.bf16.mxu0 0
        %1448 = vmatpush1.bf16.msra.mxu0 0
        %1449 = vmatprep.subr.bf16.mxu0 0
        %1450 = vmatpush1.bf16.msra.mxu0 0
        %1451 = vmatprep.subr.bf16.mxu0 0
        %1452 = vmatpush1.bf16.msra.mxu0 0
        %1453 = vmatprep.subr.bf16.mxu0 0
        %1454 = vmatpush1.bf16.msra.mxu0 0
        %1455 = vmatprep.mubr.bf16.mxu0 0
        %1456 = vmatmul.mubr.bf16.gmra.mrb[0].mxu0 %v1390
        %v1457 = vpop.f32.mrb[0].mxu0
        %v1458 = vadd.f32 0.0, %v1457
        %v1459 = vpop.f32.mrb[0].mxu0
        %v1460 = vadd.f32 0.0, %v1459
        %v1461 = vpop.f32.mrb[0].mxu0
        %v1462 = vpop.f32.mrb[0].mxu0
        %1463 = vdwg.mxu0
        %1464 = vmatprep.subr.bf16.mxu0 %v1394
        %1465 = vmatpush1.bf16.msra.mxu0 %v1393
        %1466 = vmatprep.subr.bf16.mxu0 %v1398
        %1467 = vmatpush1.bf16.msra.mxu0 %v1397
        %1468 = vmatprep.subr.bf16.mxu0 %v1402
        %1469 = vmatpush1.bf16.msra.mxu0 %v1401
        %1470 = vmatprep.subr.bf16.mxu0 %v1406
        %1471 = vmatpush1.bf16.msra.mxu0 %v1405
        %1472 = vmatprep.subr.bf16.mxu0 %v1410
        %1473 = vmatpush1.bf16.msra.mxu0 %v1409
        %1474 = vmatprep.subr.bf16.mxu0 %v1414
        %1475 = vmatpush1.bf16.msra.mxu0 %v1413
        %1476 = vmatprep.subr.bf16.mxu0 %v1418
        %1477 = vmatpush1.bf16.msra.mxu0 %v1417
        %1478 = vmatprep.subr.bf16.mxu0 %v1422
        %1479 = vmatpush1.bf16.msra.mxu0 %v1421
        %1480 = vmatprep.subr.bf16.mxu0 0
        %1481 = vmatpush1.bf16.msra.mxu0 0
        %1482 = vmatprep.subr.bf16.mxu0 0
        %1483 = vmatpush1.bf16.msra.mxu0 0
        %1484 = vmatprep.subr.bf16.mxu0 0
        %1485 = vmatpush1.bf16.msra.mxu0 0
        %1486 = vmatprep.subr.bf16.mxu0 0
        %1487 = vmatpush1.bf16.msra.mxu0 0
        %1488 = vmatprep.subr.bf16.mxu0 0
        %1489 = vmatpush1.bf16.msra.mxu0 0
        %1490 = vmatprep.subr.bf16.mxu0 0
        %1491 = vmatpush1.bf16.msra.mxu0 0
        %1492 = vmatprep.subr.bf16.mxu0 0
        %1493 = vmatpush1.bf16.msra.mxu0 0
        %1494 = vmatprep.subr.bf16.mxu0 0
        %1495 = vmatpush1.bf16.msra.mxu0 0
        %1496 = vmatprep.mubr.bf16.mxu0 0
        %1497 = vmatmul.mubr.bf16.gmra.mrb[0].mxu0 %v1390
        %v1498 = vpop.f32.mrb[0].mxu0
        %v1499 = vadd.f32 0.0, %v1498
        %v1500 = vpop.f32.mrb[0].mxu0
        %v1501 = vadd.f32 0.0, %v1500
        %v1502 = vpop.f32.mrb[0].mxu0
        %v1503 = vpop.f32.mrb[0].mxu0
        %1504 = vdwg.mxu0
        %v1505 = vadd.f32 %v1386, %v1458
        %v1506 = vadd.f32 %v1387, %v1460
        %v1507 = vadd.f32 %v1388, %v1499
        %v1508 = vadd.f32 %v1389, %v1501
        %v1509 = vxor.u32 %v1505, 2147483648
        %v1510 = vmul.f32 %v1509, 1.442695
        %v1511 = vpow.pop %v1510
        %v1512 = vadd.f32 %v1511, 1.0
        %v1513 = vrcp.pop %v1512
        %v1514 = vmul.f32 1.0, %v1513
        %v1515 = vxor.u32 %v1506, 2147483648
        %v1516 = vmul.f32 %v1515, 1.442695
        %v1517 = vpow.pop %v1516
        %v1518 = vadd.f32 %v1517, 1.0
        %v1519 = vrcp.pop %v1518
        %v1520 = vmul.f32 1.0, %v1519
        %v1521 = vtanh.pop %v1507
        %v1522 = vxor.u32 %v1508, 2147483648
        %v1523 = vmul.f32 %v1522, 1.442695
        %v1524 = vpow.pop %v1523
        %v1525 = vadd.f32 %v1524, 1.0
        %v1526 = vrcp.pop %v1525
        %v1527 = vmul.f32 1.0, %v1526
        %v1528 = vmul.f32 %v1520, %v1380
        %v1529 = vmul.f32 %v1514, %v1521
        %v1530 = vadd.f32 %v1528, %v1529
        %v1531 = vtanh.pop %v1530
        %v1532 = vmul.f32 %v1527, %v1531
        %s1533 = scalar_lea.vmem %s136, 64 [#allocation8]
        %1534 = vst [vmem:[%s1533] sm:$0xff] %v1532
        %s1535 = scalar_lea.vmem %s118, 288 [#allocation5]
        %v1536 = vld [vmem:[%s1535] sm:$0xff]
        %v1537 = vld [vmem:[%s1535 + $0x8] sm:$0xff]
        %v1538 = vld [vmem:[%s1535 + $0x10] sm:$0xff]
        %v1539 = vld [vmem:[%s1535 + $0x18] sm:$0xff]
        %v1540 = vpack.c.bf16 %v1532, %v1532
        %v1541 = vld [vmem:[#allocation2] sm:$0xff]
        %v1542 = vld [vmem:[#allocation2 + $0x8] sm:$0xff]
        %v1543 = vld [vmem:[#allocation2 + $0x10] sm:$0xff]
        %v1544 = vld [vmem:[#allocation2 + $0x18] sm:$0xff]
        %v1545 = vld [vmem:[#allocation2 + $0x20] sm:$0xff]
        %v1546 = vld [vmem:[#allocation2 + $0x28] sm:$0xff]
        %v1547 = vld [vmem:[#allocation2 + $0x30] sm:$0xff]
        %v1548 = vld [vmem:[#allocation2 + $0x38] sm:$0xff]
        %v1549 = vld [vmem:[#allocation2 + $0x40] sm:$0xff]
        %v1550 = vld [vmem:[#allocation2 + $0x48] sm:$0xff]
        %v1551 = vld [vmem:[#allocation2 + $0x50] sm:$0xff]
        %v1552 = vld [vmem:[#allocation2 + $0x58] sm:$0xff]
        %v1553 = vld [vmem:[#allocation2 + $0x60] sm:$0xff]
        %v1554 = vld [vmem:[#allocation2 + $0x68] sm:$0xff]
        %v1555 = vld [vmem:[#allocation2 + $0x70] sm:$0xff]
        %v1556 = vld [vmem:[#allocation2 + $0x78] sm:$0xff]
        %v1557 = vld [vmem:[#allocation2 + $0x80] sm:$0xff]
        %v1558 = vld [vmem:[#allocation2 + $0x88] sm:$0xff]
        %v1559 = vld [vmem:[#allocation2 + $0x90] sm:$0xff]
        %v1560 = vld [vmem:[#allocation2 + $0x98] sm:$0xff]
        %v1561 = vld [vmem:[#allocation2 + $0xa0] sm:$0xff]
        %v1562 = vld [vmem:[#allocation2 + $0xa8] sm:$0xff]
        %v1563 = vld [vmem:[#allocation2 + $0xb0] sm:$0xff]
        %v1564 = vld [vmem:[#allocation2 + $0xb8] sm:$0xff]
        %v1565 = vld [vmem:[#allocation2 + $0xc0] sm:$0xff]
        %v1566 = vld [vmem:[#allocation2 + $0xc8] sm:$0xff]
        %v1567 = vld [vmem:[#allocation2 + $0xd0] sm:$0xff]
        %v1568 = vld [vmem:[#allocation2 + $0xd8] sm:$0xff]
        %v1569 = vld [vmem:[#allocation2 + $0xe0] sm:$0xff]
        %v1570 = vld [vmem:[#allocation2 + $0xe8] sm:$0xff]
        %v1571 = vld [vmem:[#allocation2 + $0xf0] sm:$0xff]
        %v1572 = vld [vmem:[#allocation2 + $0xf8] sm:$0xff]
        %1573 = vmatprep.subr.bf16.mxu0 %v1542
        %1574 = vmatpush1.bf16.msra.mxu0 %v1541
        %1575 = vmatprep.subr.bf16.mxu0 %v1546
        %1576 = vmatpush1.bf16.msra.mxu0 %v1545
        %1577 = vmatprep.subr.bf16.mxu0 %v1550
        %1578 = vmatpush1.bf16.msra.mxu0 %v1549
        %1579 = vmatprep.subr.bf16.mxu0 %v1554
        %1580 = vmatpush1.bf16.msra.mxu0 %v1553
        %1581 = vmatprep.subr.bf16.mxu0 %v1558
        %1582 = vmatpush1.bf16.msra.mxu0 %v1557
        %1583 = vmatprep.subr.bf16.mxu0 %v1562
        %1584 = vmatpush1.bf16.msra.mxu0 %v1561
        %1585 = vmatprep.subr.bf16.mxu0 %v1566
        %1586 = vmatpush1.bf16.msra.mxu0 %v1565
        %1587 = vmatprep.subr.bf16.mxu0 %v1570
        %1588 = vmatpush1.bf16.msra.mxu0 %v1569
        %1589 = vmatprep.subr.bf16.mxu0 0
        %1590 = vmatpush1.bf16.msra.mxu0 0
        %1591 = vmatprep.subr.bf16.mxu0 0
        %1592 = vmatpush1.bf16.msra.mxu0 0
        %1593 = vmatprep.subr.bf16.mxu0 0
        %1594 = vmatpush1.bf16.msra.mxu0 0
        %1595 = vmatprep.subr.bf16.mxu0 0
        %1596 = vmatpush1.bf16.msra.mxu0 0
        %1597 = vmatprep.subr.bf16.mxu0 0
        %1598 = vmatpush1.bf16.msra.mxu0 0
        %1599 = vmatprep.subr.bf16.mxu0 0
        %1600 = vmatpush1.bf16.msra.mxu0 0
        %1601 = vmatprep.subr.bf16.mxu0 0
        %1602 = vmatpush1.bf16.msra.mxu0 0
        %1603 = vmatprep.subr.bf16.mxu0 0
        %1604 = vmatpush1.bf16.msra.mxu0 0
        %1605 = vmatprep.mubr.bf16.mxu0 0
        %1606 = vmatmul.mubr.bf16.gmra.mrb[0].mxu0 %v1540
        %v1607 = vpop.f32.mrb[0].mxu0
        %v1608 = vadd.f32 0.0, %v1607
        %v1609 = vpop.f32.mrb[0].mxu0
        %v1610 = vadd.f32 0.0, %v1609
        %v1611 = vpop.f32.mrb[0].mxu0
        %v1612 = vpop.f32.mrb[0].mxu0
        %1613 = vdwg.mxu0
        %1614 = vmatprep.subr.bf16.mxu0 %v1544
        %1615 = vmatpush1.bf16.msra.mxu0 %v1543
        %1616 = vmatprep.subr.bf16.mxu0 %v1548
        %1617 = vmatpush1.bf16.msra.mxu0 %v1547
        %1618 = vmatprep.subr.bf16.mxu0 %v1552
        %1619 = vmatpush1.bf16.msra.mxu0 %v1551
        %1620 = vmatprep.subr.bf16.mxu0 %v1556
        %1621 = vmatpush1.bf16.msra.mxu0 %v1555
        %1622 = vmatprep.subr.bf16.mxu0 %v1560
        %1623 = vmatpush1.bf16.msra.mxu0 %v1559
        %1624 = vmatprep.subr.bf16.mxu0 %v1564
        %1625 = vmatpush1.bf16.msra.mxu0 %v1563
        %1626 = vmatprep.subr.bf16.mxu0 %v1568
        %1627 = vmatpush1.bf16.msra.mxu0 %v1567
        %1628 = vmatprep.subr.bf16.mxu0 %v1572
        %1629 = vmatpush1.bf16.msra.mxu0 %v1571
        %1630 = vmatprep.subr.bf16.mxu0 0
        %1631 = vmatpush1.bf16.msra.mxu0 0
        %1632 = vmatprep.subr.bf16.mxu0 0
        %1633 = vmatpush1.bf16.msra.mxu0 0
        %1634 = vmatprep.subr.bf16.mxu0 0
        %1635 = vmatpush1.bf16.msra.mxu0 0
        %1636 = vmatprep.subr.bf16.mxu0 0
        %1637 = vmatpush1.bf16.msra.mxu0 0
        %1638 = vmatprep.subr.bf16.mxu0 0
        %1639 = vmatpush1.bf16.msra.mxu0 0
        %1640 = vmatprep.subr.bf16.mxu0 0
        %1641 = vmatpush1.bf16.msra.mxu0 0
        %1642 = vmatprep.subr.bf16.mxu0 0
        %1643 = vmatpush1.bf16.msra.mxu0 0
        %1644 = vmatprep.subr.bf16.mxu0 0
        %1645 = vmatpush1.bf16.msra.mxu0 0
        %1646 = vmatprep.mubr.bf16.mxu0 0
        %1647 = vmatmul.mubr.bf16.gmra.mrb[0].mxu0 %v1540
        %v1648 = vpop.f32.mrb[0].mxu0
        %v1649 = vadd.f32 0.0, %v1648
        %v1650 = vpop.f32.mrb[0].mxu0
        %v1651 = vadd.f32 0.0, %v1650
        %v1652 = vpop.f32.mrb[0].mxu0
        %v1653 = vpop.f32.mrb[0].mxu0
        %1654 = vdwg.mxu0
        %v1655 = vadd.f32 %v1536, %v1608
        %v1656 = vadd.f32 %v1537, %v1610
        %v1657 = vadd.f32 %v1538, %v1649
        %v1658 = vadd.f32 %v1539, %v1651
        %v1659 = vxor.u32 %v1655, 2147483648
        %v1660 = vmul.f32 %v1659, 1.442695
        %v1661 = vpow.pop %v1660
        %v1662 = vadd.f32 %v1661, 1.0
        %v1663 = vrcp.pop %v1662
        %v1664 = vmul.f32 1.0, %v1663
        %v1665 = vxor.u32 %v1656, 2147483648
        %v1666 = vmul.f32 %v1665, 1.442695
        %v1667 = vpow.pop %v1666
        %v1668 = vadd.f32 %v1667, 1.0
        %v1669 = vrcp.pop %v1668
        %v1670 = vmul.f32 1.0, %v1669
        %v1671 = vtanh.pop %v1657
        %v1672 = vxor.u32 %v1658, 2147483648
        %v1673 = vmul.f32 %v1672, 1.442695
        %v1674 = vpow.pop %v1673
        %v1675 = vadd.f32 %v1674, 1.0
        %v1676 = vrcp.pop %v1675
        %v1677 = vmul.f32 1.0, %v1676
        %v1678 = vmul.f32 %v1670, %v1530
        %v1679 = vmul.f32 %v1664, %v1671
        %v1680 = vadd.f32 %v1678, %v1679
        %v1681 = vtanh.pop %v1680
        %v1682 = vmul.f32 %v1677, %v1681
        %s1683 = scalar_lea.vmem %s136, 72 [#allocation8]
        %1684 = vst [vmem:[%s1683] sm:$0xff] %v1682
        %s1685 = scalar_lea.vmem %s118, 320 [#allocation5]
        %v1686 = vld [vmem:[%s1685] sm:$0xff]
        %v1687 = vld [vmem:[%s1685 + $0x8] sm:$0xff]
        %v1688 = vld [vmem:[%s1685 + $0x10] sm:$0xff]
        %v1689 = vld [vmem:[%s1685 + $0x18] sm:$0xff]
        %v1690 = vpack.c.bf16 %v1682, %v1682
        %v1691 = vld [vmem:[#allocation2] sm:$0xff]
        %v1692 = vld [vmem:[#allocation2 + $0x8] sm:$0xff]
        %v1693 = vld [vmem:[#allocation2 + $0x10] sm:$0xff]
        %v1694 = vld [vmem:[#allocation2 + $0x18] sm:$0xff]
        %v1695 = vld [vmem:[#allocation2 + $0x20] sm:$0xff]
        %v1696 = vld [vmem:[#allocation2 + $0x28] sm:$0xff]
        %v1697 = vld [vmem:[#allocation2 + $0x30] sm:$0xff]
        %v1698 = vld [vmem:[#allocation2 + $0x38] sm:$0xff]
        %v1699 = vld [vmem:[#allocation2 + $0x40] sm:$0xff]
        %v1700 = vld [vmem:[#allocation2 + $0x48] sm:$0xff]
        %v1701 = vld [vmem:[#allocation2 + $0x50] sm:$0xff]
        %v1702 = vld [vmem:[#allocation2 + $0x58] sm:$0xff]
        %v1703 = vld [vmem:[#allocation2 + $0x60] sm:$0xff]
        %v1704 = vld [vmem:[#allocation2 + $0x68] sm:$0xff]
        %v1705 = vld [vmem:[#allocation2 + $0x70] sm:$0xff]
        %v1706 = vld [vmem:[#allocation2 + $0x78] sm:$0xff]
        %v1707 = vld [vmem:[#allocation2 + $0x80] sm:$0xff]
        %v1708 = vld [vmem:[#allocation2 + $0x88] sm:$0xff]
        %v1709 = vld [vmem:[#allocation2 + $0x90] sm:$0xff]
        %v1710 = vld [vmem:[#allocation2 + $0x98] sm:$0xff]
        %v1711 = vld [vmem:[#allocation2 + $0xa0] sm:$0xff]
        %v1712 = vld [vmem:[#allocation2 + $0xa8] sm:$0xff]
        %v1713 = vld [vmem:[#allocation2 + $0xb0] sm:$0xff]
        %v1714 = vld [vmem:[#allocation2 + $0xb8] sm:$0xff]
        %v1715 = vld [vmem:[#allocation2 + $0xc0] sm:$0xff]
        %v1716 = vld [vmem:[#allocation2 + $0xc8] sm:$0xff]
        %v1717 = vld [vmem:[#allocation2 + $0xd0] sm:$0xff]
        %v1718 = vld [vmem:[#allocation2 + $0xd8] sm:$0xff]
        %v1719 = vld [vmem:[#allocation2 + $0xe0] sm:$0xff]
        %v1720 = vld [vmem:[#allocation2 + $0xe8] sm:$0xff]
        %v1721 = vld [vmem:[#allocation2 + $0xf0] sm:$0xff]
        %v1722 = vld [vmem:[#allocation2 + $0xf8] sm:$0xff]
        %1723 = vmatprep.subr.bf16.mxu0 %v1692
        %1724 = vmatpush1.bf16.msra.mxu0 %v1691
        %1725 = vmatprep.subr.bf16.mxu0 %v1696
        %1726 = vmatpush1.bf16.msra.mxu0 %v1695
        %1727 = vmatprep.subr.bf16.mxu0 %v1700
        %1728 = vmatpush1.bf16.msra.mxu0 %v1699
        %1729 = vmatprep.subr.bf16.mxu0 %v1704
        %1730 = vmatpush1.bf16.msra.mxu0 %v1703
        %1731 = vmatprep.subr.bf16.mxu0 %v1708
        %1732 = vmatpush1.bf16.msra.mxu0 %v1707
        %1733 = vmatprep.subr.bf16.mxu0 %v1712
        %1734 = vmatpush1.bf16.msra.mxu0 %v1711
        %1735 = vmatprep.subr.bf16.mxu0 %v1716
        %1736 = vmatpush1.bf16.msra.mxu0 %v1715
        %1737 = vmatprep.subr.bf16.mxu0 %v1720
        %1738 = vmatpush1.bf16.msra.mxu0 %v1719
        %1739 = vmatprep.subr.bf16.mxu0 0
        %1740 = vmatpush1.bf16.msra.mxu0 0
        %1741 = vmatprep.subr.bf16.mxu0 0
        %1742 = vmatpush1.bf16.msra.mxu0 0
        %1743 = vmatprep.subr.bf16.mxu0 0
        %1744 = vmatpush1.bf16.msra.mxu0 0
        %1745 = vmatprep.subr.bf16.mxu0 0
        %1746 = vmatpush1.bf16.msra.mxu0 0
        %1747 = vmatprep.subr.bf16.mxu0 0
        %1748 = vmatpush1.bf16.msra.mxu0 0
        %1749 = vmatprep.subr.bf16.mxu0 0
        %1750 = vmatpush1.bf16.msra.mxu0 0
        %1751 = vmatprep.subr.bf16.mxu0 0
        %1752 = vmatpush1.bf16.msra.mxu0 0
        %1753 = vmatprep.subr.bf16.mxu0 0
        %1754 = vmatpush1.bf16.msra.mxu0 0
        %1755 = vmatprep.mubr.bf16.mxu0 0
        %1756 = vmatmul.mubr.bf16.gmra.mrb[0].mxu0 %v1690
        %v1757 = vpop.f32.mrb[0].mxu0
        %v1758 = vadd.f32 0.0, %v1757
        %v1759 = vpop.f32.mrb[0].mxu0
        %v1760 = vadd.f32 0.0, %v1759
        %v1761 = vpop.f32.mrb[0].mxu0
        %v1762 = vpop.f32.mrb[0].mxu0
        %1763 = vdwg.mxu0
        %1764 = vmatprep.subr.bf16.mxu0 %v1694
        %1765 = vmatpush1.bf16.msra.mxu0 %v1693
        %1766 = vmatprep.subr.bf16.mxu0 %v1698
        %1767 = vmatpush1.bf16.msra.mxu0 %v1697
        %1768 = vmatprep.subr.bf16.mxu0 %v1702
        %1769 = vmatpush1.bf16.msra.mxu0 %v1701
        %1770 = vmatprep.subr.bf16.mxu0 %v1706
        %1771 = vmatpush1.bf16.msra.mxu0 %v1705
        %1772 = vmatprep.subr.bf16.mxu0 %v1710
        %1773 = vmatpush1.bf16.msra.mxu0 %v1709
        %1774 = vmatprep.subr.bf16.mxu0 %v1714
        %1775 = vmatpush1.bf16.msra.mxu0 %v1713
        %1776 = vmatprep.subr.bf16.mxu0 %v1718
        %1777 = vmatpush1.bf16.msra.mxu0 %v1717
        %1778 = vmatprep.subr.bf16.mxu0 %v1722
        %1779 = vmatpush1.bf16.msra.mxu0 %v1721
        %1780 = vmatprep.subr.bf16.mxu0 0
        %1781 = vmatpush1.bf16.msra.mxu0 0
        %1782 = vmatprep.subr.bf16.mxu0 0
        %1783 = vmatpush1.bf16.msra.mxu0 0
        %1784 = vmatprep.subr.bf16.mxu0 0
        %1785 = vmatpush1.bf16.msra.mxu0 0
        %1786 = vmatprep.subr.bf16.mxu0 0
        %1787 = vmatpush1.bf16.msra.mxu0 0
        %1788 = vmatprep.subr.bf16.mxu0 0
        %1789 = vmatpush1.bf16.msra.mxu0 0
        %1790 = vmatprep.subr.bf16.mxu0 0
        %1791 = vmatpush1.bf16.msra.mxu0 0
        %1792 = vmatprep.subr.bf16.mxu0 0
        %1793 = vmatpush1.bf16.msra.mxu0 0
        %1794 = vmatprep.subr.bf16.mxu0 0
        %1795 = vmatpush1.bf16.msra.mxu0 0
        %1796 = vmatprep.mubr.bf16.mxu0 0
        %1797 = vmatmul.mubr.bf16.gmra.mrb[0].mxu0 %v1690
        %v1798 = vpop.f32.mrb[0].mxu0
        %v1799 = vadd.f32 0.0, %v1798
        %v1800 = vpop.f32.mrb[0].mxu0
        %v1801 = vadd.f32 0.0, %v1800
        %v1802 = vpop.f32.mrb[0].mxu0
        %v1803 = vpop.f32.mrb[0].mxu0
        %1804 = vdwg.mxu0
        %v1805 = vadd.f32 %v1686, %v1758
        %v1806 = vadd.f32 %v1687, %v1760
        %v1807 = vadd.f32 %v1688, %v1799
        %v1808 = vadd.f32 %v1689, %v1801
        %v1809 = vxor.u32 %v1805, 2147483648
        %v1810 = vmul.f32 %v1809, 1.442695
        %v1811 = vpow.pop %v1810
        %v1812 = vadd.f32 %v1811, 1.0
        %v1813 = vrcp.pop %v1812
        %v1814 = vmul.f32 1.0, %v1813
        %v1815 = vxor.u32 %v1806, 2147483648
        %v1816 = vmul.f32 %v1815, 1.442695
        %v1817 = vpow.pop %v1816
        %v1818 = vadd.f32 %v1817, 1.0
        %v1819 = vrcp.pop %v1818
        %v1820 = vmul.f32 1.0, %v1819
        %v1821 = vtanh.pop %v1807
        %v1822 = vxor.u32 %v1808, 2147483648
        %v1823 = vmul.f32 %v1822, 1.442695
        %v1824 = vpow.pop %v1823
        %v1825 = vadd.f32 %v1824, 1.0
        %v1826 = vrcp.pop %v1825
        %v1827 = vmul.f32 1.0, %v1826
        %v1828 = vmul.f32 %v1820, %v1680
        %v1829 = vmul.f32 %v1814, %v1821
        %v1830 = vadd.f32 %v1828, %v1829
        %v1831 = vtanh.pop %v1830
        %v1832 = vmul.f32 %v1827, %v1831
        %s1833 = scalar_lea.vmem %s136, 80 [#allocation8]
        %1834 = vst [vmem:[%s1833] sm:$0xff] %v1832
        %s1835 = scalar_lea.vmem %s118, 352 [#allocation5]
        %v1836 = vld [vmem:[%s1835] sm:$0xff]
        %v1837 = vld [vmem:[%s1835 + $0x8] sm:$0xff]
        %v1838 = vld [vmem:[%s1835 + $0x10] sm:$0xff]
        %v1839 = vld [vmem:[%s1835 + $0x18] sm:$0xff]
        %v1840 = vpack.c.bf16 %v1832, %v1832
        %v1841 = vld [vmem:[#allocation2] sm:$0xff]
        %v1842 = vld [vmem:[#allocation2 + $0x8] sm:$0xff]
        %v1843 = vld [vmem:[#allocation2 + $0x10] sm:$0xff]
        %v1844 = vld [vmem:[#allocation2 + $0x18] sm:$0xff]
        %v1845 = vld [vmem:[#allocation2 + $0x20] sm:$0xff]
        %v1846 = vld [vmem:[#allocation2 + $0x28] sm:$0xff]
        %v1847 = vld [vmem:[#allocation2 + $0x30] sm:$0xff]
        %v1848 = vld [vmem:[#allocation2 + $0x38] sm:$0xff]
        %v1849 = vld [vmem:[#allocation2 + $0x40] sm:$0xff]
        %v1850 = vld [vmem:[#allocation2 + $0x48] sm:$0xff]
        %v1851 = vld [vmem:[#allocation2 + $0x50] sm:$0xff]
        %v1852 = vld [vmem:[#allocation2 + $0x58] sm:$0xff]
        %v1853 = vld [vmem:[#allocation2 + $0x60] sm:$0xff]
        %v1854 = vld [vmem:[#allocation2 + $0x68] sm:$0xff]
        %v1855 = vld [vmem:[#allocation2 + $0x70] sm:$0xff]
        %v1856 = vld [vmem:[#allocation2 + $0x78] sm:$0xff]
        %v1857 = vld [vmem:[#allocation2 + $0x80] sm:$0xff]
        %v1858 = vld [vmem:[#allocation2 + $0x88] sm:$0xff]
        %v1859 = vld [vmem:[#allocation2 + $0x90] sm:$0xff]
        %v1860 = vld [vmem:[#allocation2 + $0x98] sm:$0xff]
        %v1861 = vld [vmem:[#allocation2 + $0xa0] sm:$0xff]
        %v1862 = vld [vmem:[#allocation2 + $0xa8] sm:$0xff]
        %v1863 = vld [vmem:[#allocation2 + $0xb0] sm:$0xff]
        %v1864 = vld [vmem:[#allocation2 + $0xb8] sm:$0xff]
        %v1865 = vld [vmem:[#allocation2 + $0xc0] sm:$0xff]
        %v1866 = vld [vmem:[#allocation2 + $0xc8] sm:$0xff]
        %v1867 = vld [vmem:[#allocation2 + $0xd0] sm:$0xff]
        %v1868 = vld [vmem:[#allocation2 + $0xd8] sm:$0xff]
        %v1869 = vld [vmem:[#allocation2 + $0xe0] sm:$0xff]
        %v1870 = vld [vmem:[#allocation2 + $0xe8] sm:$0xff]
        %v1871 = vld [vmem:[#allocation2 + $0xf0] sm:$0xff]
        %v1872 = vld [vmem:[#allocation2 + $0xf8] sm:$0xff]
        %1873 = vmatprep.subr.bf16.mxu0 %v1842
        %1874 = vmatpush1.bf16.msra.mxu0 %v1841
        %1875 = vmatprep.subr.bf16.mxu0 %v1846
        %1876 = vmatpush1.bf16.msra.mxu0 %v1845
        %1877 = vmatprep.subr.bf16.mxu0 %v1850
        %1878 = vmatpush1.bf16.msra.mxu0 %v1849
        %1879 = vmatprep.subr.bf16.mxu0 %v1854
        %1880 = vmatpush1.bf16.msra.mxu0 %v1853
        %1881 = vmatprep.subr.bf16.mxu0 %v1858
        %1882 = vmatpush1.bf16.msra.mxu0 %v1857
        %1883 = vmatprep.subr.bf16.mxu0 %v1862
        %1884 = vmatpush1.bf16.msra.mxu0 %v1861
        %1885 = vmatprep.subr.bf16.mxu0 %v1866
        %1886 = vmatpush1.bf16.msra.mxu0 %v1865
        %1887 = vmatprep.subr.bf16.mxu0 %v1870
        %1888 = vmatpush1.bf16.msra.mxu0 %v1869
        %1889 = vmatprep.subr.bf16.mxu0 0
        %1890 = vmatpush1.bf16.msra.mxu0 0
        %1891 = vmatprep.subr.bf16.mxu0 0
        %1892 = vmatpush1.bf16.msra.mxu0 0
        %1893 = vmatprep.subr.bf16.mxu0 0
        %1894 = vmatpush1.bf16.msra.mxu0 0
        %1895 = vmatprep.subr.bf16.mxu0 0
        %1896 = vmatpush1.bf16.msra.mxu0 0
        %1897 = vmatprep.subr.bf16.mxu0 0
        %1898 = vmatpush1.bf16.msra.mxu0 0
        %1899 = vmatprep.subr.bf16.mxu0 0
        %1900 = vmatpush1.bf16.msra.mxu0 0
        %1901 = vmatprep.subr.bf16.mxu0 0
        %1902 = vmatpush1.bf16.msra.mxu0 0
        %1903 = vmatprep.subr.bf16.mxu0 0
        %1904 = vmatpush1.bf16.msra.mxu0 0
        %1905 = vmatprep.mubr.bf16.mxu0 0
        %1906 = vmatmul.mubr.bf16.gmra.mrb[0].mxu0 %v1840
        %v1907 = vpop.f32.mrb[0].mxu0
        %v1908 = vadd.f32 0.0, %v1907
        %v1909 = vpop.f32.mrb[0].mxu0
        %v1910 = vadd.f32 0.0, %v1909
        %v1911 = vpop.f32.mrb[0].mxu0
        %v1912 = vpop.f32.mrb[0].mxu0
        %1913 = vdwg.mxu0
        %1914 = vmatprep.subr.bf16.mxu0 %v1844
        %1915 = vmatpush1.bf16.msra.mxu0 %v1843
        %1916 = vmatprep.subr.bf16.mxu0 %v1848
        %1917 = vmatpush1.bf16.msra.mxu0 %v1847
        %1918 = vmatprep.subr.bf16.mxu0 %v1852
        %1919 = vmatpush1.bf16.msra.mxu0 %v1851
        %1920 = vmatprep.subr.bf16.mxu0 %v1856
        %1921 = vmatpush1.bf16.msra.mxu0 %v1855
        %1922 = vmatprep.subr.bf16.mxu0 %v1860
        %1923 = vmatpush1.bf16.msra.mxu0 %v1859
        %1924 = vmatprep.subr.bf16.mxu0 %v1864
        %1925 = vmatpush1.bf16.msra.mxu0 %v1863
        %1926 = vmatprep.subr.bf16.mxu0 %v1868
        %1927 = vmatpush1.bf16.msra.mxu0 %v1867
        %1928 = vmatprep.subr.bf16.mxu0 %v1872
        %1929 = vmatpush1.bf16.msra.mxu0 %v1871
        %1930 = vmatprep.subr.bf16.mxu0 0
        %1931 = vmatpush1.bf16.msra.mxu0 0
        %1932 = vmatprep.subr.bf16.mxu0 0
        %1933 = vmatpush1.bf16.msra.mxu0 0
        %1934 = vmatprep.subr.bf16.mxu0 0
        %1935 = vmatpush1.bf16.msra.mxu0 0
        %1936 = vmatprep.subr.bf16.mxu0 0
        %1937 = vmatpush1.bf16.msra.mxu0 0
        %1938 = vmatprep.subr.bf16.mxu0 0
        %1939 = vmatpush1.bf16.msra.mxu0 0
        %1940 = vmatprep.subr.bf16.mxu0 0
        %1941 = vmatpush1.bf16.msra.mxu0 0
        %1942 = vmatprep.subr.bf16.mxu0 0
        %1943 = vmatpush1.bf16.msra.mxu0 0
        %1944 = vmatprep.subr.bf16.mxu0 0
        %1945 = vmatpush1.bf16.msra.mxu0 0
        %1946 = vmatprep.mubr.bf16.mxu0 0
        %1947 = vmatmul.mubr.bf16.gmra.mrb[0].mxu0 %v1840
        %v1948 = vpop.f32.mrb[0].mxu0
        %v1949 = vadd.f32 0.0, %v1948
        %v1950 = vpop.f32.mrb[0].mxu0
        %v1951 = vadd.f32 0.0, %v1950
        %v1952 = vpop.f32.mrb[0].mxu0
        %v1953 = vpop.f32.mrb[0].mxu0
        %1954 = vdwg.mxu0
        %v1955 = vadd.f32 %v1836, %v1908
        %v1956 = vadd.f32 %v1837, %v1910
        %v1957 = vadd.f32 %v1838, %v1949
        %v1958 = vadd.f32 %v1839, %v1951
        %v1959 = vxor.u32 %v1955, 2147483648
        %v1960 = vmul.f32 %v1959, 1.442695
        %v1961 = vpow.pop %v1960
        %v1962 = vadd.f32 %v1961, 1.0
        %v1963 = vrcp.pop %v1962
        %v1964 = vmul.f32 1.0, %v1963
        %v1965 = vxor.u32 %v1956, 2147483648
        %v1966 = vmul.f32 %v1965, 1.442695
        %v1967 = vpow.pop %v1966
        %v1968 = vadd.f32 %v1967, 1.0
        %v1969 = vrcp.pop %v1968
        %v1970 = vmul.f32 1.0, %v1969
        %v1971 = vtanh.pop %v1957
        %v1972 = vxor.u32 %v1958, 2147483648
        %v1973 = vmul.f32 %v1972, 1.442695
        %v1974 = vpow.pop %v1973
        %v1975 = vadd.f32 %v1974, 1.0
        %v1976 = vrcp.pop %v1975
        %v1977 = vmul.f32 1.0, %v1976
        %v1978 = vmul.f32 %v1970, %v1830
        %v1979 = vmul.f32 %v1964, %v1971
        %v1980 = vadd.f32 %v1978, %v1979
        %v1981 = vtanh.pop %v1980
        %v1982 = vmul.f32 %v1977, %v1981
        %s1983 = scalar_lea.vmem %s136, 88 [#allocation8]
        %1984 = vst [vmem:[%s1983] sm:$0xff] %v1982
        %s1985 = scalar_lea.vmem %s118, 384 [#allocation5]
        %v1986 = vld [vmem:[%s1985] sm:$0xff]
        %v1987 = vld [vmem:[%s1985 + $0x8] sm:$0xff]
        %v1988 = vld [vmem:[%s1985 + $0x10] sm:$0xff]
        %v1989 = vld [vmem:[%s1985 + $0x18] sm:$0xff]
        %v1990 = vpack.c.bf16 %v1982, %v1982
        %v1991 = vld [vmem:[#allocation2] sm:$0xff]
        %v1992 = vld [vmem:[#allocation2 + $0x8] sm:$0xff]
        %v1993 = vld [vmem:[#allocation2 + $0x10] sm:$0xff]
        %v1994 = vld [vmem:[#allocation2 + $0x18] sm:$0xff]
        %v1995 = vld [vmem:[#allocation2 + $0x20] sm:$0xff]
        %v1996 = vld [vmem:[#allocation2 + $0x28] sm:$0xff]
        %v1997 = vld [vmem:[#allocation2 + $0x30] sm:$0xff]
        %v1998 = vld [vmem:[#allocation2 + $0x38] sm:$0xff]
        %v1999 = vld [vmem:[#allocation2 + $0x40] sm:$0xff]
        %v2000 = vld [vmem:[#allocation2 + $0x48] sm:$0xff]
        %v2001 = vld [vmem:[#allocation2 + $0x50] sm:$0xff]
        %v2002 = vld [vmem:[#allocation2 + $0x58] sm:$0xff]
        %v2003 = vld [vmem:[#allocation2 + $0x60] sm:$0xff]
        %v2004 = vld [vmem:[#allocation2 + $0x68] sm:$0xff]
        %v2005 = vld [vmem:[#allocation2 + $0x70] sm:$0xff]
        %v2006 = vld [vmem:[#allocation2 + $0x78] sm:$0xff]
        %v2007 = vld [vmem:[#allocation2 + $0x80] sm:$0xff]
        %v2008 = vld [vmem:[#allocation2 + $0x88] sm:$0xff]
        %v2009 = vld [vmem:[#allocation2 + $0x90] sm:$0xff]
        %v2010 = vld [vmem:[#allocation2 + $0x98] sm:$0xff]
        %v2011 = vld [vmem:[#allocation2 + $0xa0] sm:$0xff]
        %v2012 = vld [vmem:[#allocation2 + $0xa8] sm:$0xff]
        %v2013 = vld [vmem:[#allocation2 + $0xb0] sm:$0xff]
        %v2014 = vld [vmem:[#allocation2 + $0xb8] sm:$0xff]
        %v2015 = vld [vmem:[#allocation2 + $0xc0] sm:$0xff]
        %v2016 = vld [vmem:[#allocation2 + $0xc8] sm:$0xff]
        %v2017 = vld [vmem:[#allocation2 + $0xd0] sm:$0xff]
        %v2018 = vld [vmem:[#allocation2 + $0xd8] sm:$0xff]
        %v2019 = vld [vmem:[#allocation2 + $0xe0] sm:$0xff]
        %v2020 = vld [vmem:[#allocation2 + $0xe8] sm:$0xff]
        %v2021 = vld [vmem:[#allocation2 + $0xf0] sm:$0xff]
        %v2022 = vld [vmem:[#allocation2 + $0xf8] sm:$0xff]
        %2023 = vmatprep.subr.bf16.mxu0 %v1992
        %2024 = vmatpush1.bf16.msra.mxu0 %v1991
        %2025 = vmatprep.subr.bf16.mxu0 %v1996
        %2026 = vmatpush1.bf16.msra.mxu0 %v1995
        %2027 = vmatprep.subr.bf16.mxu0 %v2000
        %2028 = vmatpush1.bf16.msra.mxu0 %v1999
        %2029 = vmatprep.subr.bf16.mxu0 %v2004
        %2030 = vmatpush1.bf16.msra.mxu0 %v2003
        %2031 = vmatprep.subr.bf16.mxu0 %v2008
        %2032 = vmatpush1.bf16.msra.mxu0 %v2007
        %2033 = vmatprep.subr.bf16.mxu0 %v2012
        %2034 = vmatpush1.bf16.msra.mxu0 %v2011
        %2035 = vmatprep.subr.bf16.mxu0 %v2016
        %2036 = vmatpush1.bf16.msra.mxu0 %v2015
        %2037 = vmatprep.subr.bf16.mxu0 %v2020
        %2038 = vmatpush1.bf16.msra.mxu0 %v2019
        %2039 = vmatprep.subr.bf16.mxu0 0
        %2040 = vmatpush1.bf16.msra.mxu0 0
        %2041 = vmatprep.subr.bf16.mxu0 0
        %2042 = vmatpush1.bf16.msra.mxu0 0
        %2043 = vmatprep.subr.bf16.mxu0 0
        %2044 = vmatpush1.bf16.msra.mxu0 0
        %2045 = vmatprep.subr.bf16.mxu0 0
        %2046 = vmatpush1.bf16.msra.mxu0 0
        %2047 = vmatprep.subr.bf16.mxu0 0
        %2048 = vmatpush1.bf16.msra.mxu0 0
        %2049 = vmatprep.subr.bf16.mxu0 0
        %2050 = vmatpush1.bf16.msra.mxu0 0
        %2051 = vmatprep.subr.bf16.mxu0 0
        %2052 = vmatpush1.bf16.msra.mxu0 0
        %2053 = vmatprep.subr.bf16.mxu0 0
        %2054 = vmatpush1.bf16.msra.mxu0 0
        %2055 = vmatprep.mubr.bf16.mxu0 0
        %2056 = vmatmul.mubr.bf16.gmra.mrb[0].mxu0 %v1990
        %v2057 = vpop.f32.mrb[0].mxu0
        %v2058 = vadd.f32 0.0, %v2057
        %v2059 = vpop.f32.mrb[0].mxu0
        %v2060 = vadd.f32 0.0, %v2059
        %v2061 = vpop.f32.mrb[0].mxu0
        %v2062 = vpop.f32.mrb[0].mxu0
        %2063 = vdwg.mxu0
        %2064 = vmatprep.subr.bf16.mxu0 %v1994
        %2065 = vmatpush1.bf16.msra.mxu0 %v1993
        %2066 = vmatprep.subr.bf16.mxu0 %v1998
        %2067 = vmatpush1.bf16.msra.mxu0 %v1997
        %2068 = vmatprep.subr.bf16.mxu0 %v2002
        %2069 = vmatpush1.bf16.msra.mxu0 %v2001
        %2070 = vmatprep.subr.bf16.mxu0 %v2006
        %2071 = vmatpush1.bf16.msra.mxu0 %v2005
        %2072 = vmatprep.subr.bf16.mxu0 %v2010
        %2073 = vmatpush1.bf16.msra.mxu0 %v2009
        %2074 = vmatprep.subr.bf16.mxu0 %v2014
        %2075 = vmatpush1.bf16.msra.mxu0 %v2013
        %2076 = vmatprep.subr.bf16.mxu0 %v2018
        %2077 = vmatpush1.bf16.msra.mxu0 %v2017
        %2078 = vmatprep.subr.bf16.mxu0 %v2022
        %2079 = vmatpush1.bf16.msra.mxu0 %v2021
        %2080 = vmatprep.subr.bf16.mxu0 0
        %2081 = vmatpush1.bf16.msra.mxu0 0
        %2082 = vmatprep.subr.bf16.mxu0 0
        %2083 = vmatpush1.bf16.msra.mxu0 0
        %2084 = vmatprep.subr.bf16.mxu0 0
        %2085 = vmatpush1.bf16.msra.mxu0 0
        %2086 = vmatprep.subr.bf16.mxu0 0
        %2087 = vmatpush1.bf16.msra.mxu0 0
        %2088 = vmatprep.subr.bf16.mxu0 0
        %2089 = vmatpush1.bf16.msra.mxu0 0
        %2090 = vmatprep.subr.bf16.mxu0 0
        %2091 = vmatpush1.bf16.msra.mxu0 0
        %2092 = vmatprep.subr.bf16.mxu0 0
        %2093 = vmatpush1.bf16.msra.mxu0 0
        %2094 = vmatprep.subr.bf16.mxu0 0
        %2095 = vmatpush1.bf16.msra.mxu0 0
        %2096 = vmatprep.mubr.bf16.mxu0 0
        %2097 = vmatmul.mubr.bf16.gmra.mrb[0].mxu0 %v1990
        %v2098 = vpop.f32.mrb[0].mxu0
        %v2099 = vadd.f32 0.0, %v2098
        %v2100 = vpop.f32.mrb[0].mxu0
        %v2101 = vadd.f32 0.0, %v2100
        %v2102 = vpop.f32.mrb[0].mxu0
        %v2103 = vpop.f32.mrb[0].mxu0
        %2104 = vdwg.mxu0
        %v2105 = vadd.f32 %v1986, %v2058
        %v2106 = vadd.f32 %v1987, %v2060
        %v2107 = vadd.f32 %v1988, %v2099
        %v2108 = vadd.f32 %v1989, %v2101
        %v2109 = vxor.u32 %v2105, 2147483648
        %v2110 = vmul.f32 %v2109, 1.442695
        %v2111 = vpow.pop %v2110
        %v2112 = vadd.f32 %v2111, 1.0
        %v2113 = vrcp.pop %v2112
        %v2114 = vmul.f32 1.0, %v2113
        %v2115 = vxor.u32 %v2106, 2147483648
        %v2116 = vmul.f32 %v2115, 1.442695
        %v2117 = vpow.pop %v2116
        %v2118 = vadd.f32 %v2117, 1.0
        %v2119 = vrcp.pop %v2118
        %v2120 = vmul.f32 1.0, %v2119
        %v2121 = vtanh.pop %v2107
        %v2122 = vxor.u32 %v2108, 2147483648
        %v2123 = vmul.f32 %v2122, 1.442695
        %v2124 = vpow.pop %v2123
        %v2125 = vadd.f32 %v2124, 1.0
        %v2126 = vrcp.pop %v2125
        %v2127 = vmul.f32 1.0, %v2126
        %v2128 = vmul.f32 %v2120, %v1980
        %v2129 = vmul.f32 %v2114, %v2121
        %v2130 = vadd.f32 %v2128, %v2129
        %v2131 = vtanh.pop %v2130
        %v2132 = vmul.f32 %v2127, %v2131
        %s2133 = scalar_lea.vmem %s136, 96 [#allocation8]
        %2134 = vst [vmem:[%s2133] sm:$0xff] %v2132
        %s2135 = scalar_lea.vmem %s118, 416 [#allocation5]
        %v2136 = vld [vmem:[%s2135] sm:$0xff]
        %v2137 = vld [vmem:[%s2135 + $0x8] sm:$0xff]
        %v2138 = vld [vmem:[%s2135 + $0x10] sm:$0xff]
        %v2139 = vld [vmem:[%s2135 + $0x18] sm:$0xff]
        %v2140 = vpack.c.bf16 %v2132, %v2132
        %v2141 = vld [vmem:[#allocation2] sm:$0xff]
        %v2142 = vld [vmem:[#allocation2 + $0x8] sm:$0xff]
        %v2143 = vld [vmem:[#allocation2 + $0x10] sm:$0xff]
        %v2144 = vld [vmem:[#allocation2 + $0x18] sm:$0xff]
        %v2145 = vld [vmem:[#allocation2 + $0x20] sm:$0xff]
        %v2146 = vld [vmem:[#allocation2 + $0x28] sm:$0xff]
        %v2147 = vld [vmem:[#allocation2 + $0x30] sm:$0xff]
        %v2148 = vld [vmem:[#allocation2 + $0x38] sm:$0xff]
        %v2149 = vld [vmem:[#allocation2 + $0x40] sm:$0xff]
        %v2150 = vld [vmem:[#allocation2 + $0x48] sm:$0xff]
        %v2151 = vld [vmem:[#allocation2 + $0x50] sm:$0xff]
        %v2152 = vld [vmem:[#allocation2 + $0x58] sm:$0xff]
        %v2153 = vld [vmem:[#allocation2 + $0x60] sm:$0xff]
        %v2154 = vld [vmem:[#allocation2 + $0x68] sm:$0xff]
        %v2155 = vld [vmem:[#allocation2 + $0x70] sm:$0xff]
        %v2156 = vld [vmem:[#allocation2 + $0x78] sm:$0xff]
        %v2157 = vld [vmem:[#allocation2 + $0x80] sm:$0xff]
        %v2158 = vld [vmem:[#allocation2 + $0x88] sm:$0xff]
        %v2159 = vld [vmem:[#allocation2 + $0x90] sm:$0xff]
        %v2160 = vld [vmem:[#allocation2 + $0x98] sm:$0xff]
        %v2161 = vld [vmem:[#allocation2 + $0xa0] sm:$0xff]
        %v2162 = vld [vmem:[#allocation2 + $0xa8] sm:$0xff]
        %v2163 = vld [vmem:[#allocation2 + $0xb0] sm:$0xff]
        %v2164 = vld [vmem:[#allocation2 + $0xb8] sm:$0xff]
        %v2165 = vld [vmem:[#allocation2 + $0xc0] sm:$0xff]
        %v2166 = vld [vmem:[#allocation2 + $0xc8] sm:$0xff]
        %v2167 = vld [vmem:[#allocation2 + $0xd0] sm:$0xff]
        %v2168 = vld [vmem:[#allocation2 + $0xd8] sm:$0xff]
        %v2169 = vld [vmem:[#allocation2 + $0xe0] sm:$0xff]
        %v2170 = vld [vmem:[#allocation2 + $0xe8] sm:$0xff]
        %v2171 = vld [vmem:[#allocation2 + $0xf0] sm:$0xff]
        %v2172 = vld [vmem:[#allocation2 + $0xf8] sm:$0xff]
        %2173 = vmatprep.subr.bf16.mxu0 %v2142
        %2174 = vmatpush1.bf16.msra.mxu0 %v2141
        %2175 = vmatprep.subr.bf16.mxu0 %v2146
        %2176 = vmatpush1.bf16.msra.mxu0 %v2145
        %2177 = vmatprep.subr.bf16.mxu0 %v2150
        %2178 = vmatpush1.bf16.msra.mxu0 %v2149
        %2179 = vmatprep.subr.bf16.mxu0 %v2154
        %2180 = vmatpush1.bf16.msra.mxu0 %v2153
        %2181 = vmatprep.subr.bf16.mxu0 %v2158
        %2182 = vmatpush1.bf16.msra.mxu0 %v2157
        %2183 = vmatprep.subr.bf16.mxu0 %v2162
        %2184 = vmatpush1.bf16.msra.mxu0 %v2161
        %2185 = vmatprep.subr.bf16.mxu0 %v2166
        %2186 = vmatpush1.bf16.msra.mxu0 %v2165
        %2187 = vmatprep.subr.bf16.mxu0 %v2170
        %2188 = vmatpush1.bf16.msra.mxu0 %v2169
        %2189 = vmatprep.subr.bf16.mxu0 0
        %2190 = vmatpush1.bf16.msra.mxu0 0
        %2191 = vmatprep.subr.bf16.mxu0 0
        %2192 = vmatpush1.bf16.msra.mxu0 0
        %2193 = vmatprep.subr.bf16.mxu0 0
        %2194 = vmatpush1.bf16.msra.mxu0 0
        %2195 = vmatprep.subr.bf16.mxu0 0
        %2196 = vmatpush1.bf16.msra.mxu0 0
        %2197 = vmatprep.subr.bf16.mxu0 0
        %2198 = vmatpush1.bf16.msra.mxu0 0
        %2199 = vmatprep.subr.bf16.mxu0 0
        %2200 = vmatpush1.bf16.msra.mxu0 0
        %2201 = vmatprep.subr.bf16.mxu0 0
        %2202 = vmatpush1.bf16.msra.mxu0 0
        %2203 = vmatprep.subr.bf16.mxu0 0
        %2204 = vmatpush1.bf16.msra.mxu0 0
        %2205 = vmatprep.mubr.bf16.mxu0 0
        %2206 = vmatmul.mubr.bf16.gmra.mrb[0].mxu0 %v2140
        %v2207 = vpop.f32.mrb[0].mxu0
        %v2208 = vadd.f32 0.0, %v2207
        %v2209 = vpop.f32.mrb[0].mxu0
        %v2210 = vadd.f32 0.0, %v2209
        %v2211 = vpop.f32.mrb[0].mxu0
        %v2212 = vpop.f32.mrb[0].mxu0
        %2213 = vdwg.mxu0
        %2214 = vmatprep.subr.bf16.mxu0 %v2144
        %2215 = vmatpush1.bf16.msra.mxu0 %v2143
        %2216 = vmatprep.subr.bf16.mxu0 %v2148
        %2217 = vmatpush1.bf16.msra.mxu0 %v2147
        %2218 = vmatprep.subr.bf16.mxu0 %v2152
        %2219 = vmatpush1.bf16.msra.mxu0 %v2151
        %2220 = vmatprep.subr.bf16.mxu0 %v2156
        %2221 = vmatpush1.bf16.msra.mxu0 %v2155
        %2222 = vmatprep.subr.bf16.mxu0 %v2160
        %2223 = vmatpush1.bf16.msra.mxu0 %v2159
        %2224 = vmatprep.subr.bf16.mxu0 %v2164
        %2225 = vmatpush1.bf16.msra.mxu0 %v2163
        %2226 = vmatprep.subr.bf16.mxu0 %v2168
        %2227 = vmatpush1.bf16.msra.mxu0 %v2167
        %2228 = vmatprep.subr.bf16.mxu0 %v2172
        %2229 = vmatpush1.bf16.msra.mxu0 %v2171
        %2230 = vmatprep.subr.bf16.mxu0 0
        %2231 = vmatpush1.bf16.msra.mxu0 0
        %2232 = vmatprep.subr.bf16.mxu0 0
        %2233 = vmatpush1.bf16.msra.mxu0 0
        %2234 = vmatprep.subr.bf16.mxu0 0
        %2235 = vmatpush1.bf16.msra.mxu0 0
        %2236 = vmatprep.subr.bf16.mxu0 0
        %2237 = vmatpush1.bf16.msra.mxu0 0
        %2238 = vmatprep.subr.bf16.mxu0 0
        %2239 = vmatpush1.bf16.msra.mxu0 0
        %2240 = vmatprep.subr.bf16.mxu0 0
        %2241 = vmatpush1.bf16.msra.mxu0 0
        %2242 = vmatprep.subr.bf16.mxu0 0
        %2243 = vmatpush1.bf16.msra.mxu0 0
        %2244 = vmatprep.subr.bf16.mxu0 0
        %2245 = vmatpush1.bf16.msra.mxu0 0
        %2246 = vmatprep.mubr.bf16.mxu0 0
        %2247 = vmatmul.mubr.bf16.gmra.mrb[0].mxu0 %v2140
        %v2248 = vpop.f32.mrb[0].mxu0
        %v2249 = vadd.f32 0.0, %v2248
        %v2250 = vpop.f32.mrb[0].mxu0
        %v2251 = vadd.f32 0.0, %v2250
        %v2252 = vpop.f32.mrb[0].mxu0
        %v2253 = vpop.f32.mrb[0].mxu0
        %2254 = vdwg.mxu0
        %v2255 = vadd.f32 %v2136, %v2208
        %v2256 = vadd.f32 %v2137, %v2210
        %v2257 = vadd.f32 %v2138, %v2249
        %v2258 = vadd.f32 %v2139, %v2251
        %v2259 = vxor.u32 %v2255, 2147483648
        %v2260 = vmul.f32 %v2259, 1.442695
        %v2261 = vpow.pop %v2260
        %v2262 = vadd.f32 %v2261, 1.0
        %v2263 = vrcp.pop %v2262
        %v2264 = vmul.f32 1.0, %v2263
        %v2265 = vxor.u32 %v2256, 2147483648
        %v2266 = vmul.f32 %v2265, 1.442695
        %v2267 = vpow.pop %v2266
        %v2268 = vadd.f32 %v2267, 1.0
        %v2269 = vrcp.pop %v2268
        %v2270 = vmul.f32 1.0, %v2269
        %v2271 = vtanh.pop %v2257
        %v2272 = vxor.u32 %v2258, 2147483648
        %v2273 = vmul.f32 %v2272, 1.442695
        %v2274 = vpow.pop %v2273
        %v2275 = vadd.f32 %v2274, 1.0
        %v2276 = vrcp.pop %v2275
        %v2277 = vmul.f32 1.0, %v2276
        %v2278 = vmul.f32 %v2270, %v2130
        %v2279 = vmul.f32 %v2264, %v2271
        %v2280 = vadd.f32 %v2278, %v2279
        %v2281 = vtanh.pop %v2280
        %v2282 = vmul.f32 %v2277, %v2281
        %s2283 = scalar_lea.vmem %s136, 104 [#allocation8]
        %2284 = vst [vmem:[%s2283] sm:$0xff] %v2282
        %s2285 = scalar_lea.vmem %s118, 448 [#allocation5]
        %v2286 = vld [vmem:[%s2285] sm:$0xff]
        %v2287 = vld [vmem:[%s2285 + $0x8] sm:$0xff]
        %v2288 = vld [vmem:[%s2285 + $0x10] sm:$0xff]
        %v2289 = vld [vmem:[%s2285 + $0x18] sm:$0xff]
        %v2290 = vpack.c.bf16 %v2282, %v2282
        %v2291 = vld [vmem:[#allocation2] sm:$0xff]
        %v2292 = vld [vmem:[#allocation2 + $0x8] sm:$0xff]
        %v2293 = vld [vmem:[#allocation2 + $0x10] sm:$0xff]
        %v2294 = vld [vmem:[#allocation2 + $0x18] sm:$0xff]
        %v2295 = vld [vmem:[#allocation2 + $0x20] sm:$0xff]
        %v2296 = vld [vmem:[#allocation2 + $0x28] sm:$0xff]
        %v2297 = vld [vmem:[#allocation2 + $0x30] sm:$0xff]
        %v2298 = vld [vmem:[#allocation2 + $0x38] sm:$0xff]
        %v2299 = vld [vmem:[#allocation2 + $0x40] sm:$0xff]
        %v2300 = vld [vmem:[#allocation2 + $0x48] sm:$0xff]
        %v2301 = vld [vmem:[#allocation2 + $0x50] sm:$0xff]
        %v2302 = vld [vmem:[#allocation2 + $0x58] sm:$0xff]
        %v2303 = vld [vmem:[#allocation2 + $0x60] sm:$0xff]
        %v2304 = vld [vmem:[#allocation2 + $0x68] sm:$0xff]
        %v2305 = vld [vmem:[#allocation2 + $0x70] sm:$0xff]
        %v2306 = vld [vmem:[#allocation2 + $0x78] sm:$0xff]
        %v2307 = vld [vmem:[#allocation2 + $0x80] sm:$0xff]
        %v2308 = vld [vmem:[#allocation2 + $0x88] sm:$0xff]
        %v2309 = vld [vmem:[#allocation2 + $0x90] sm:$0xff]
        %v2310 = vld [vmem:[#allocation2 + $0x98] sm:$0xff]
        %v2311 = vld [vmem:[#allocation2 + $0xa0] sm:$0xff]
        %v2312 = vld [vmem:[#allocation2 + $0xa8] sm:$0xff]
        %v2313 = vld [vmem:[#allocation2 + $0xb0] sm:$0xff]
        %v2314 = vld [vmem:[#allocation2 + $0xb8] sm:$0xff]
        %v2315 = vld [vmem:[#allocation2 + $0xc0] sm:$0xff]
        %v2316 = vld [vmem:[#allocation2 + $0xc8] sm:$0xff]
        %v2317 = vld [vmem:[#allocation2 + $0xd0] sm:$0xff]
        %v2318 = vld [vmem:[#allocation2 + $0xd8] sm:$0xff]
        %v2319 = vld [vmem:[#allocation2 + $0xe0] sm:$0xff]
        %v2320 = vld [vmem:[#allocation2 + $0xe8] sm:$0xff]
        %v2321 = vld [vmem:[#allocation2 + $0xf0] sm:$0xff]
        %v2322 = vld [vmem:[#allocation2 + $0xf8] sm:$0xff]
        %2323 = vmatprep.subr.bf16.mxu0 %v2292
        %2324 = vmatpush1.bf16.msra.mxu0 %v2291
        %2325 = vmatprep.subr.bf16.mxu0 %v2296
        %2326 = vmatpush1.bf16.msra.mxu0 %v2295
        %2327 = vmatprep.subr.bf16.mxu0 %v2300
        %2328 = vmatpush1.bf16.msra.mxu0 %v2299
        %2329 = vmatprep.subr.bf16.mxu0 %v2304
        %2330 = vmatpush1.bf16.msra.mxu0 %v2303
        %2331 = vmatprep.subr.bf16.mxu0 %v2308
        %2332 = vmatpush1.bf16.msra.mxu0 %v2307
        %2333 = vmatprep.subr.bf16.mxu0 %v2312
        %2334 = vmatpush1.bf16.msra.mxu0 %v2311
        %2335 = vmatprep.subr.bf16.mxu0 %v2316
        %2336 = vmatpush1.bf16.msra.mxu0 %v2315
        %2337 = vmatprep.subr.bf16.mxu0 %v2320
        %2338 = vmatpush1.bf16.msra.mxu0 %v2319
        %2339 = vmatprep.subr.bf16.mxu0 0
        %2340 = vmatpush1.bf16.msra.mxu0 0
        %2341 = vmatprep.subr.bf16.mxu0 0
        %2342 = vmatpush1.bf16.msra.mxu0 0
        %2343 = vmatprep.subr.bf16.mxu0 0
        %2344 = vmatpush1.bf16.msra.mxu0 0
        %2345 = vmatprep.subr.bf16.mxu0 0
        %2346 = vmatpush1.bf16.msra.mxu0 0
        %2347 = vmatprep.subr.bf16.mxu0 0
        %2348 = vmatpush1.bf16.msra.mxu0 0
        %2349 = vmatprep.subr.bf16.mxu0 0
        %2350 = vmatpush1.bf16.msra.mxu0 0
        %2351 = vmatprep.subr.bf16.mxu0 0
        %2352 = vmatpush1.bf16.msra.mxu0 0
        %2353 = vmatprep.subr.bf16.mxu0 0
        %2354 = vmatpush1.bf16.msra.mxu0 0
        %2355 = vmatprep.mubr.bf16.mxu0 0
        %2356 = vmatmul.mubr.bf16.gmra.mrb[0].mxu0 %v2290
        %v2357 = vpop.f32.mrb[0].mxu0
        %v2358 = vadd.f32 0.0, %v2357
        %v2359 = vpop.f32.mrb[0].mxu0
        %v2360 = vadd.f32 0.0, %v2359
        %v2361 = vpop.f32.mrb[0].mxu0
        %v2362 = vpop.f32.mrb[0].mxu0
        %2363 = vdwg.mxu0
        %2364 = vmatprep.subr.bf16.mxu0 %v2294
        %2365 = vmatpush1.bf16.msra.mxu0 %v2293
        %2366 = vmatprep.subr.bf16.mxu0 %v2298
        %2367 = vmatpush1.bf16.msra.mxu0 %v2297
        %2368 = vmatprep.subr.bf16.mxu0 %v2302
        %2369 = vmatpush1.bf16.msra.mxu0 %v2301
        %2370 = vmatprep.subr.bf16.mxu0 %v2306
        %2371 = vmatpush1.bf16.msra.mxu0 %v2305
        %2372 = vmatprep.subr.bf16.mxu0 %v2310
        %2373 = vmatpush1.bf16.msra.mxu0 %v2309
        %2374 = vmatprep.subr.bf16.mxu0 %v2314
        %2375 = vmatpush1.bf16.msra.mxu0 %v2313
        %2376 = vmatprep.subr.bf16.mxu0 %v2318
        %2377 = vmatpush1.bf16.msra.mxu0 %v2317
        %2378 = vmatprep.subr.bf16.mxu0 %v2322
        %2379 = vmatpush1.bf16.msra.mxu0 %v2321
        %2380 = vmatprep.subr.bf16.mxu0 0
        %2381 = vmatpush1.bf16.msra.mxu0 0
        %2382 = vmatprep.subr.bf16.mxu0 0
        %2383 = vmatpush1.bf16.msra.mxu0 0
        %2384 = vmatprep.subr.bf16.mxu0 0
        %2385 = vmatpush1.bf16.msra.mxu0 0
        %2386 = vmatprep.subr.bf16.mxu0 0
        %2387 = vmatpush1.bf16.msra.mxu0 0
        %2388 = vmatprep.subr.bf16.mxu0 0
        %2389 = vmatpush1.bf16.msra.mxu0 0
        %2390 = vmatprep.subr.bf16.mxu0 0
        %2391 = vmatpush1.bf16.msra.mxu0 0
        %2392 = vmatprep.subr.bf16.mxu0 0
        %2393 = vmatpush1.bf16.msra.mxu0 0
        %2394 = vmatprep.subr.bf16.mxu0 0
        %2395 = vmatpush1.bf16.msra.mxu0 0
        %2396 = vmatprep.mubr.bf16.mxu0 0
        %2397 = vmatmul.mubr.bf16.gmra.mrb[0].mxu0 %v2290
        %v2398 = vpop.f32.mrb[0].mxu0
        %v2399 = vadd.f32 0.0, %v2398
        %v2400 = vpop.f32.mrb[0].mxu0
        %v2401 = vadd.f32 0.0, %v2400
        %v2402 = vpop.f32.mrb[0].mxu0
        %v2403 = vpop.f32.mrb[0].mxu0
        %2404 = vdwg.mxu0
        %v2405 = vadd.f32 %v2286, %v2358
        %v2406 = vadd.f32 %v2287, %v2360
        %v2407 = vadd.f32 %v2288, %v2399
        %v2408 = vadd.f32 %v2289, %v2401
        %v2409 = vxor.u32 %v2405, 2147483648
        %v2410 = vmul.f32 %v2409, 1.442695
        %v2411 = vpow.pop %v2410
        %v2412 = vadd.f32 %v2411, 1.0
        %v2413 = vrcp.pop %v2412
        %v2414 = vmul.f32 1.0, %v2413
        %v2415 = vxor.u32 %v2406, 2147483648
        %v2416 = vmul.f32 %v2415, 1.442695
        %v2417 = vpow.pop %v2416
        %v2418 = vadd.f32 %v2417, 1.0
        %v2419 = vrcp.pop %v2418
        %v2420 = vmul.f32 1.0, %v2419
        %v2421 = vtanh.pop %v2407
        %v2422 = vxor.u32 %v2408, 2147483648
        %v2423 = vmul.f32 %v2422, 1.442695
        %v2424 = vpow.pop %v2423
        %v2425 = vadd.f32 %v2424, 1.0
        %v2426 = vrcp.pop %v2425
        %v2427 = vmul.f32 1.0, %v2426
        %v2428 = vmul.f32 %v2420, %v2280
        %v2429 = vmul.f32 %v2414, %v2421
        %v2430 = vadd.f32 %v2428, %v2429
        %v2431 = vtanh.pop %v2430
        %v2432 = vmul.f32 %v2427, %v2431
        %s2433 = scalar_lea.vmem %s136, 112 [#allocation8]
        %2434 = vst [vmem:[%s2433] sm:$0xff] %v2432
        %s2435 = scalar_lea.vmem %s118, 480 [#allocation5]
        %v2436 = vld [vmem:[%s2435] sm:$0xff]
        %v2437 = vld [vmem:[%s2435 + $0x8] sm:$0xff]
        %v2438 = vld [vmem:[%s2435 + $0x10] sm:$0xff]
        %v2439 = vld [vmem:[%s2435 + $0x18] sm:$0xff]
        %v2440 = vpack.c.bf16 %v2432, %v2432
        %v2441 = vld [vmem:[#allocation2] sm:$0xff]
        %v2442 = vld [vmem:[#allocation2 + $0x8] sm:$0xff]
        %v2443 = vld [vmem:[#allocation2 + $0x10] sm:$0xff]
        %v2444 = vld [vmem:[#allocation2 + $0x18] sm:$0xff]
        %v2445 = vld [vmem:[#allocation2 + $0x20] sm:$0xff]
        %v2446 = vld [vmem:[#allocation2 + $0x28] sm:$0xff]
        %v2447 = vld [vmem:[#allocation2 + $0x30] sm:$0xff]
        %v2448 = vld [vmem:[#allocation2 + $0x38] sm:$0xff]
        %v2449 = vld [vmem:[#allocation2 + $0x40] sm:$0xff]
        %v2450 = vld [vmem:[#allocation2 + $0x48] sm:$0xff]
        %v2451 = vld [vmem:[#allocation2 + $0x50] sm:$0xff]
        %v2452 = vld [vmem:[#allocation2 + $0x58] sm:$0xff]
        %v2453 = vld [vmem:[#allocation2 + $0x60] sm:$0xff]
        %v2454 = vld [vmem:[#allocation2 + $0x68] sm:$0xff]
        %v2455 = vld [vmem:[#allocation2 + $0x70] sm:$0xff]
        %v2456 = vld [vmem:[#allocation2 + $0x78] sm:$0xff]
        %v2457 = vld [vmem:[#allocation2 + $0x80] sm:$0xff]
        %v2458 = vld [vmem:[#allocation2 + $0x88] sm:$0xff]
        %v2459 = vld [vmem:[#allocation2 + $0x90] sm:$0xff]
        %v2460 = vld [vmem:[#allocation2 + $0x98] sm:$0xff]
        %v2461 = vld [vmem:[#allocation2 + $0xa0] sm:$0xff]
        %v2462 = vld [vmem:[#allocation2 + $0xa8] sm:$0xff]
        %v2463 = vld [vmem:[#allocation2 + $0xb0] sm:$0xff]
        %v2464 = vld [vmem:[#allocation2 + $0xb8] sm:$0xff]
        %v2465 = vld [vmem:[#allocation2 + $0xc0] sm:$0xff]
        %v2466 = vld [vmem:[#allocation2 + $0xc8] sm:$0xff]
        %v2467 = vld [vmem:[#allocation2 + $0xd0] sm:$0xff]
        %v2468 = vld [vmem:[#allocation2 + $0xd8] sm:$0xff]
        %v2469 = vld [vmem:[#allocation2 + $0xe0] sm:$0xff]
        %v2470 = vld [vmem:[#allocation2 + $0xe8] sm:$0xff]
        %v2471 = vld [vmem:[#allocation2 + $0xf0] sm:$0xff]
        %v2472 = vld [vmem:[#allocation2 + $0xf8] sm:$0xff]
        %2473 = vmatprep.subr.bf16.mxu0 %v2442
        %2474 = vmatpush1.bf16.msra.mxu0 %v2441
        %2475 = vmatprep.subr.bf16.mxu0 %v2446
        %2476 = vmatpush1.bf16.msra.mxu0 %v2445
        %2477 = vmatprep.subr.bf16.mxu0 %v2450
        %2478 = vmatpush1.bf16.msra.mxu0 %v2449
        %2479 = vmatprep.subr.bf16.mxu0 %v2454
        %2480 = vmatpush1.bf16.msra.mxu0 %v2453
        %2481 = vmatprep.subr.bf16.mxu0 %v2458
        %2482 = vmatpush1.bf16.msra.mxu0 %v2457
        %2483 = vmatprep.subr.bf16.mxu0 %v2462
        %2484 = vmatpush1.bf16.msra.mxu0 %v2461
        %2485 = vmatprep.subr.bf16.mxu0 %v2466
        %2486 = vmatpush1.bf16.msra.mxu0 %v2465
        %2487 = vmatprep.subr.bf16.mxu0 %v2470
        %2488 = vmatpush1.bf16.msra.mxu0 %v2469
        %2489 = vmatprep.subr.bf16.mxu0 0
        %2490 = vmatpush1.bf16.msra.mxu0 0
        %2491 = vmatprep.subr.bf16.mxu0 0
        %2492 = vmatpush1.bf16.msra.mxu0 0
        %2493 = vmatprep.subr.bf16.mxu0 0
        %2494 = vmatpush1.bf16.msra.mxu0 0
        %2495 = vmatprep.subr.bf16.mxu0 0
        %2496 = vmatpush1.bf16.msra.mxu0 0
        %2497 = vmatprep.subr.bf16.mxu0 0
        %2498 = vmatpush1.bf16.msra.mxu0 0
        %2499 = vmatprep.subr.bf16.mxu0 0
        %2500 = vmatpush1.bf16.msra.mxu0 0
        %2501 = vmatprep.subr.bf16.mxu0 0
        %2502 = vmatpush1.bf16.msra.mxu0 0
        %2503 = vmatprep.subr.bf16.mxu0 0
        %2504 = vmatpush1.bf16.msra.mxu0 0
        %2505 = vmatprep.mubr.bf16.mxu0 0
        %2506 = vmatmul.mubr.bf16.gmra.mrb[0].mxu0 %v2440
        %v2507 = vpop.f32.mrb[0].mxu0
        %v2508 = vadd.f32 0.0, %v2507
        %v2509 = vpop.f32.mrb[0].mxu0
        %v2510 = vadd.f32 0.0, %v2509
        %v2511 = vpop.f32.mrb[0].mxu0
        %v2512 = vpop.f32.mrb[0].mxu0
        %2513 = vdwg.mxu0
        %2514 = vmatprep.subr.bf16.mxu0 %v2444
        %2515 = vmatpush1.bf16.msra.mxu0 %v2443
        %2516 = vmatprep.subr.bf16.mxu0 %v2448
        %2517 = vmatpush1.bf16.msra.mxu0 %v2447
        %2518 = vmatprep.subr.bf16.mxu0 %v2452
        %2519 = vmatpush1.bf16.msra.mxu0 %v2451
        %2520 = vmatprep.subr.bf16.mxu0 %v2456
        %2521 = vmatpush1.bf16.msra.mxu0 %v2455
        %2522 = vmatprep.subr.bf16.mxu0 %v2460
        %2523 = vmatpush1.bf16.msra.mxu0 %v2459
        %2524 = vmatprep.subr.bf16.mxu0 %v2464
        %2525 = vmatpush1.bf16.msra.mxu0 %v2463
        %2526 = vmatprep.subr.bf16.mxu0 %v2468
        %2527 = vmatpush1.bf16.msra.mxu0 %v2467
        %2528 = vmatprep.subr.bf16.mxu0 %v2472
        %2529 = vmatpush1.bf16.msra.mxu0 %v2471
        %2530 = vmatprep.subr.bf16.mxu0 0
        %2531 = vmatpush1.bf16.msra.mxu0 0
        %2532 = vmatprep.subr.bf16.mxu0 0
        %2533 = vmatpush1.bf16.msra.mxu0 0
        %2534 = vmatprep.subr.bf16.mxu0 0
        %2535 = vmatpush1.bf16.msra.mxu0 0
        %2536 = vmatprep.subr.bf16.mxu0 0
        %2537 = vmatpush1.bf16.msra.mxu0 0
        %2538 = vmatprep.subr.bf16.mxu0 0
        %2539 = vmatpush1.bf16.msra.mxu0 0
        %2540 = vmatprep.subr.bf16.mxu0 0
        %2541 = vmatpush1.bf16.msra.mxu0 0
        %2542 = vmatprep.subr.bf16.mxu0 0
        %2543 = vmatpush1.bf16.msra.mxu0 0
        %2544 = vmatprep.subr.bf16.mxu0 0
        %2545 = vmatpush1.bf16.msra.mxu0 0
        %2546 = vmatprep.mubr.bf16.mxu0 0
        %2547 = vmatmul.mubr.bf16.gmra.mrb[0].mxu0 %v2440
        %v2548 = vpop.f32.mrb[0].mxu0
        %v2549 = vadd.f32 0.0, %v2548
        %v2550 = vpop.f32.mrb[0].mxu0
        %v2551 = vadd.f32 0.0, %v2550
        %v2552 = vpop.f32.mrb[0].mxu0
        %v2553 = vpop.f32.mrb[0].mxu0
        %2554 = vdwg.mxu0
        %v2555 = vadd.f32 %v2436, %v2508
        %v2556 = vadd.f32 %v2437, %v2510
        %v2557 = vadd.f32 %v2438, %v2549
        %v2558 = vadd.f32 %v2439, %v2551
        %v2559 = vxor.u32 %v2555, 2147483648
        %v2560 = vmul.f32 %v2559, 1.442695
        %v2561 = vpow.pop %v2560
        %v2562 = vadd.f32 %v2561, 1.0
        %v2563 = vrcp.pop %v2562
        %v2564 = vmul.f32 1.0, %v2563
        %v2565 = vxor.u32 %v2556, 2147483648
        %v2566 = vmul.f32 %v2565, 1.442695
        %v2567 = vpow.pop %v2566
        %v2568 = vadd.f32 %v2567, 1.0
        %v2569 = vrcp.pop %v2568
        %v2570 = vmul.f32 1.0, %v2569
        %v2571 = vtanh.pop %v2557
        %v2572 = vxor.u32 %v2558, 2147483648
        %v2573 = vmul.f32 %v2572, 1.442695
        %v2574 = vpow.pop %v2573
        %v2575 = vadd.f32 %v2574, 1.0
        %v2576 = vrcp.pop %v2575
        %v2577 = vmul.f32 1.0, %v2576
        %v2578 = vmul.f32 %v2570, %v2430
        %v2579 = vmul.f32 %v2564, %v2571
        %v2580 = vadd.f32 %v2578, %v2579
        %v2581 = vtanh.pop %v2580
        %v2582 = vmul.f32 %v2577, %v2581
        %s2583 = scalar_lea.vmem %s136, 120 [#allocation8]
        %2584 = vst [vmem:[%s2583] sm:$0xff] %v2582
        %2585 = vst [vmem:[#allocation3] sm:$0xff] %v2582
        %2586 = vst [vmem:[#allocation4] sm:$0xff] %v2580
        %s2587 = sand.u32 %s53, 1
        %s2588 = scalar_lea.sflag [#allocation7], %s2587
        %s2589 = sand.u32 %s53, 1
        %s2590 = smul.addr %s2589, 128
        %s2591 = scalar_lea.vmem [#allocation8], %s2590
        // Predicated region
        $region34: #{decoder_rnn_forward.4} parent=23 // pred_check
          %p2592 = pneg %p63
        $region35: #{decoder_rnn_forward.4} parent=23 // pred_check_branch
          %2594 = sbr.rel (%p2592) target = $region37
        $region36: #{decoder_rnn_forward.4} parent=23 // pred_region
          %s2595 = smul.u32 16, %s19
          %s2597 = ssub.s32 2048, 2048
          %2598 = vsyncadd %s2588, %s2597
          %s2599 = smul.addr %s2595, 128
          %s2600 = scalar_lea.hbm %s2, %s2599
          %s2601 = sshll.u32 %s2591, 4
          %s2602 = int_to_ptr.vmem [resolvable:$true] %s2601
          %2607 = dma.vmem_to_hbm [thread:$0]  %s2602, 2048, %s2600, %s2588, 128, 128, 8
        $region37: #{decoder_rnn_forward.4} parent=23 // pred_fallthru
          _
      $region24: #{decoder_rnn_forward.4} parent=5 // pred_fallthru
        _
      %p2608 = scmp.le.s32.totalorder 2, %s14
      // Predicated region
      $region38: #{decoder_rnn_forward.4} parent=5 // pred_check
        %p2609 = pneg %p2608
      $region39: #{decoder_rnn_forward.4} parent=5 // pred_check_branch
        %2611 = sbr.rel (%p2609) target = $region41
      $region40: #{decoder_rnn_forward.4} parent=5 // pred_region
        %s2612 = ssub.s32 %s14, 2
        // Predicated region
        $region42: #{decoder_rnn_forward.4} parent=40 // pred_check
          %p2613 = pneg %p69
        $region43: #{decoder_rnn_forward.4} parent=40 // pred_check_branch
          %2615 = sbr.rel (%p2613) target = $region45
        $region44: #{decoder_rnn_forward.4} parent=40 // pred_region
          %s2616 = sand.u32 %s54, 1
          %s2617 = scalar_lea.sflag [#allocation7], %s2616
          %s2618 = sand.u32 %s54, 1
          %s2619 = smul.addr %s2618, 128
          %s2620 = scalar_lea.vmem [#allocation8], %s2619
          %2621 = dma.done %s2617, 2048
        $region45: #{decoder_rnn_forward.4} parent=40 // pred_fallthru
          _
      $region41: #{decoder_rnn_forward.4} parent=5 // pred_fallthru
        _
    $region6: #{decoder_rnn_forward.4} parent=1 // loop_footer
      %s18 = sadd.s32 1, %s14
    $region7: #{decoder_rnn_forward.4} parent=1 // loop_footer_branch
      %13 = sbr.rel target = $region3
    $region8: #{decoder_rnn_forward.4} parent=1 // loop_exit
      _
    %2622 = vsyncpa [#allocation6], 1
    %s2623 = scalar_lea.sflag [#allocation6], 1
    %2624 = vsyncpa %s2623, 1
    %2625 = vsyncpa [#allocation7], 1
    %s2626 = scalar_lea.sflag [#allocation7], 1
    %2627 = vsyncpa %s2626, 1

</llo_original>
